<compile_context>
chip_gen: v6e
topology: v6e:2x2x1
jax: 0.10.0
libtpu: 0.0.40
codegen_flags: <defaults>
</compile_context>

<pallas_src>
import functools
import math

import jax
import jax.numpy as jnp
from jax.experimental import pallas as pl
from jax.experimental.pallas import tpu as pltpu


# ----------------------------------------------------------------------------
# Fused Generator kernel (one grid step == one lane tile == whole sequences).
#
# x01_ref : (2, TL)       row 0 = x0 (cond), row 1 = x1 (noised)
# wd/bd   : enc_delta Conv1d(1, C, 5)   -> (C, 5) f32, (C, 1) f32
# we      : merged enc0|enc1 per block  -> (nb, C, 10) bf16, col = tap*2 + {x0,x1}
# wpre    : lin_pre per-tap weights     -> (nb*3, C, C) bf16, idx = blk*3 + k
# by      : lin_pre+enc0+enc1 bias      -> (nb, C, 1) f32
# wr/br   : residual convs (3 per blk)  -> (nb*9, C, C) bf16 / (nb*3, C, 1) f32
# bns/bnt : eval-mode BatchNorm affine  -> (nb, C, 1) f32 each
# wh/bh   : GenHead Conv1d(C, 1, 5)     -> (5, 1, C) bf16, (1, 1) f32
# o_ref   : (1, TL) = noised - from_atom_coords(head(nn_vec))
# ----------------------------------------------------------------------------
def _generator_kernel(x01_ref, wd_ref, bd_ref, we_ref, wpre_ref, by_ref,
                      wr_ref, br_ref, bns_ref, bnt_ref, wh_ref, bh_ref,
                      o_ref, *, n_atoms):
    TL = x01_ref.shape[1]
    num_blocks = we_ref.shape[0]
    f32 = jnp.float32
    bf16 = jnp.bfloat16

    # Per-sequence boundary masks, generated in-kernel (no HBM traffic).
    # The lane tile is a whole number of sequences, so (tile_start + lane) % N
    # == lane % N and the masks are identical for every tile.
    lane = jax.lax.broadcasted_iota(jnp.int32, (1, TL), 1)
    pos = lane % n_atoms
    masks = {s: jnp.logical_and(pos + s >= 0, pos + s < n_atoms).astype(f32)
             for s in (-2, -1, 1, 2)}

    def tap(x, s):
        """Conv tap: column p holds x[:, p+s], zeroed across sequence edges.
        Roll wrap-around is safe because tile ends coincide with sequence
        boundaries where the mask is zero.  Returns a bf16 MXU operand."""
        if s == 0:
            return x.astype(bf16)
        t = pltpu.roll(x, shift=(-s) % TL, axis=1) * masks[s]
        return t.astype(bf16)

    x01 = x01_ref[...].astype(f32)                       # (2, TL)
    x1 = x01[1:2]                                        # noised, lane-flat

    # --- prologue (once per tile) -------------------------------------------
    # enc_delta(x1 - x0) as exact f32 VPU broadcast FMAs, plus the
    # loop-invariant (10, TL) tap matrix of (x0, x1) used by every block.
    wd = wd_ref[...]                                     # (C, 5)
    rc_list = []
    nn = None
    for k in range(5):
        s = k - 2
        rc = x01 if s == 0 else pltpu.roll(x01, shift=(-s) % TL, axis=1) * masks[s]
        rc_list.append(rc)
        term = wd[:, k:k + 1] * (rc[1:2] - rc[0:1])      # Cin=1 tap FMA
        nn = term if nn is None else nn + term
    nn = nn + bd_ref[...]                                # (C, TL) f32
    enc_taps = jnp.concatenate(rc_list, axis=0).astype(bf16)   # (10, TL)

    # --- Blocks: fori_loop bounds live ranges / code size -------------------
    def block_body(blk, nn):
        # y = lin_pre(nn_vec) + enc0(x0) + enc1(x1); biases pre-summed in by.
        y = jnp.dot(we_ref[blk], enc_taps, preferred_element_type=f32)
        for k in range(3):
            y = y + jnp.dot(wpre_ref[blk * 3 + k], tap(nn, k - 1),
                            preferred_element_type=f32)
        y = y + by_ref[blk]
        # TODO(synk): ResidualConv1d source not provided; assumed
        #             y = y + leaky_relu(conv1d(y, k=3, 'same'), 0.2).
        for j in range(3):
            z = None
            for k in range(3):
                d = jnp.dot(wr_ref[blk * 9 + j * 3 + k], tap(y, k - 1),
                            preferred_element_type=f32)
                z = d if z is None else z + d
            z = z + br_ref[blk * 3 + j]
            y = y + jnp.maximum(z, 0.2 * z)              # LeakyReLU(0.2)
        # BatchNorm1d (eval mode) folded into a per-channel affine.
        return y * bns_ref[blk] + bnt_ref[blk]

    nn = jax.lax.fori_loop(0, num_blocks, block_body, nn)

    # --- GenHead: Conv1d(C, 1, 5) as 5 per-tap MXU dots ----------------------
    gen = None
    for k in range(5):
        d = jnp.dot(wh_ref[k], tap(nn, k - 2), preferred_element_type=f32)
        gen = d if gen is None else gen + d
    gen = gen + bh_ref[...]                              # (1, TL)

    # Generator output: noised - from_atom_coords(head(nn_vec))
    o_ref[...] = (x1 - gen).astype(o_ref.dtype)


def _full_spec(a):
    nd = a.ndim
    return pl.BlockSpec(a.shape, lambda i, _nd=nd: (0,) * _nd)


def _pick_lane_tile(L, n_atoms, max_lanes):
    """Largest lane tile that is a whole number of sequences, a multiple of
    128, divides L and is <= max_lanes; falls back to the full lane extent."""
    base = n_atoms * 128 // math.gcd(n_atoms, 128)       # lcm(N, 128)
    if base > max_lanes or L % base != 0:
        return L
    tile = base
    for m in range(2, max_lanes // base + 1):
        if L % (m * base) == 0:
            tile = m * base
    return tile


def generator_forward(params, noised, cond, *, max_lanes_per_tile=2048):
    """noised, cond: (B, n_atoms, space_dim=1) -> (B, n_atoms, 1)."""
    B, N, sd = noised.shape
    assert sd == 1
    L = B * N

    # TODO(synk): ToAtomCoords(1)/FromAtomCoords(1) sources not provided;
    # assumed (B, n_atoms, 1) <-> (B, 1, n_atoms): with space_dim == 1 this is
    # just flattening the batch onto the lane axis.
    x01 = jnp.stack([cond.reshape(L), noised.reshape(L)], axis=0)    # (2, L)

    TL = _pick_lane_tile(L, N, max_lanes_per_tile)
    n_tiles = L // TL

    weight_args = [params[k] for k in
                   ('wd', 'bd', 'we', 'wpre', 'by', 'wr', 'br',
                    'bns', 'bnt', 'wh', 'bh')]

    out = pl.pallas_call(
        functools.partial(_generator_kernel, n_atoms=N),
        out_shape=jax.ShapeDtypeStruct((1, L), noised.dtype),
        grid=(n_tiles,),
        in_specs=[pl.BlockSpec((2, TL), lambda i: (0, i))]
                 + [_full_spec(a) for a in weight_args],   # weights VMEM-resident
        out_specs=pl.BlockSpec((1, TL), lambda i: (0, i)),
        compiler_params=pltpu.CompilerParams(
            dimension_semantics=("parallel",)),
    )(x01, *weight_args)
    return out.reshape(B, N, 1)


# ----------------------------------------------------------------------------
# Parameter init (PyTorch default Conv1d/BatchNorm1d init), pre-packed for the
# fused kernel: per-tap (Cout, Cin) bf16 weight matrices stacked along a flat
# leading axis, f32 biases as (Cout, 1), per-block tensors stacked.
# ----------------------------------------------------------------------------
def _conv_params(key, cout, cin, k):
    kw, kb = jax.random.split(key)
    bound = 1.0 / math.sqrt(cin * k)
    w = jax.random.uniform(kw, (cout, cin, k), jnp.float32, -bound, bound)
    b = jax.random.uniform(kb, (cout,), jnp.float32, -bound, bound)
    return w, b


def _per_tap(w):
    # (Cout, Cin, K) -> (K, Cout, Cin), one weight matrix per conv tap, bf16.
    return jnp.transpose(w, (2, 0, 1)).astype(jnp.bfloat16)


def _bn_affine(c, eps=1e-5):
    # PyTorch defaults (eval mode): gamma=1, beta=0, running_mean=0, running_var=1.
    # TODO(synk): fold real running stats here when loading trained weights.
    gamma = jnp.ones((c,), jnp.float32)
    beta = jnp.zeros((c,), jnp.float32)
    mean = jnp.zeros((c,), jnp.float32)
    var = jnp.ones((c,), jnp.float32)
    scale = gamma / jnp.sqrt(var + eps)
    shift = beta - mean * scale
    return scale.reshape(c, 1), shift.reshape(c, 1)


def init_generator(key, ngf, num_blocks=4):
    keys = iter(jax.random.split(key, 8 * num_blocks + 8))
    wd, bd = _conv_params(next(keys), ngf, 1, 5)               # enc_delta
    we, wpre, by, wr, br, bns, bnt = [], [], [], [], [], [], []
    for _ in range(num_blocks):
        w0, b0 = _conv_params(next(keys), ngf, 1, 5)           # enc0
        w1, b1 = _conv_params(next(keys), ngf, 1, 5)           # enc1
        wp, bp = _conv_params(next(keys), ngf, ngf, 3)         # lin_pre
        # merged enc0|enc1 weight; column = tap*2 + {0: x0, 1: x1}
        we.append(jnp.stack([w0[:, 0, :], w1[:, 0, :]], axis=2)
                  .reshape(ngf, 10).astype(jnp.bfloat16))
        wpre.append(_per_tap(wp))                              # (3, C, C)
        by.append((bp + b0 + b1).reshape(ngf, 1))              # summed biases
        for _ in range(3):                                     # ResidualConv1d x3
            w, b = _conv_params(next(keys), ngf, ngf, 3)
            wr.append(_per_tap(w))                             # (3, C, C)
            br.append(b.reshape(ngf, 1))
        s, t = _bn_affine(ngf)
        bns.append(s)
        bnt.append(t)
    wh, bh = _conv_params(next(keys), 1, ngf, 5)               # GenHead lin_out
    return {
        'wd': wd[:, 0, :],                                     # (C, 5) f32
        'bd': bd.reshape(ngf, 1),                              # (C, 1) f32
        'we': jnp.stack(we),                                   # (nb, C, 10) bf16
        'wpre': jnp.concatenate(wpre, axis=0),                 # (nb*3, C, C) bf16
        'by': jnp.stack(by),                                   # (nb, C, 1) f32
        'wr': jnp.concatenate(wr, axis=0),                     # (nb*9, C, C) bf16
        'br': jnp.stack(br),                                   # (nb*3, C, 1) f32
        'bns': jnp.stack(bns),                                 # (nb, C, 1) f32
        'bnt': jnp.stack(bnt),                                 # (nb, C, 1) f32
        'wh': _per_tap(wh),                                    # (5, 1, C) bf16
        'bh': bh.reshape(1, 1),                                # (1, 1) f32
    }


if __name__ == "__main__":
    key = jax.random.PRNGKey(0)
    k_noised, k_cond, k_par = jax.random.split(key, 3)

    B, N, ngf = 16, 64, 32                   # batch, n_atoms, config['ngf']
    noised = jax.random.normal(k_noised, (B, N, 1), jnp.float32)
    cond = jax.random.normal(k_cond, (B, N, 1), jnp.float32)
    params = init_generator(k_par, ngf)

    # 512-lane tiles -> grid=(2,): exercises the lane tiling + in-kernel masks.
    fwd = jax.jit(functools.partial(generator_forward, max_lanes_per_tile=512))
    out = jax.block_until_ready(fwd(params, noised, cond))
    assert out.shape == (B, N, 1) and out.dtype == jnp.float32
    assert bool(jnp.all(jnp.isfinite(out)))
    print("KERNEL_OK")
</pallas_src>

<mosaic_0001>
module attributes {stable_mosaic.version = 11 : i64} {
  func.func @_generator_kernel(%arg0: i32, %arg1: memref<2x512xf32, #tpu.memory_space<vmem>>, %arg2: memref<32x5xf32, #tpu.memory_space<vmem>>, %arg3: memref<32x1xf32, #tpu.memory_space<vmem>>, %arg4: memref<4x32x10xbf16, #tpu.memory_space<vmem>>, %arg5: memref<12x32x32xbf16, #tpu.memory_space<vmem>>, %arg6: memref<4x32x1xf32, #tpu.memory_space<vmem>>, %arg7: memref<36x32x32xbf16, #tpu.memory_space<vmem>>, %arg8: memref<12x32x1xf32, #tpu.memory_space<vmem>>, %arg9: memref<4x32x1xf32, #tpu.memory_space<vmem>>, %arg10: memref<4x32x1xf32, #tpu.memory_space<vmem>>, %arg11: memref<5x1x32xbf16, #tpu.memory_space<vmem>>, %arg12: memref<1x1xf32, #tpu.memory_space<vmem>>, %arg13: memref<1x512xf32, #tpu.memory_space<vmem>>) attributes {dimension_semantics = [#tpu.dimension_semantics<parallel>], iteration_bounds = array<i64: 2>, scalar_prefetch = 0 : i64, scratch_operands = 0 : i64, tpu.core_type = #tpu.core_type<tc>, window_params = [{transform_indices = @transform_0, window_bounds = array<i64: 2, 512>}, {pipeline_mode = #tpu.pipeline_mode<synchronous>, transform_indices = @transform_1, window_bounds = array<i64: 32, 5>}, {pipeline_mode = #tpu.pipeline_mode<synchronous>, transform_indices = @transform_2, window_bounds = array<i64: 32, 1>}, {pipeline_mode = #tpu.pipeline_mode<synchronous>, transform_indices = @transform_3, window_bounds = array<i64: 4, 32, 10>}, {pipeline_mode = #tpu.pipeline_mode<synchronous>, transform_indices = @transform_4, window_bounds = array<i64: 12, 32, 32>}, {pipeline_mode = #tpu.pipeline_mode<synchronous>, transform_indices = @transform_5, window_bounds = array<i64: 4, 32, 1>}, {pipeline_mode = #tpu.pipeline_mode<synchronous>, transform_indices = @transform_6, window_bounds = array<i64: 36, 32, 32>}, {pipeline_mode = #tpu.pipeline_mode<synchronous>, transform_indices = @transform_7, window_bounds = array<i64: 12, 32, 1>}, {pipeline_mode = #tpu.pipeline_mode<synchronous>, transform_indices = @transform_8, window_bounds = array<i64: 4, 32, 1>}, {pipeline_mode = #tpu.pipeline_mode<synchronous>, transform_indices = @transform_9, window_bounds = array<i64: 4, 32, 1>}, {pipeline_mode = #tpu.pipeline_mode<synchronous>, transform_indices = @transform_10, window_bounds = array<i64: 5, 1, 32>}, {pipeline_mode = #tpu.pipeline_mode<synchronous>, transform_indices = @transform_11, window_bounds = array<i64: 1, 1>}, {transform_indices = @transform_12, window_bounds = array<i64: 1, 512>}]} {
    %0 = tpu.iota {dimensions = array<i32: 1>} : vector<1x512xi32>
    %c64_i32 = arith.constant 64 : i32
    %c0_i32 = arith.constant 0 : i32
    %1 = arith.cmpi eq, %c64_i32, %c0_i32 : i32
    %c1_i32 = arith.constant 1 : i32
    %2 = arith.select %1, %c1_i32, %c64_i32 : i32
    %3 = vector.broadcast %2 : i32 to vector<1x512xi32>
    %4 = arith.remsi %0, %3 : vector<1x512xi32>
    %c0_i32_0 = arith.constant 0 : i32
    %5 = vector.broadcast %c0_i32_0 : i32 to vector<1x512xi32>
    %6 = arith.cmpi ne, %4, %5 : vector<1x512xi32>
    %c0_i32_1 = arith.constant 0 : i32
    %7 = vector.broadcast %c0_i32_1 : i32 to vector<1x512xi32>
    %8 = arith.cmpi slt, %4, %7 : vector<1x512xi32>
    %c0_i32_2 = arith.constant 0 : i32
    %9 = arith.cmpi slt, %2, %c0_i32_2 : i32
    %10 = vector.broadcast %9 : i1 to vector<1x512xi1>
    %11 = vector.broadcast %10 : vector<1x512xi1> to vector<1x512xi1>
    %12 = arith.xori %8, %11 : vector<1x512xi1>
    %13 = arith.andi %12, %6 : vector<1x512xi1>
    %14 = vector.broadcast %2 : i32 to vector<1x512xi32>
    %15 = arith.addi %4, %14 : vector<1x512xi32>
    %16 = arith.select %13, %15, %4 : vector<1x512xi1>, vector<1x512xi32>
    %c-2_i32 = arith.constant -2 : i32
    %17 = vector.broadcast %c-2_i32 : i32 to vector<1x512xi32>
    %18 = arith.addi %16, %17 : vector<1x512xi32>
    %c0_i32_3 = arith.constant 0 : i32
    %19 = vector.broadcast %c0_i32_3 : i32 to vector<1x512xi32>
    %20 = arith.cmpi sge, %18, %19 : vector<1x512xi32>
    %c-2_i32_4 = arith.constant -2 : i32
    %21 = vector.broadcast %c-2_i32_4 : i32 to vector<1x512xi32>
    %22 = arith.addi %16, %21 : vector<1x512xi32>
    %c64_i32_5 = arith.constant 64 : i32
    %23 = vector.broadcast %c64_i32_5 : i32 to vector<1x512xi32>
    %24 = arith.cmpi slt, %22, %23 : vector<1x512xi32>
    %25 = arith.andi %20, %24 : vector<1x512xi1>
    %26 = arith.extui %25 : vector<1x512xi1> to vector<1x512xi32>
    %27 = arith.sitofp %26 : vector<1x512xi32> to vector<1x512xf32>
    %c-1_i32 = arith.constant -1 : i32
    %28 = vector.broadcast %c-1_i32 : i32 to vector<1x512xi32>
    %29 = arith.addi %16, %28 : vector<1x512xi32>
    %c0_i32_6 = arith.constant 0 : i32
    %30 = vector.broadcast %c0_i32_6 : i32 to vector<1x512xi32>
    %31 = arith.cmpi sge, %29, %30 : vector<1x512xi32>
    %c-1_i32_7 = arith.constant -1 : i32
    %32 = vector.broadcast %c-1_i32_7 : i32 to vector<1x512xi32>
    %33 = arith.addi %16, %32 : vector<1x512xi32>
    %c64_i32_8 = arith.constant 64 : i32
    %34 = vector.broadcast %c64_i32_8 : i32 to vector<1x512xi32>
    %35 = arith.cmpi slt, %33, %34 : vector<1x512xi32>
    %36 = arith.andi %31, %35 : vector<1x512xi1>
    %37 = arith.extui %36 : vector<1x512xi1> to vector<1x512xi32>
    %38 = arith.sitofp %37 : vector<1x512xi32> to vector<1x512xf32>
    %c1_i32_9 = arith.constant 1 : i32
    %39 = vector.broadcast %c1_i32_9 : i32 to vector<1x512xi32>
    %40 = arith.addi %16, %39 : vector<1x512xi32>
    %c0_i32_10 = arith.constant 0 : i32
    %41 = vector.broadcast %c0_i32_10 : i32 to vector<1x512xi32>
    %42 = arith.cmpi sge, %40, %41 : vector<1x512xi32>
    %c1_i32_11 = arith.constant 1 : i32
    %43 = vector.broadcast %c1_i32_11 : i32 to vector<1x512xi32>
    %44 = arith.addi %16, %43 : vector<1x512xi32>
    %c64_i32_12 = arith.constant 64 : i32
    %45 = vector.broadcast %c64_i32_12 : i32 to vector<1x512xi32>
    %46 = arith.cmpi slt, %44, %45 : vector<1x512xi32>
    %47 = arith.andi %42, %46 : vector<1x512xi1>
    %48 = arith.extui %47 : vector<1x512xi1> to vector<1x512xi32>
    %49 = arith.sitofp %48 : vector<1x512xi32> to vector<1x512xf32>
    %c2_i32 = arith.constant 2 : i32
    %50 = vector.broadcast %c2_i32 : i32 to vector<1x512xi32>
    %51 = arith.addi %16, %50 : vector<1x512xi32>
    %c0_i32_13 = arith.constant 0 : i32
    %52 = vector.broadcast %c0_i32_13 : i32 to vector<1x512xi32>
    %53 = arith.cmpi sge, %51, %52 : vector<1x512xi32>
    %c2_i32_14 = arith.constant 2 : i32
    %54 = vector.broadcast %c2_i32_14 : i32 to vector<1x512xi32>
    %55 = arith.addi %16, %54 : vector<1x512xi32>
    %c64_i32_15 = arith.constant 64 : i32
    %56 = vector.broadcast %c64_i32_15 : i32 to vector<1x512xi32>
    %57 = arith.cmpi slt, %55, %56 : vector<1x512xi32>
    %58 = arith.andi %53, %57 : vector<1x512xi1>
    %59 = arith.extui %58 : vector<1x512xi1> to vector<1x512xi32>
    %60 = arith.sitofp %59 : vector<1x512xi32> to vector<1x512xf32>
    %c0 = arith.constant 0 : index
    %c0_16 = arith.constant 0 : index
    %61 = vector.load %arg1[%c0, %c0_16] : memref<2x512xf32, #tpu.memory_space<vmem>>, vector<2x512xf32>
    %62 = vector.extract_strided_slice %61 {offsets = [1, 0], sizes = [1, 512], strides = [1, 1]} : vector<2x512xf32> to vector<1x512xf32>
    %c0_17 = arith.constant 0 : index
    %c0_18 = arith.constant 0 : index
    %63 = vector.load %arg2[%c0_17, %c0_18] : memref<32x5xf32, #tpu.memory_space<vmem>>, vector<32x5xf32>
    %c2_i32_19 = arith.constant 2 : i32
    %64 = tpu.dynamic_rotate %61 by %c2_i32_19 dim 1 : vector<2x512xf32>, i32 -> vector<2x512xf32>
    %65 = vector.broadcast %27 : vector<1x512xf32> to vector<2x512xf32>
    %66 = arith.mulf %64, %65 : vector<2x512xf32>
    %67 = vector.extract_strided_slice %63 {offsets = [0, 0], sizes = [32, 1], strides = [1, 1]} : vector<32x5xf32> to vector<32x1xf32>
    %68 = vector.extract_strided_slice %66 {offsets = [1, 0], sizes = [1, 512], strides = [1, 1]} : vector<2x512xf32> to vector<1x512xf32>
    %69 = vector.extract_strided_slice %66 {offsets = [0, 0], sizes = [1, 512], strides = [1, 1]} : vector<2x512xf32> to vector<1x512xf32>
    %70 = arith.subf %68, %69 : vector<1x512xf32>
    %71 = vector.broadcast %67 : vector<32x1xf32> to vector<32x512xf32>
    %72 = vector.broadcast %70 : vector<1x512xf32> to vector<32x512xf32>
    %73 = arith.mulf %71, %72 : vector<32x512xf32>
    %c1_i32_20 = arith.constant 1 : i32
    %74 = tpu.dynamic_rotate %61 by %c1_i32_20 dim 1 : vector<2x512xf32>, i32 -> vector<2x512xf32>
    %75 = vector.broadcast %38 : vector<1x512xf32> to vector<2x512xf32>
    %76 = arith.mulf %74, %75 : vector<2x512xf32>
    %77 = vector.extract_strided_slice %63 {offsets = [0, 1], sizes = [32, 1], strides = [1, 1]} : vector<32x5xf32> to vector<32x1xf32>
    %78 = vector.extract_strided_slice %76 {offsets = [1, 0], sizes = [1, 512], strides = [1, 1]} : vector<2x512xf32> to vector<1x512xf32>
    %79 = vector.extract_strided_slice %76 {offsets = [0, 0], sizes = [1, 512], strides = [1, 1]} : vector<2x512xf32> to vector<1x512xf32>
    %80 = arith.subf %78, %79 : vector<1x512xf32>
    %81 = vector.broadcast %77 : vector<32x1xf32> to vector<32x512xf32>
    %82 = vector.broadcast %80 : vector<1x512xf32> to vector<32x512xf32>
    %83 = arith.mulf %81, %82 : vector<32x512xf32>
    %84 = arith.addf %73, %83 : vector<32x512xf32>
    %85 = vector.extract_strided_slice %63 {offsets = [0, 2], sizes = [32, 1], strides = [1, 1]} : vector<32x5xf32> to vector<32x1xf32>
    %86 = vector.extract_strided_slice %61 {offsets = [1, 0], sizes = [1, 512], strides = [1, 1]} : vector<2x512xf32> to vector<1x512xf32>
    %87 = vector.extract_strided_slice %61 {offsets = [0, 0], sizes = [1, 512], strides = [1, 1]} : vector<2x512xf32> to vector<1x512xf32>
    %88 = arith.subf %86, %87 : vector<1x512xf32>
    %89 = vector.broadcast %85 : vector<32x1xf32> to vector<32x512xf32>
    %90 = vector.broadcast %88 : vector<1x512xf32> to vector<32x512xf32>
    %91 = arith.mulf %89, %90 : vector<32x512xf32>
    %92 = arith.addf %84, %91 : vector<32x512xf32>
    %c511_i32 = arith.constant 511 : i32
    %93 = tpu.dynamic_rotate %61 by %c511_i32 dim 1 : vector<2x512xf32>, i32 -> vector<2x512xf32>
    %94 = vector.broadcast %49 : vector<1x512xf32> to vector<2x512xf32>
    %95 = arith.mulf %93, %94 : vector<2x512xf32>
    %96 = vector.extract_strided_slice %63 {offsets = [0, 3], sizes = [32, 1], strides = [1, 1]} : vector<32x5xf32> to vector<32x1xf32>
    %97 = vector.extract_strided_slice %95 {offsets = [1, 0], sizes = [1, 512], strides = [1, 1]} : vector<2x512xf32> to vector<1x512xf32>
    %98 = vector.extract_strided_slice %95 {offsets = [0, 0], sizes = [1, 512], strides = [1, 1]} : vector<2x512xf32> to vector<1x512xf32>
    %99 = arith.subf %97, %98 : vector<1x512xf32>
    %100 = vector.broadcast %96 : vector<32x1xf32> to vector<32x512xf32>
    %101 = vector.broadcast %99 : vector<1x512xf32> to vector<32x512xf32>
    %102 = arith.mulf %100, %101 : vector<32x512xf32>
    %103 = arith.addf %92, %102 : vector<32x512xf32>
    %c510_i32 = arith.constant 510 : i32
    %104 = tpu.dynamic_rotate %61 by %c510_i32 dim 1 : vector<2x512xf32>, i32 -> vector<2x512xf32>
    %105 = vector.broadcast %60 : vector<1x512xf32> to vector<2x512xf32>
    %106 = arith.mulf %104, %105 : vector<2x512xf32>
    %107 = vector.extract_strided_slice %63 {offsets = [0, 4], sizes = [32, 1], strides = [1, 1]} : vector<32x5xf32> to vector<32x1xf32>
    %108 = vector.extract_strided_slice %106 {offsets = [1, 0], sizes = [1, 512], strides = [1, 1]} : vector<2x512xf32> to vector<1x512xf32>
    %109 = vector.extract_strided_slice %106 {offsets = [0, 0], sizes = [1, 512], strides = [1, 1]} : vector<2x512xf32> to vector<1x512xf32>
    %110 = arith.subf %108, %109 : vector<1x512xf32>
    %111 = vector.broadcast %107 : vector<32x1xf32> to vector<32x512xf32>
    %112 = vector.broadcast %110 : vector<1x512xf32> to vector<32x512xf32>
    %113 = arith.mulf %111, %112 : vector<32x512xf32>
    %114 = arith.addf %103, %113 : vector<32x512xf32>
    %c0_21 = arith.constant 0 : index
    %c0_22 = arith.constant 0 : index
    %115 = vector.load %arg3[%c0_21, %c0_22] : memref<32x1xf32, #tpu.memory_space<vmem>>, vector<32x1xf32>
    %116 = vector.broadcast %115 : vector<32x1xf32> to vector<32x512xf32>
    %117 = arith.addf %114, %116 : vector<32x512xf32>
    %118 = tpu.concatenate %66, %76, %61, %95, %106 in 0 : vector<2x512xf32>, vector<2x512xf32>, vector<2x512xf32>, vector<2x512xf32>, vector<2x512xf32> -> vector<10x512xf32>
    %119 = arith.truncf %118 : vector<10x512xf32> to vector<10x512xbf16>
    %c0_i32_23 = arith.constant 0 : i32
    %c4_i32 = arith.constant 4 : i32
    %120 = arith.addi %c0_i32_23, %c4_i32 : i32
    %c1_i32_24 = arith.constant 1 : i32
    %121 = scf.for %arg14 = %c0_i32_23 to %120 step %c1_i32_24 iter_args(%arg15 = %117) -> (vector<32x512xf32>)  : i32 {
      %163 = arith.index_cast %arg14 : i32 to index
      %c0_49 = arith.constant 0 : index
      %c0_50 = arith.constant 0 : index
      %164 = vector.load %arg4[%163, %c0_49, %c0_50] : memref<4x32x10xbf16, #tpu.memory_space<vmem>>, vector<1x32x10xbf16>
      %165 = vector.shape_cast %164 : vector<1x32x10xbf16> to vector<32x10xbf16>
      %cst_51 = arith.constant dense<0.000000e+00> : vector<32x512xf32>
      %166 = tpu.matmul %165, %119, %cst_51 {dimension_numbers = #tpu.dot_dimension_numbers<[1], [0], [0], [1], [0, 0, 1, 1], [], []>} : vector<32x10xbf16>, vector<10x512xbf16>, vector<32x512xf32> -> vector<32x512xf32>
      %c3_i32 = arith.constant 3 : i32
      %167 = arith.muli %arg14, %c3_i32 : i32
      %c0_i32_52 = arith.constant 0 : i32
      %168 = arith.addi %167, %c0_i32_52 : i32
      %169 = arith.index_cast %168 : i32 to index
      %c0_53 = arith.constant 0 : index
      %c0_54 = arith.constant 0 : index
      %170 = vector.load %arg5[%169, %c0_53, %c0_54] : memref<12x32x32xbf16, #tpu.memory_space<vmem>>, vector<1x32x32xbf16>
      %171 = vector.shape_cast %170 : vector<1x32x32xbf16> to vector<32x32xbf16>
      %c1_i32_55 = arith.constant 1 : i32
      %172 = tpu.dynamic_rotate %arg15 by %c1_i32_55 dim 1 : vector<32x512xf32>, i32 -> vector<32x512xf32>
      %173 = vector.broadcast %38 : vector<1x512xf32> to vector<32x512xf32>
      %174 = arith.mulf %172, %173 : vector<32x512xf32>
      %175 = arith.truncf %174 : vector<32x512xf32> to vector<32x512xbf16>
      %cst_56 = arith.constant dense<0.000000e+00> : vector<32x512xf32>
      %176 = tpu.matmul %171, %175, %cst_56 {dimension_numbers = #tpu.dot_dimension_numbers<[1], [0], [0], [1], [0, 0, 1, 1], [], []>} : vector<32x32xbf16>, vector<32x512xbf16>, vector<32x512xf32> -> vector<32x512xf32>
      %177 = arith.addf %166, %176 : vector<32x512xf32>
      %c3_i32_57 = arith.constant 3 : i32
      %178 = arith.muli %arg14, %c3_i32_57 : i32
      %c1_i32_58 = arith.constant 1 : i32
      %179 = arith.addi %178, %c1_i32_58 : i32
      %180 = arith.index_cast %179 : i32 to index
      %c0_59 = arith.constant 0 : index
      %c0_60 = arith.constant 0 : index
      %181 = vector.load %arg5[%180, %c0_59, %c0_60] : memref<12x32x32xbf16, #tpu.memory_space<vmem>>, vector<1x32x32xbf16>
      %182 = vector.shape_cast %181 : vector<1x32x32xbf16> to vector<32x32xbf16>
      %183 = arith.truncf %arg15 : vector<32x512xf32> to vector<32x512xbf16>
      %cst_61 = arith.constant dense<0.000000e+00> : vector<32x512xf32>
      %184 = tpu.matmul %182, %183, %cst_61 {dimension_numbers = #tpu.dot_dimension_numbers<[1], [0], [0], [1], [0, 0, 1, 1], [], []>} : vector<32x32xbf16>, vector<32x512xbf16>, vector<32x512xf32> -> vector<32x512xf32>
      %185 = arith.addf %177, %184 : vector<32x512xf32>
      %c3_i32_62 = arith.constant 3 : i32
      %186 = arith.muli %arg14, %c3_i32_62 : i32
      %c2_i32_63 = arith.constant 2 : i32
      %187 = arith.addi %186, %c2_i32_63 : i32
      %188 = arith.index_cast %187 : i32 to index
      %c0_64 = arith.constant 0 : index
      %c0_65 = arith.constant 0 : index
      %189 = vector.load %arg5[%188, %c0_64, %c0_65] : memref<12x32x32xbf16, #tpu.memory_space<vmem>>, vector<1x32x32xbf16>
      %190 = vector.shape_cast %189 : vector<1x32x32xbf16> to vector<32x32xbf16>
      %c511_i32_66 = arith.constant 511 : i32
      %191 = tpu.dynamic_rotate %arg15 by %c511_i32_66 dim 1 : vector<32x512xf32>, i32 -> vector<32x512xf32>
      %192 = vector.broadcast %49 : vector<1x512xf32> to vector<32x512xf32>
      %193 = arith.mulf %191, %192 : vector<32x512xf32>
      %194 = arith.truncf %193 : vector<32x512xf32> to vector<32x512xbf16>
      %cst_67 = arith.constant dense<0.000000e+00> : vector<32x512xf32>
      %195 = tpu.matmul %190, %194, %cst_67 {dimension_numbers = #tpu.dot_dimension_numbers<[1], [0], [0], [1], [0, 0, 1, 1], [], []>} : vector<32x32xbf16>, vector<32x512xbf16>, vector<32x512xf32> -> vector<32x512xf32>
      %196 = arith.addf %185, %195 : vector<32x512xf32>
      %197 = arith.index_cast %arg14 : i32 to index
      %c0_68 = arith.constant 0 : index
      %c0_69 = arith.constant 0 : index
      %198 = vector.load %arg6[%197, %c0_68, %c0_69] : memref<4x32x1xf32, #tpu.memory_space<vmem>>, vector<1x32x1xf32>
      %199 = vector.shape_cast %198 : vector<1x32x1xf32> to vector<32x1xf32>
      %200 = vector.broadcast %199 : vector<32x1xf32> to vector<32x512xf32>
      %201 = arith.addf %196, %200 : vector<32x512xf32>
      %c9_i32 = arith.constant 9 : i32
      %202 = arith.muli %arg14, %c9_i32 : i32
      %c0_i32_70 = arith.constant 0 : i32
      %203 = arith.addi %202, %c0_i32_70 : i32
      %c0_i32_71 = arith.constant 0 : i32
      %204 = arith.addi %203, %c0_i32_71 : i32
      %205 = arith.index_cast %204 : i32 to index
      %c0_72 = arith.constant 0 : index
      %c0_73 = arith.constant 0 : index
      %206 = vector.load %arg7[%205, %c0_72, %c0_73] : memref<36x32x32xbf16, #tpu.memory_space<vmem>>, vector<1x32x32xbf16>
      %207 = vector.shape_cast %206 : vector<1x32x32xbf16> to vector<32x32xbf16>
      %c1_i32_74 = arith.constant 1 : i32
      %208 = tpu.dynamic_rotate %201 by %c1_i32_74 dim 1 : vector<32x512xf32>, i32 -> vector<32x512xf32>
      %209 = vector.broadcast %38 : vector<1x512xf32> to vector<32x512xf32>
      %210 = arith.mulf %208, %209 : vector<32x512xf32>
      %211 = arith.truncf %210 : vector<32x512xf32> to vector<32x512xbf16>
      %cst_75 = arith.constant dense<0.000000e+00> : vector<32x512xf32>
      %212 = tpu.matmul %207, %211, %cst_75 {dimension_numbers = #tpu.dot_dimension_numbers<[1], [0], [0], [1], [0, 0, 1, 1], [], []>} : vector<32x32xbf16>, vector<32x512xbf16>, vector<32x512xf32> -> vector<32x512xf32>
      %c9_i32_76 = arith.constant 9 : i32
      %213 = arith.muli %arg14, %c9_i32_76 : i32
      %c0_i32_77 = arith.constant 0 : i32
      %214 = arith.addi %213, %c0_i32_77 : i32
      %c1_i32_78 = arith.constant 1 : i32
      %215 = arith.addi %214, %c1_i32_78 : i32
      %216 = arith.index_cast %215 : i32 to index
      %c0_79 = arith.constant 0 : index
      %c0_80 = arith.constant 0 : index
      %217 = vector.load %arg7[%216, %c0_79, %c0_80] : memref<36x32x32xbf16, #tpu.memory_space<vmem>>, vector<1x32x32xbf16>
      %218 = vector.shape_cast %217 : vector<1x32x32xbf16> to vector<32x32xbf16>
      %219 = arith.truncf %201 : vector<32x512xf32> to vector<32x512xbf16>
      %cst_81 = arith.constant dense<0.000000e+00> : vector<32x512xf32>
      %220 = tpu.matmul %218, %219, %cst_81 {dimension_numbers = #tpu.dot_dimension_numbers<[1], [0], [0], [1], [0, 0, 1, 1], [], []>} : vector<32x32xbf16>, vector<32x512xbf16>, vector<32x512xf32> -> vector<32x512xf32>
      %221 = arith.addf %212, %220 : vector<32x512xf32>
      %c9_i32_82 = arith.constant 9 : i32
      %222 = arith.muli %arg14, %c9_i32_82 : i32
      %c0_i32_83 = arith.constant 0 : i32
      %223 = arith.addi %222, %c0_i32_83 : i32
      %c2_i32_84 = arith.constant 2 : i32
      %224 = arith.addi %223, %c2_i32_84 : i32
      %225 = arith.index_cast %224 : i32 to index
      %c0_85 = arith.constant 0 : index
      %c0_86 = arith.constant 0 : index
      %226 = vector.load %arg7[%225, %c0_85, %c0_86] : memref<36x32x32xbf16, #tpu.memory_space<vmem>>, vector<1x32x32xbf16>
      %227 = vector.shape_cast %226 : vector<1x32x32xbf16> to vector<32x32xbf16>
      %c511_i32_87 = arith.constant 511 : i32
      %228 = tpu.dynamic_rotate %201 by %c511_i32_87 dim 1 : vector<32x512xf32>, i32 -> vector<32x512xf32>
      %229 = vector.broadcast %49 : vector<1x512xf32> to vector<32x512xf32>
      %230 = arith.mulf %228, %229 : vector<32x512xf32>
      %231 = arith.truncf %230 : vector<32x512xf32> to vector<32x512xbf16>
      %cst_88 = arith.constant dense<0.000000e+00> : vector<32x512xf32>
      %232 = tpu.matmul %227, %231, %cst_88 {dimension_numbers = #tpu.dot_dimension_numbers<[1], [0], [0], [1], [0, 0, 1, 1], [], []>} : vector<32x32xbf16>, vector<32x512xbf16>, vector<32x512xf32> -> vector<32x512xf32>
      %233 = arith.addf %221, %232 : vector<32x512xf32>
      %c3_i32_89 = arith.constant 3 : i32
      %234 = arith.muli %arg14, %c3_i32_89 : i32
      %c0_i32_90 = arith.constant 0 : i32
      %235 = arith.addi %234, %c0_i32_90 : i32
      %236 = arith.index_cast %235 : i32 to index
      %c0_91 = arith.constant 0 : index
      %c0_92 = arith.constant 0 : index
      %237 = vector.load %arg8[%236, %c0_91, %c0_92] : memref<12x32x1xf32, #tpu.memory_space<vmem>>, vector<1x32x1xf32>
      %238 = vector.shape_cast %237 : vector<1x32x1xf32> to vector<32x1xf32>
      %239 = vector.broadcast %238 : vector<32x1xf32> to vector<32x512xf32>
      %240 = arith.addf %233, %239 : vector<32x512xf32>
      %cst_93 = arith.constant 2.000000e-01 : f32
      %241 = vector.broadcast %cst_93 : f32 to vector<32x512xf32>
      %242 = arith.mulf %241, %240 : vector<32x512xf32>
      %243 = arith.maximumf %240, %242 : vector<32x512xf32>
      %244 = arith.addf %201, %243 : vector<32x512xf32>
      %c9_i32_94 = arith.constant 9 : i32
      %245 = arith.muli %arg14, %c9_i32_94 : i32
      %c3_i32_95 = arith.constant 3 : i32
      %246 = arith.addi %245, %c3_i32_95 : i32
      %c0_i32_96 = arith.constant 0 : i32
      %247 = arith.addi %246, %c0_i32_96 : i32
      %248 = arith.index_cast %247 : i32 to index
      %c0_97 = arith.constant 0 : index
      %c0_98 = arith.constant 0 : index
      %249 = vector.load %arg7[%248, %c0_97, %c0_98] : memref<36x32x32xbf16, #tpu.memory_space<vmem>>, vector<1x32x32xbf16>
      %250 = vector.shape_cast %249 : vector<1x32x32xbf16> to vector<32x32xbf16>
      %c1_i32_99 = arith.constant 1 : i32
      %251 = tpu.dynamic_rotate %244 by %c1_i32_99 dim 1 : vector<32x512xf32>, i32 -> vector<32x512xf32>
      %252 = vector.broadcast %38 : vector<1x512xf32> to vector<32x512xf32>
      %253 = arith.mulf %251, %252 : vector<32x512xf32>
      %254 = arith.truncf %253 : vector<32x512xf32> to vector<32x512xbf16>
      %cst_100 = arith.constant dense<0.000000e+00> : vector<32x512xf32>
      %255 = tpu.matmul %250, %254, %cst_100 {dimension_numbers = #tpu.dot_dimension_numbers<[1], [0], [0], [1], [0, 0, 1, 1], [], []>} : vector<32x32xbf16>, vector<32x512xbf16>, vector<32x512xf32> -> vector<32x512xf32>
      %c9_i32_101 = arith.constant 9 : i32
      %256 = arith.muli %arg14, %c9_i32_101 : i32
      %c3_i32_102 = arith.constant 3 : i32
      %257 = arith.addi %256, %c3_i32_102 : i32
      %c1_i32_103 = arith.constant 1 : i32
      %258 = arith.addi %257, %c1_i32_103 : i32
      %259 = arith.index_cast %258 : i32 to index
      %c0_104 = arith.constant 0 : index
      %c0_105 = arith.constant 0 : index
      %260 = vector.load %arg7[%259, %c0_104, %c0_105] : memref<36x32x32xbf16, #tpu.memory_space<vmem>>, vector<1x32x32xbf16>
      %261 = vector.shape_cast %260 : vector<1x32x32xbf16> to vector<32x32xbf16>
      %262 = arith.truncf %244 : vector<32x512xf32> to vector<32x512xbf16>
      %cst_106 = arith.constant dense<0.000000e+00> : vector<32x512xf32>
      %263 = tpu.matmul %261, %262, %cst_106 {dimension_numbers = #tpu.dot_dimension_numbers<[1], [0], [0], [1], [0, 0, 1, 1], [], []>} : vector<32x32xbf16>, vector<32x512xbf16>, vector<32x512xf32> -> vector<32x512xf32>
      %264 = arith.addf %255, %263 : vector<32x512xf32>
      %c9_i32_107 = arith.constant 9 : i32
      %265 = arith.muli %arg14, %c9_i32_107 : i32
      %c3_i32_108 = arith.constant 3 : i32
      %266 = arith.addi %265, %c3_i32_108 : i32
      %c2_i32_109 = arith.constant 2 : i32
      %267 = arith.addi %266, %c2_i32_109 : i32
      %268 = arith.index_cast %267 : i32 to index
      %c0_110 = arith.constant 0 : index
      %c0_111 = arith.constant 0 : index
      %269 = vector.load %arg7[%268, %c0_110, %c0_111] : memref<36x32x32xbf16, #tpu.memory_space<vmem>>, vector<1x32x32xbf16>
      %270 = vector.shape_cast %269 : vector<1x32x32xbf16> to vector<32x32xbf16>
      %c511_i32_112 = arith.constant 511 : i32
      %271 = tpu.dynamic_rotate %244 by %c511_i32_112 dim 1 : vector<32x512xf32>, i32 -> vector<32x512xf32>
      %272 = vector.broadcast %49 : vector<1x512xf32> to vector<32x512xf32>
      %273 = arith.mulf %271, %272 : vector<32x512xf32>
      %274 = arith.truncf %273 : vector<32x512xf32> to vector<32x512xbf16>
      %cst_113 = arith.constant dense<0.000000e+00> : vector<32x512xf32>
      %275 = tpu.matmul %270, %274, %cst_113 {dimension_numbers = #tpu.dot_dimension_numbers<[1], [0], [0], [1], [0, 0, 1, 1], [], []>} : vector<32x32xbf16>, vector<32x512xbf16>, vector<32x512xf32> -> vector<32x512xf32>
      %276 = arith.addf %264, %275 : vector<32x512xf32>
      %c3_i32_114 = arith.constant 3 : i32
      %277 = arith.muli %arg14, %c3_i32_114 : i32
      %c1_i32_115 = arith.constant 1 : i32
      %278 = arith.addi %277, %c1_i32_115 : i32
      %279 = arith.index_cast %278 : i32 to index
      %c0_116 = arith.constant 0 : index
      %c0_117 = arith.constant 0 : index
      %280 = vector.load %arg8[%279, %c0_116, %c0_117] : memref<12x32x1xf32, #tpu.memory_space<vmem>>, vector<1x32x1xf32>
      %281 = vector.shape_cast %280 : vector<1x32x1xf32> to vector<32x1xf32>
      %282 = vector.broadcast %281 : vector<32x1xf32> to vector<32x512xf32>
      %283 = arith.addf %276, %282 : vector<32x512xf32>
      %cst_118 = arith.constant 2.000000e-01 : f32
      %284 = vector.broadcast %cst_118 : f32 to vector<32x512xf32>
      %285 = arith.mulf %284, %283 : vector<32x512xf32>
      %286 = arith.maximumf %283, %285 : vector<32x512xf32>
      %287 = arith.addf %244, %286 : vector<32x512xf32>
      %c9_i32_119 = arith.constant 9 : i32
      %288 = arith.muli %arg14, %c9_i32_119 : i32
      %c6_i32 = arith.constant 6 : i32
      %289 = arith.addi %288, %c6_i32 : i32
      %c0_i32_120 = arith.constant 0 : i32
      %290 = arith.addi %289, %c0_i32_120 : i32
      %291 = arith.index_cast %290 : i32 to index
      %c0_121 = arith.constant 0 : index
      %c0_122 = arith.constant 0 : index
      %292 = vector.load %arg7[%291, %c0_121, %c0_122] : memref<36x32x32xbf16, #tpu.memory_space<vmem>>, vector<1x32x32xbf16>
      %293 = vector.shape_cast %292 : vector<1x32x32xbf16> to vector<32x32xbf16>
      %c1_i32_123 = arith.constant 1 : i32
      %294 = tpu.dynamic_rotate %287 by %c1_i32_123 dim 1 : vector<32x512xf32>, i32 -> vector<32x512xf32>
      %295 = vector.broadcast %38 : vector<1x512xf32> to vector<32x512xf32>
      %296 = arith.mulf %294, %295 : vector<32x512xf32>
      %297 = arith.truncf %296 : vector<32x512xf32> to vector<32x512xbf16>
      %cst_124 = arith.constant dense<0.000000e+00> : vector<32x512xf32>
      %298 = tpu.matmul %293, %297, %cst_124 {dimension_numbers = #tpu.dot_dimension_numbers<[1], [0], [0], [1], [0, 0, 1, 1], [], []>} : vector<32x32xbf16>, vector<32x512xbf16>, vector<32x512xf32> -> vector<32x512xf32>
      %c9_i32_125 = arith.constant 9 : i32
      %299 = arith.muli %arg14, %c9_i32_125 : i32
      %c6_i32_126 = arith.constant 6 : i32
      %300 = arith.addi %299, %c6_i32_126 : i32
      %c1_i32_127 = arith.constant 1 : i32
      %301 = arith.addi %300, %c1_i32_127 : i32
      %302 = arith.index_cast %301 : i32 to index
      %c0_128 = arith.constant 0 : index
      %c0_129 = arith.constant 0 : index
      %303 = vector.load %arg7[%302, %c0_128, %c0_129] : memref<36x32x32xbf16, #tpu.memory_space<vmem>>, vector<1x32x32xbf16>
      %304 = vector.shape_cast %303 : vector<1x32x32xbf16> to vector<32x32xbf16>
      %305 = arith.truncf %287 : vector<32x512xf32> to vector<32x512xbf16>
      %cst_130 = arith.constant dense<0.000000e+00> : vector<32x512xf32>
      %306 = tpu.matmul %304, %305, %cst_130 {dimension_numbers = #tpu.dot_dimension_numbers<[1], [0], [0], [1], [0, 0, 1, 1], [], []>} : vector<32x32xbf16>, vector<32x512xbf16>, vector<32x512xf32> -> vector<32x512xf32>
      %307 = arith.addf %298, %306 : vector<32x512xf32>
      %c9_i32_131 = arith.constant 9 : i32
      %308 = arith.muli %arg14, %c9_i32_131 : i32
      %c6_i32_132 = arith.constant 6 : i32
      %309 = arith.addi %308, %c6_i32_132 : i32
      %c2_i32_133 = arith.constant 2 : i32
      %310 = arith.addi %309, %c2_i32_133 : i32
      %311 = arith.index_cast %310 : i32 to index
      %c0_134 = arith.constant 0 : index
      %c0_135 = arith.constant 0 : index
      %312 = vector.load %arg7[%311, %c0_134, %c0_135] : memref<36x32x32xbf16, #tpu.memory_space<vmem>>, vector<1x32x32xbf16>
      %313 = vector.shape_cast %312 : vector<1x32x32xbf16> to vector<32x32xbf16>
      %c511_i32_136 = arith.constant 511 : i32
      %314 = tpu.dynamic_rotate %287 by %c511_i32_136 dim 1 : vector<32x512xf32>, i32 -> vector<32x512xf32>
      %315 = vector.broadcast %49 : vector<1x512xf32> to vector<32x512xf32>
      %316 = arith.mulf %314, %315 : vector<32x512xf32>
      %317 = arith.truncf %316 : vector<32x512xf32> to vector<32x512xbf16>
      %cst_137 = arith.constant dense<0.000000e+00> : vector<32x512xf32>
      %318 = tpu.matmul %313, %317, %cst_137 {dimension_numbers = #tpu.dot_dimension_numbers<[1], [0], [0], [1], [0, 0, 1, 1], [], []>} : vector<32x32xbf16>, vector<32x512xbf16>, vector<32x512xf32> -> vector<32x512xf32>
      %319 = arith.addf %307, %318 : vector<32x512xf32>
      %c3_i32_138 = arith.constant 3 : i32
      %320 = arith.muli %arg14, %c3_i32_138 : i32
      %c2_i32_139 = arith.constant 2 : i32
      %321 = arith.addi %320, %c2_i32_139 : i32
      %322 = arith.index_cast %321 : i32 to index
      %c0_140 = arith.constant 0 : index
      %c0_141 = arith.constant 0 : index
      %323 = vector.load %arg8[%322, %c0_140, %c0_141] : memref<12x32x1xf32, #tpu.memory_space<vmem>>, vector<1x32x1xf32>
      %324 = vector.shape_cast %323 : vector<1x32x1xf32> to vector<32x1xf32>
      %325 = vector.broadcast %324 : vector<32x1xf32> to vector<32x512xf32>
      %326 = arith.addf %319, %325 : vector<32x512xf32>
      %cst_142 = arith.constant 2.000000e-01 : f32
      %327 = vector.broadcast %cst_142 : f32 to vector<32x512xf32>
      %328 = arith.mulf %327, %326 : vector<32x512xf32>
      %329 = arith.maximumf %326, %328 : vector<32x512xf32>
      %330 = arith.addf %287, %329 : vector<32x512xf32>
      %331 = arith.index_cast %arg14 : i32 to index
      %c0_143 = arith.constant 0 : index
      %c0_144 = arith.constant 0 : index
      %332 = vector.load %arg9[%331, %c0_143, %c0_144] : memref<4x32x1xf32, #tpu.memory_space<vmem>>, vector<1x32x1xf32>
      %333 = vector.shape_cast %332 : vector<1x32x1xf32> to vector<32x1xf32>
      %334 = vector.broadcast %333 : vector<32x1xf32> to vector<32x512xf32>
      %335 = arith.mulf %330, %334 : vector<32x512xf32>
      %336 = arith.index_cast %arg14 : i32 to index
      %c0_145 = arith.constant 0 : index
      %c0_146 = arith.constant 0 : index
      %337 = vector.load %arg10[%336, %c0_145, %c0_146] : memref<4x32x1xf32, #tpu.memory_space<vmem>>, vector<1x32x1xf32>
      %338 = vector.shape_cast %337 : vector<1x32x1xf32> to vector<32x1xf32>
      %339 = vector.broadcast %338 : vector<32x1xf32> to vector<32x512xf32>
      %340 = arith.addf %335, %339 : vector<32x512xf32>
      scf.yield %340 : vector<32x512xf32>
    }
    %c4_i32_25 = arith.constant 4 : i32
    %c0_26 = arith.constant 0 : index
    %c0_27 = arith.constant 0 : index
    %c0_28 = arith.constant 0 : index
    %122 = vector.load %arg11[%c0_26, %c0_27, %c0_28] : memref<5x1x32xbf16, #tpu.memory_space<vmem>>, vector<1x1x32xbf16>
    %123 = vector.shape_cast %122 : vector<1x1x32xbf16> to vector<1x32xbf16>
    %c2_i32_29 = arith.constant 2 : i32
    %124 = tpu.dynamic_rotate %121 by %c2_i32_29 dim 1 : vector<32x512xf32>, i32 -> vector<32x512xf32>
    %125 = vector.broadcast %27 : vector<1x512xf32> to vector<32x512xf32>
    %126 = arith.mulf %124, %125 : vector<32x512xf32>
    %127 = arith.truncf %126 : vector<32x512xf32> to vector<32x512xbf16>
    %cst = arith.constant dense<0.000000e+00> : vector<1x512xf32>
    %128 = tpu.matmul %123, %127, %cst {dimension_numbers = #tpu.dot_dimension_numbers<[1], [0], [0], [1], [0, 0, 1, 1], [], []>} : vector<1x32xbf16>, vector<32x512xbf16>, vector<1x512xf32> -> vector<1x512xf32>
    %c1 = arith.constant 1 : index
    %c0_30 = arith.constant 0 : index
    %c0_31 = arith.constant 0 : index
    %129 = vector.load %arg11[%c1, %c0_30, %c0_31] : memref<5x1x32xbf16, #tpu.memory_space<vmem>>, vector<1x1x32xbf16>
    %130 = vector.shape_cast %129 : vector<1x1x32xbf16> to vector<1x32xbf16>
    %c1_i32_32 = arith.constant 1 : i32
    %131 = tpu.dynamic_rotate %121 by %c1_i32_32 dim 1 : vector<32x512xf32>, i32 -> vector<32x512xf32>
    %132 = vector.broadcast %38 : vector<1x512xf32> to vector<32x512xf32>
    %133 = arith.mulf %131, %132 : vector<32x512xf32>
    %134 = arith.truncf %133 : vector<32x512xf32> to vector<32x512xbf16>
    %cst_33 = arith.constant dense<0.000000e+00> : vector<1x512xf32>
    %135 = tpu.matmul %130, %134, %cst_33 {dimension_numbers = #tpu.dot_dimension_numbers<[1], [0], [0], [1], [0, 0, 1, 1], [], []>} : vector<1x32xbf16>, vector<32x512xbf16>, vector<1x512xf32> -> vector<1x512xf32>
    %136 = arith.addf %128, %135 : vector<1x512xf32>
    %c2 = arith.constant 2 : index
    %c0_34 = arith.constant 0 : index
    %c0_35 = arith.constant 0 : index
    %137 = vector.load %arg11[%c2, %c0_34, %c0_35] : memref<5x1x32xbf16, #tpu.memory_space<vmem>>, vector<1x1x32xbf16>
    %138 = vector.shape_cast %137 : vector<1x1x32xbf16> to vector<1x32xbf16>
    %139 = arith.truncf %121 : vector<32x512xf32> to vector<32x512xbf16>
    %cst_36 = arith.constant dense<0.000000e+00> : vector<1x512xf32>
    %140 = tpu.matmul %138, %139, %cst_36 {dimension_numbers = #tpu.dot_dimension_numbers<[1], [0], [0], [1], [0, 0, 1, 1], [], []>} : vector<1x32xbf16>, vector<32x512xbf16>, vector<1x512xf32> -> vector<1x512xf32>
    %141 = arith.addf %136, %140 : vector<1x512xf32>
    %c3 = arith.constant 3 : index
    %c0_37 = arith.constant 0 : index
    %c0_38 = arith.constant 0 : index
    %142 = vector.load %arg11[%c3, %c0_37, %c0_38] : memref<5x1x32xbf16, #tpu.memory_space<vmem>>, vector<1x1x32xbf16>
    %143 = vector.shape_cast %142 : vector<1x1x32xbf16> to vector<1x32xbf16>
    %c511_i32_39 = arith.constant 511 : i32
    %144 = tpu.dynamic_rotate %121 by %c511_i32_39 dim 1 : vector<32x512xf32>, i32 -> vector<32x512xf32>
    %145 = vector.broadcast %49 : vector<1x512xf32> to vector<32x512xf32>
    %146 = arith.mulf %144, %145 : vector<32x512xf32>
    %147 = arith.truncf %146 : vector<32x512xf32> to vector<32x512xbf16>
    %cst_40 = arith.constant dense<0.000000e+00> : vector<1x512xf32>
    %148 = tpu.matmul %143, %147, %cst_40 {dimension_numbers = #tpu.dot_dimension_numbers<[1], [0], [0], [1], [0, 0, 1, 1], [], []>} : vector<1x32xbf16>, vector<32x512xbf16>, vector<1x512xf32> -> vector<1x512xf32>
    %149 = arith.addf %141, %148 : vector<1x512xf32>
    %c4 = arith.constant 4 : index
    %c0_41 = arith.constant 0 : index
    %c0_42 = arith.constant 0 : index
    %150 = vector.load %arg11[%c4, %c0_41, %c0_42] : memref<5x1x32xbf16, #tpu.memory_space<vmem>>, vector<1x1x32xbf16>
    %151 = vector.shape_cast %150 : vector<1x1x32xbf16> to vector<1x32xbf16>
    %c510_i32_43 = arith.constant 510 : i32
    %152 = tpu.dynamic_rotate %121 by %c510_i32_43 dim 1 : vector<32x512xf32>, i32 -> vector<32x512xf32>
    %153 = vector.broadcast %60 : vector<1x512xf32> to vector<32x512xf32>
    %154 = arith.mulf %152, %153 : vector<32x512xf32>
    %155 = arith.truncf %154 : vector<32x512xf32> to vector<32x512xbf16>
    %cst_44 = arith.constant dense<0.000000e+00> : vector<1x512xf32>
    %156 = tpu.matmul %151, %155, %cst_44 {dimension_numbers = #tpu.dot_dimension_numbers<[1], [0], [0], [1], [0, 0, 1, 1], [], []>} : vector<1x32xbf16>, vector<32x512xbf16>, vector<1x512xf32> -> vector<1x512xf32>
    %157 = arith.addf %149, %156 : vector<1x512xf32>
    %c0_45 = arith.constant 0 : index
    %c0_46 = arith.constant 0 : index
    %158 = vector.load %arg12[%c0_45, %c0_46] : memref<1x1xf32, #tpu.memory_space<vmem>>, vector<1x1xf32>
    %159 = vector.broadcast %158 : vector<1x1xf32> to vector<1x512xf32>
    %160 = arith.addf %157, %159 : vector<1x512xf32>
    %161 = arith.subf %62, %160 : vector<1x512xf32>
    %c0_47 = arith.constant 0 : index
    %c0_48 = arith.constant 0 : index
    %162 = vector.load %arg13[%c0_47, %c0_48] : memref<1x512xf32, #tpu.memory_space<vmem>>, vector<1x512xf32>
    tpu.vector_store %arg13[%c0_47, %c0_48], %161 {strides = array<i32>} : memref<1x512xf32, #tpu.memory_space<vmem>>, vector<1x512xf32>,
    return
  }
  func.func @transform_0(%arg0: i32) -> (i32, i32) {
    %c0_i32 = arith.constant 0 : i32
    %c0_i32_0 = arith.constant 0 : i32
    return %c0_i32, %arg0 : i32, i32
  }
  func.func @transform_1(%arg0: i32) -> (i32, i32) {
    %c0_i32 = arith.constant 0 : i32
    %c0_i32_0 = arith.constant 0 : i32
    %c0_i32_1 = arith.constant 0 : i32
    return %c0_i32, %c0_i32_0 : i32, i32
  }
  func.func @transform_2(%arg0: i32) -> (i32, i32) {
    %c0_i32 = arith.constant 0 : i32
    %c0_i32_0 = arith.constant 0 : i32
    %c0_i32_1 = arith.constant 0 : i32
    return %c0_i32, %c0_i32_0 : i32, i32
  }
  func.func @transform_3(%arg0: i32) -> (i32, i32, i32) {
    %c0_i32 = arith.constant 0 : i32
    %c0_i32_0 = arith.constant 0 : i32
    %c0_i32_1 = arith.constant 0 : i32
    %c0_i32_2 = arith.constant 0 : i32
    return %c0_i32, %c0_i32_0, %c0_i32_1 : i32, i32, i32
  }
  func.func @transform_4(%arg0: i32) -> (i32, i32, i32) {
    %c0_i32 = arith.constant 0 : i32
    %c0_i32_0 = arith.constant 0 : i32
    %c0_i32_1 = arith.constant 0 : i32
    %c0_i32_2 = arith.constant 0 : i32
    return %c0_i32, %c0_i32_0, %c0_i32_1 : i32, i32, i32
  }
  func.func @transform_5(%arg0: i32) -> (i32, i32, i32) {
    %c0_i32 = arith.constant 0 : i32
    %c0_i32_0 = arith.constant 0 : i32
    %c0_i32_1 = arith.constant 0 : i32
    %c0_i32_2 = arith.constant 0 : i32
    return %c0_i32, %c0_i32_0, %c0_i32_1 : i32, i32, i32
  }
  func.func @transform_6(%arg0: i32) -> (i32, i32, i32) {
    %c0_i32 = arith.constant 0 : i32
    %c0_i32_0 = arith.constant 0 : i32
    %c0_i32_1 = arith.constant 0 : i32
    %c0_i32_2 = arith.constant 0 : i32
    return %c0_i32, %c0_i32_0, %c0_i32_1 : i32, i32, i32
  }
  func.func @transform_7(%arg0: i32) -> (i32, i32, i32) {
    %c0_i32 = arith.constant 0 : i32
    %c0_i32_0 = arith.constant 0 : i32
    %c0_i32_1 = arith.constant 0 : i32
    %c0_i32_2 = arith.constant 0 : i32
    return %c0_i32, %c0_i32_0, %c0_i32_1 : i32, i32, i32
  }
  func.func @transform_8(%arg0: i32) -> (i32, i32, i32) {
    %c0_i32 = arith.constant 0 : i32
    %c0_i32_0 = arith.constant 0 : i32
    %c0_i32_1 = arith.constant 0 : i32
    %c0_i32_2 = arith.constant 0 : i32
    return %c0_i32, %c0_i32_0, %c0_i32_1 : i32, i32, i32
  }
  func.func @transform_9(%arg0: i32) -> (i32, i32, i32) {
    %c0_i32 = arith.constant 0 : i32
    %c0_i32_0 = arith.constant 0 : i32
    %c0_i32_1 = arith.constant 0 : i32
    %c0_i32_2 = arith.constant 0 : i32
    return %c0_i32, %c0_i32_0, %c0_i32_1 : i32, i32, i32
  }
  func.func @transform_10(%arg0: i32) -> (i32, i32, i32) {
    %c0_i32 = arith.constant 0 : i32
    %c0_i32_0 = arith.constant 0 : i32
    %c0_i32_1 = arith.constant 0 : i32
    %c0_i32_2 = arith.constant 0 : i32
    return %c0_i32, %c0_i32_0, %c0_i32_1 : i32, i32, i32
  }
  func.func @transform_11(%arg0: i32) -> (i32, i32) {
    %c0_i32 = arith.constant 0 : i32
    %c0_i32_0 = arith.constant 0 : i32
    %c0_i32_1 = arith.constant 0 : i32
    return %c0_i32, %c0_i32_0 : i32, i32
  }
  func.func @transform_12(%arg0: i32) -> (i32, i32) {
    %c0_i32 = arith.constant 0 : i32
    %c0_i32_0 = arith.constant 0 : i32
    return %c0_i32, %arg0 : i32, i32
  }
}

</mosaic_0001>

<llo_original>
// kernel: generator_forward.1
$region0: #{generator_forward.1}
  #allocation0 [shape = 'u32[]', space=smem, size = 0x4, offset = 0x4, fixed_abs, tag = 'smem constant byte address 0x4 - core index']
  #allocation1 [shape = 'u32[144,128]{1,0:T(1,128)}', space=vmem, size = 0x12000, scoped, tag = 'internal scratch']
  #allocation2 [shape = 'f32[1,1]{1,0:T(1,128)S(1)}', space=vmem, size = 0x200, scoped, tag = 'scoped memory for generator_forward.1']
  %s0 = inlined_call_operand.vmem [shape: f32[2,1024], index: 0, kind: input, shape index: {}]
  %s1 = inlined_call_operand.vmem [shape: f32[32,5], index: 1, kind: input, shape index: {}]
  %s2 = inlined_call_operand.vmem [shape: f32[32,1], index: 2, kind: input, shape index: {}]
  %s3 = inlined_call_operand.vmem [shape: bf16[4,32,10], index: 3, kind: input, shape index: {}]
  %s4 = inlined_call_operand.vmem [shape: bf16[12,32,32], index: 4, kind: input, shape index: {}]
  %s5 = inlined_call_operand.vmem [shape: f32[4,32,1], index: 5, kind: input, shape index: {}]
  %s6 = inlined_call_operand.vmem [shape: bf16[36,32,32], index: 6, kind: input, shape index: {}]
  %s7 = inlined_call_operand.vmem [shape: f32[12,32,1], index: 7, kind: input, shape index: {}]
  %s8 = inlined_call_operand.vmem [shape: f32[4,32,1], index: 8, kind: input, shape index: {}]
  %s9 = inlined_call_operand.vmem [shape: f32[4,32,1], index: 9, kind: input, shape index: {}]
  %s10 = inlined_call_operand.vmem [shape: bf16[5,1,32], index: 10, kind: input, shape index: {}]
  %s11 = inlined_call_operand.<no memory space> [shape: f32[1,1], index: 11, kind: input, shape index: {}]
  %s12 = inlined_call_operand.vmem [shape: f32[1,1024], index: 12, kind: output, shape index: {}]
  %s13 = sld [smem:[#allocation0]]
  $region88: #{generator_forward.1} parent=0
    _
  %s15 = ssub.s32 1, %s13
  %s16 = scalar_select 0, %s15, %s13
  %v17 = vstv %s11
  %18 = vst [vmem:[#allocation2] sm:$0x1] %v17
  loop: start=0, step=1, limit=4
  $region2: #{generator_forward.1} parent=0 // loop_pre_header
    _
  $region3: #{generator_forward.1} parent=0 // loop_header
    %s20 = sphi 0, %s24
    %p21 = scmp.ge.s32.totalorder %s20, 4
    %s30 = sphi 0, %s32
    %s33 = sphi 0, %s30
    %s34 = sphi 0, %s33
    %s50 = sphi 0, %s34
    %s54 = sphi 0, %s54
    %s56 = sphi 0, %s54
    %s57 = sphi 0, %s56
    %s71 = sphi 0, %s57
    %s75 = sphi 0, %s75
    %s77 = sphi 0, %s75
    %s78 = sphi 0, %s77
    %s92 = sphi 0, %s78
    %s96 = sphi 0, %s96
    %s98 = sphi 0, %s96
    %s99 = sphi 0, %s98
    %s113 = sphi 0, %s99
    %s117 = sphi 0, %s117
    %s119 = sphi 0, %s117
    %s120 = sphi 0, %s119
    %s134 = sphi 0, %s120
    %s138 = sphi 0, %s138
    %s140 = sphi 0, %s138
    %s141 = sphi 0, %s140
    %s155 = sphi 0, %s141
    %s159 = sphi 0, %s159
    %s161 = sphi 0, %s159
    %s162 = sphi 0, %s161
    %s176 = sphi 0, %s162
    %s180 = sphi 0, %s180
    %s182 = sphi 0, %s180
    %s183 = sphi 0, %s182
    %s197 = sphi 0, %s183
    %s201 = sphi 0, %s201
    %s203 = sphi 0, %s201
    %s204 = sphi 0, %s203
    %s218 = sphi 0, %s204
    %s222 = sphi 0, %s222
    %s224 = sphi 0, %s222
    %s225 = sphi 0, %s224
    %s239 = sphi 0, %s225
    %s243 = sphi 0, %s243
    %s245 = sphi 0, %s243
    %s246 = sphi 0, %s245
    %s260 = sphi 0, %s246
    %s264 = sphi 0, %s264
    %s266 = sphi 0, %s264
    %s267 = sphi 0, %s266
    %s281 = sphi 0, %s267
    %s287 = sphi 0, %s289
    %s290 = sphi 0, %s287
    %s291 = sphi 0, %s290
    %s307 = sphi 0, %s291
  $region4: #{generator_forward.1} parent=0 // loop_header_branch
    %23 = sbr.rel (%p21) target = $region8
  $region5: #{generator_forward.1} parent=0 // loop_body
    %s25 = ssub.s32 %s20, 1
    %s26 = ssub.s32 %s20, 2
    %s27 = sadd.s32 %s20, 1
    %s28 = ssub.s32 %s20, %s27
    %p29 = scmp.eq.s32.totalorder %s28, 0
    %s31 = sadd.s32 %s30, 1
    %s32 = scalar_select %p29, %s30, %s31
    %p35 = pneg %p29
    %p36 = scmp.eq.s32.totalorder %s20, 1
    %p37 = por %p35, %p36
    %p38 = scmp.ne.s32.totalorder %s30, %s33
    %p39 = scmp.eq.s32.totalorder %s20, 0
    %p40 = por %p38, %p39
    %p41 = scmp.ne.s32.totalorder %s30, %s33
    %p42 = scmp.eq.s32.totalorder %s25, 1
    %p43 = por %p41, %p42
    %p44 = scmp.ne.s32.totalorder %s33, %s34
    %p45 = scmp.eq.s32.totalorder %s25, 0
    %p46 = por %p44, %p45
    %p47 = scmp.ne.s32.totalorder %s33, %s34
    %p48 = scmp.eq.s32.totalorder %s26, 1
    %p49 = por %p47, %p48
    %p51 = scmp.ne.s32.totalorder %s34, %s50
    %p52 = scmp.eq.s32.totalorder %s26, 0
    %p53 = por %p51, %p52
    %s55 = sadd.s32 %s54, 1
    %p58 = scmp.eq.s32.totalorder %s20, 1
    %p59 = scmp.ne.s32.totalorder %s54, %s56
    %p60 = scmp.eq.s32.totalorder %s20, 0
    %p61 = por %p59, %p60
    %p62 = scmp.ne.s32.totalorder %s54, %s56
    %p63 = scmp.eq.s32.totalorder %s25, 1
    %p64 = por %p62, %p63
    %p65 = scmp.ne.s32.totalorder %s56, %s57
    %p66 = scmp.eq.s32.totalorder %s25, 0
    %p67 = por %p65, %p66
    %p68 = scmp.ne.s32.totalorder %s56, %s57
    %p69 = scmp.eq.s32.totalorder %s26, 1
    %p70 = por %p68, %p69
    %p72 = scmp.ne.s32.totalorder %s57, %s71
    %p73 = scmp.eq.s32.totalorder %s26, 0
    %p74 = por %p72, %p73
    %s76 = sadd.s32 %s75, 1
    %p79 = scmp.eq.s32.totalorder %s20, 1
    %p80 = scmp.ne.s32.totalorder %s75, %s77
    %p81 = scmp.eq.s32.totalorder %s20, 0
    %p82 = por %p80, %p81
    %p83 = scmp.ne.s32.totalorder %s75, %s77
    %p84 = scmp.eq.s32.totalorder %s25, 1
    %p85 = por %p83, %p84
    %p86 = scmp.ne.s32.totalorder %s77, %s78
    %p87 = scmp.eq.s32.totalorder %s25, 0
    %p88 = por %p86, %p87
    %p89 = scmp.ne.s32.totalorder %s77, %s78
    %p90 = scmp.eq.s32.totalorder %s26, 1
    %p91 = por %p89, %p90
    %p93 = scmp.ne.s32.totalorder %s78, %s92
    %p94 = scmp.eq.s32.totalorder %s26, 0
    %p95 = por %p93, %p94
    %s97 = sadd.s32 %s96, 1
    %p100 = scmp.eq.s32.totalorder %s20, 1
    %p101 = scmp.ne.s32.totalorder %s96, %s98
    %p102 = scmp.eq.s32.totalorder %s20, 0
    %p103 = por %p101, %p102
    %p104 = scmp.ne.s32.totalorder %s96, %s98
    %p105 = scmp.eq.s32.totalorder %s25, 1
    %p106 = por %p104, %p105
    %p107 = scmp.ne.s32.totalorder %s98, %s99
    %p108 = scmp.eq.s32.totalorder %s25, 0
    %p109 = por %p107, %p108
    %p110 = scmp.ne.s32.totalorder %s98, %s99
    %p111 = scmp.eq.s32.totalorder %s26, 1
    %p112 = por %p110, %p111
    %p114 = scmp.ne.s32.totalorder %s99, %s113
    %p115 = scmp.eq.s32.totalorder %s26, 0
    %p116 = por %p114, %p115
    %s118 = sadd.s32 %s117, 1
    %p121 = scmp.eq.s32.totalorder %s20, 1
    %p122 = scmp.ne.s32.totalorder %s117, %s119
    %p123 = scmp.eq.s32.totalorder %s20, 0
    %p124 = por %p122, %p123
    %p125 = scmp.ne.s32.totalorder %s117, %s119
    %p126 = scmp.eq.s32.totalorder %s25, 1
    %p127 = por %p125, %p126
    %p128 = scmp.ne.s32.totalorder %s119, %s120
    %p129 = scmp.eq.s32.totalorder %s25, 0
    %p130 = por %p128, %p129
    %p131 = scmp.ne.s32.totalorder %s119, %s120
    %p132 = scmp.eq.s32.totalorder %s26, 1
    %p133 = por %p131, %p132
    %p135 = scmp.ne.s32.totalorder %s120, %s134
    %p136 = scmp.eq.s32.totalorder %s26, 0
    %p137 = por %p135, %p136
    %s139 = sadd.s32 %s138, 1
    %p142 = scmp.eq.s32.totalorder %s20, 1
    %p143 = scmp.ne.s32.totalorder %s138, %s140
    %p144 = scmp.eq.s32.totalorder %s20, 0
    %p145 = por %p143, %p144
    %p146 = scmp.ne.s32.totalorder %s138, %s140
    %p147 = scmp.eq.s32.totalorder %s25, 1
    %p148 = por %p146, %p147
    %p149 = scmp.ne.s32.totalorder %s140, %s141
    %p150 = scmp.eq.s32.totalorder %s25, 0
    %p151 = por %p149, %p150
    %p152 = scmp.ne.s32.totalorder %s140, %s141
    %p153 = scmp.eq.s32.totalorder %s26, 1
    %p154 = por %p152, %p153
    %p156 = scmp.ne.s32.totalorder %s141, %s155
    %p157 = scmp.eq.s32.totalorder %s26, 0
    %p158 = por %p156, %p157
    %s160 = sadd.s32 %s159, 1
    %p163 = scmp.eq.s32.totalorder %s20, 1
    %p164 = scmp.ne.s32.totalorder %s159, %s161
    %p165 = scmp.eq.s32.totalorder %s20, 0
    %p166 = por %p164, %p165
    %p167 = scmp.ne.s32.totalorder %s159, %s161
    %p168 = scmp.eq.s32.totalorder %s25, 1
    %p169 = por %p167, %p168
    %p170 = scmp.ne.s32.totalorder %s161, %s162
    %p171 = scmp.eq.s32.totalorder %s25, 0
    %p172 = por %p170, %p171
    %p173 = scmp.ne.s32.totalorder %s161, %s162
    %p174 = scmp.eq.s32.totalorder %s26, 1
    %p175 = por %p173, %p174
    %p177 = scmp.ne.s32.totalorder %s162, %s176
    %p178 = scmp.eq.s32.totalorder %s26, 0
    %p179 = por %p177, %p178
    %s181 = sadd.s32 %s180, 1
    %p184 = scmp.eq.s32.totalorder %s20, 1
    %p185 = scmp.ne.s32.totalorder %s180, %s182
    %p186 = scmp.eq.s32.totalorder %s20, 0
    %p187 = por %p185, %p186
    %p188 = scmp.ne.s32.totalorder %s180, %s182
    %p189 = scmp.eq.s32.totalorder %s25, 1
    %p190 = por %p188, %p189
    %p191 = scmp.ne.s32.totalorder %s182, %s183
    %p192 = scmp.eq.s32.totalorder %s25, 0
    %p193 = por %p191, %p192
    %p194 = scmp.ne.s32.totalorder %s182, %s183
    %p195 = scmp.eq.s32.totalorder %s26, 1
    %p196 = por %p194, %p195
    %p198 = scmp.ne.s32.totalorder %s183, %s197
    %p199 = scmp.eq.s32.totalorder %s26, 0
    %p200 = por %p198, %p199
    %s202 = sadd.s32 %s201, 1
    %p205 = scmp.eq.s32.totalorder %s20, 1
    %p206 = scmp.ne.s32.totalorder %s201, %s203
    %p207 = scmp.eq.s32.totalorder %s20, 0
    %p208 = por %p206, %p207
    %p209 = scmp.ne.s32.totalorder %s201, %s203
    %p210 = scmp.eq.s32.totalorder %s25, 1
    %p211 = por %p209, %p210
    %p212 = scmp.ne.s32.totalorder %s203, %s204
    %p213 = scmp.eq.s32.totalorder %s25, 0
    %p214 = por %p212, %p213
    %p215 = scmp.ne.s32.totalorder %s203, %s204
    %p216 = scmp.eq.s32.totalorder %s26, 1
    %p217 = por %p215, %p216
    %p219 = scmp.ne.s32.totalorder %s204, %s218
    %p220 = scmp.eq.s32.totalorder %s26, 0
    %p221 = por %p219, %p220
    %s223 = sadd.s32 %s222, 1
    %p226 = scmp.eq.s32.totalorder %s20, 1
    %p227 = scmp.ne.s32.totalorder %s222, %s224
    %p228 = scmp.eq.s32.totalorder %s20, 0
    %p229 = por %p227, %p228
    %p230 = scmp.ne.s32.totalorder %s222, %s224
    %p231 = scmp.eq.s32.totalorder %s25, 1
    %p232 = por %p230, %p231
    %p233 = scmp.ne.s32.totalorder %s224, %s225
    %p234 = scmp.eq.s32.totalorder %s25, 0
    %p235 = por %p233, %p234
    %p236 = scmp.ne.s32.totalorder %s224, %s225
    %p237 = scmp.eq.s32.totalorder %s26, 1
    %p238 = por %p236, %p237
    %p240 = scmp.ne.s32.totalorder %s225, %s239
    %p241 = scmp.eq.s32.totalorder %s26, 0
    %p242 = por %p240, %p241
    %s244 = sadd.s32 %s243, 1
    %p247 = scmp.eq.s32.totalorder %s20, 1
    %p248 = scmp.ne.s32.totalorder %s243, %s245
    %p249 = scmp.eq.s32.totalorder %s20, 0
    %p250 = por %p248, %p249
    %p251 = scmp.ne.s32.totalorder %s243, %s245
    %p252 = scmp.eq.s32.totalorder %s25, 1
    %p253 = por %p251, %p252
    %p254 = scmp.ne.s32.totalorder %s245, %s246
    %p255 = scmp.eq.s32.totalorder %s25, 0
    %p256 = por %p254, %p255
    %p257 = scmp.ne.s32.totalorder %s245, %s246
    %p258 = scmp.eq.s32.totalorder %s26, 1
    %p259 = por %p257, %p258
    %p261 = scmp.ne.s32.totalorder %s246, %s260
    %p262 = scmp.eq.s32.totalorder %s26, 0
    %p263 = por %p261, %p262
    %s265 = sadd.s32 %s264, 1
    %p268 = scmp.eq.s32.totalorder %s20, 1
    %p269 = scmp.ne.s32.totalorder %s264, %s266
    %p270 = scmp.eq.s32.totalorder %s20, 0
    %p271 = por %p269, %p270
    %p272 = scmp.ne.s32.totalorder %s264, %s266
    %p273 = scmp.eq.s32.totalorder %s25, 1
    %p274 = por %p272, %p273
    %p275 = scmp.ne.s32.totalorder %s266, %s267
    %p276 = scmp.eq.s32.totalorder %s25, 0
    %p277 = por %p275, %p276
    %p278 = scmp.ne.s32.totalorder %s266, %s267
    %p279 = scmp.eq.s32.totalorder %s26, 1
    %p280 = por %p278, %p279
    %p282 = scmp.ne.s32.totalorder %s267, %s281
    %p283 = scmp.eq.s32.totalorder %s26, 0
    %p284 = por %p282, %p283
    %s285 = ssub.s32 %s20, %s27
    %p286 = scmp.eq.s32.totalorder %s285, 0
    %s288 = sadd.s32 %s287, 1
    %s289 = scalar_select %p286, %s287, %s288
    %p292 = pneg %p286
    %p293 = scmp.eq.s32.totalorder %s20, 1
    %p294 = por %p292, %p293
    %p295 = scmp.ne.s32.totalorder %s287, %s290
    %p296 = scmp.eq.s32.totalorder %s20, 0
    %p297 = por %p295, %p296
    %p298 = scmp.ne.s32.totalorder %s287, %s290
    %p299 = scmp.eq.s32.totalorder %s25, 1
    %p300 = por %p298, %p299
    %p301 = scmp.ne.s32.totalorder %s290, %s291
    %p302 = scmp.eq.s32.totalorder %s25, 0
    %p303 = por %p301, %p302
    %p304 = scmp.ne.s32.totalorder %s290, %s291
    %p305 = scmp.eq.s32.totalorder %s26, 1
    %p306 = por %p304, %p305
    %p308 = scmp.ne.s32.totalorder %s291, %s307
    %p309 = scmp.eq.s32.totalorder %s26, 0
    %p310 = por %p308, %p309
    %p311 = scmp.le.s32.totalorder 1, %s20
    %p312 = scmp.lt.s32.totalorder %s20, 3
    %p313 = pnand %p311, %p312
    %p314 = pneg %p313
    // Predicated region
    $region9: #{generator_forward.1} parent=5 // pred_check
      _
    $region10: #{generator_forward.1} parent=5 // pred_check_branch
      %316 = sbr.rel (%p313) target = $region12
    $region11: #{generator_forward.1} parent=5 // pred_region
      %s317 = ssub.s32 %s20, 1
      // Predicated region
      $region13: #{generator_forward.1} parent=11 // pred_check
        %p318 = pneg %p67
      $region14: #{generator_forward.1} parent=11 // pred_check_branch
        %320 = sbr.rel (%p318) target = $region16
      $region15: #{generator_forward.1} parent=11 // pred_region
        _
      $region16: #{generator_forward.1} parent=11 // pred_fallthru
        _
      // Predicated region
      $region17: #{generator_forward.1} parent=11 // pred_check
        %p321 = pneg %p88
      $region18: #{generator_forward.1} parent=11 // pred_check_branch
        %323 = sbr.rel (%p321) target = $region20
      $region19: #{generator_forward.1} parent=11 // pred_region
        _
      $region20: #{generator_forward.1} parent=11 // pred_fallthru
        _
      // Predicated region
      $region21: #{generator_forward.1} parent=11 // pred_check
        %p324 = pneg %p109
      $region22: #{generator_forward.1} parent=11 // pred_check_branch
        %326 = sbr.rel (%p324) target = $region24
      $region23: #{generator_forward.1} parent=11 // pred_region
        _
      $region24: #{generator_forward.1} parent=11 // pred_fallthru
        _
      // Predicated region
      $region25: #{generator_forward.1} parent=11 // pred_check
        %p327 = pneg %p130
      $region26: #{generator_forward.1} parent=11 // pred_check_branch
        %329 = sbr.rel (%p327) target = $region28
      $region27: #{generator_forward.1} parent=11 // pred_region
        _
      $region28: #{generator_forward.1} parent=11 // pred_fallthru
        _
      // Predicated region
      $region29: #{generator_forward.1} parent=11 // pred_check
        %p330 = pneg %p151
      $region30: #{generator_forward.1} parent=11 // pred_check_branch
        %332 = sbr.rel (%p330) target = $region32
      $region31: #{generator_forward.1} parent=11 // pred_region
        _
      $region32: #{generator_forward.1} parent=11 // pred_fallthru
        _
      // Predicated region
      $region33: #{generator_forward.1} parent=11 // pred_check
        %p333 = pneg %p172
      $region34: #{generator_forward.1} parent=11 // pred_check_branch
        %335 = sbr.rel (%p333) target = $region36
      $region35: #{generator_forward.1} parent=11 // pred_region
        _
      $region36: #{generator_forward.1} parent=11 // pred_fallthru
        _
      // Predicated region
      $region37: #{generator_forward.1} parent=11 // pred_check
        %p336 = pneg %p193
      $region38: #{generator_forward.1} parent=11 // pred_check_branch
        %338 = sbr.rel (%p336) target = $region40
      $region39: #{generator_forward.1} parent=11 // pred_region
        _
      $region40: #{generator_forward.1} parent=11 // pred_fallthru
        _
      // Predicated region
      $region41: #{generator_forward.1} parent=11 // pred_check
        %p339 = pneg %p214
      $region42: #{generator_forward.1} parent=11 // pred_check_branch
        %341 = sbr.rel (%p339) target = $region44
      $region43: #{generator_forward.1} parent=11 // pred_region
        _
      $region44: #{generator_forward.1} parent=11 // pred_fallthru
        _
      // Predicated region
      $region45: #{generator_forward.1} parent=11 // pred_check
        %p342 = pneg %p235
      $region46: #{generator_forward.1} parent=11 // pred_check_branch
        %344 = sbr.rel (%p342) target = $region48
      $region47: #{generator_forward.1} parent=11 // pred_region
        _
      $region48: #{generator_forward.1} parent=11 // pred_fallthru
        _
      // Predicated region
      $region49: #{generator_forward.1} parent=11 // pred_check
        %p345 = pneg %p256
      $region50: #{generator_forward.1} parent=11 // pred_check_branch
        %347 = sbr.rel (%p345) target = $region52
      $region51: #{generator_forward.1} parent=11 // pred_region
        _
      $region52: #{generator_forward.1} parent=11 // pred_fallthru
        _
      // Predicated region
      $region53: #{generator_forward.1} parent=11 // pred_check
        %p348 = pneg %p277
      $region54: #{generator_forward.1} parent=11 // pred_check_branch
        %350 = sbr.rel (%p348) target = $region56
      $region55: #{generator_forward.1} parent=11 // pred_region
        _
      $region56: #{generator_forward.1} parent=11 // pred_fallthru
        _
    $region12: #{generator_forward.1} parent=5 // pred_fallthru
      _
    %p351 = scmp.lt.s32.totalorder %s20, 2
    // Predicated region
    $region57: #{generator_forward.1} parent=5 // pred_check
      %p352 = pneg %p351
    $region58: #{generator_forward.1} parent=5 // pred_check_branch
      %354 = sbr.rel (%p352) target = $region60
    $region59: #{generator_forward.1} parent=5 // pred_region
      // Predicated region
      $region61: #{generator_forward.1} parent=59 // pred_check
        %p355 = pneg %p40
      $region62: #{generator_forward.1} parent=59 // pred_check_branch
        %357 = sbr.rel (%p355) target = $region64
      $region63: #{generator_forward.1} parent=59 // pred_region
        %s358 = smul.u32 4, %s20
        %p359 = scmp.lt.s32.totalorder %s358, 7
        %s360 = scalar_select %p359, %s358, 7
        %s361 = smul.addr %s360, 2
        %s362 = scalar_lea.vmem %s0, %s361
        %s363 = smul.u32 4, %s20
      $region64: #{generator_forward.1} parent=59 // pred_fallthru
        _
    $region60: #{generator_forward.1} parent=5 // pred_fallthru
      _
    %p364 = scmp.le.s32.totalorder 1, %s20
    %p365 = scmp.lt.s32.totalorder %s20, 3
    %p366 = pnand %p364, %p365
    %p367 = pneg %p366
    // Predicated region
    $region65: #{generator_forward.1} parent=5 // pred_check
      _
    $region66: #{generator_forward.1} parent=5 // pred_check_branch
      %369 = sbr.rel (%p366) target = $region68
    $region67: #{generator_forward.1} parent=5 // pred_region
      %s370 = ssub.s32 %s20, 1
      %s371 = smul.u32 4, %s25
      %p372 = scmp.lt.s32.totalorder %s371, 7
      %s373 = scalar_select %p372, %s371, 7
      %s374 = smul.addr %s373, 2
      %s375 = scalar_lea.vmem %s0, %s374
      %p376 = pneg %p46
      %p377 = pneg %p43
      %p378 = pneg %p67
      %p379 = pneg %p64
      %p380 = pneg %p88
      %p381 = pneg %p85
      %p382 = pneg %p109
      %p383 = pneg %p106
      %p384 = pneg %p130
      %p385 = pneg %p127
      %p386 = pneg %p151
      %p387 = pneg %p148
      %p388 = pneg %p172
      %p389 = pneg %p169
      %p390 = pneg %p193
      %p391 = pneg %p190
      %p392 = pneg %p214
      %p393 = pneg %p211
      %p394 = pneg %p235
      %p395 = pneg %p232
      %p396 = pneg %p256
      %p397 = pneg %p253
      %p398 = pneg %p277
      %p399 = pneg %p274
      %p400 = pneg %p303
      %p401 = pneg %p300
      %s402 = smul.u32 4, %s25
      %p403 = scmp.lt.s32.totalorder %s402, 7
      %s404 = scalar_select %p403, %s402, 7
      %s405 = scalar_lea.vmem %s12, %s404
      %s406 = smul.u32 4, %s25
      %p407 = scmp.lt.s32.totalorder %s406, 7
      %s408 = scalar_select %p407, %s406, 7
      %s409 = smul.addr %s408, 2
      %s410 = scalar_lea.vmem %s0, %s409
      %s411 = smul.u32 4, %s25
      %s412 = smul.u32 4, %s25
      %p413 = scmp.lt.s32.totalorder %s412, 7
      %s414 = scalar_select %p413, %s412, 7
      %s415 = scalar_lea.vmem %s12, %s414
      %s416 = smul.u32 4, %s25
      %v418 = vlaneseq
      %v419 = vand.u32 %v418, 127
      %v420 = vadd.s32 %v419, 128
      %v421 = vadd.s32 %v419, 256
      %v422 = vadd.s32 %v419, 384
      %vm423 = vcmp.lt.s32.totalorder %v419, 0
      %v424 = vsub.s32 0, %v419
      %v425 = vsel %vm423, %v424, %v419
      %v426 = vshrl.u32 %v425, 6
      %v427 = vand.u32 %v425, 63
      %v428 = vsub.s32 0, %v427
      %v429 = vsel %vm423, %v428, %v427
      %vm430 = vcmp.lt.s32.totalorder %v420, 0
      %v431 = vsub.s32 0, %v420
      %v432 = vsel %vm430, %v431, %v420
      %v433 = vshrl.u32 %v432, 6
      %v434 = vand.u32 %v432, 63
      %v435 = vsub.s32 0, %v434
      %v436 = vsel %vm430, %v435, %v434
      %vm437 = vcmp.lt.s32.totalorder %v421, 0
      %v438 = vsub.s32 0, %v421
      %v439 = vsel %vm437, %v438, %v421
      %v440 = vshrl.u32 %v439, 6
      %v441 = vand.u32 %v439, 63
      %v442 = vsub.s32 0, %v441
      %v443 = vsel %vm437, %v442, %v441
      %vm444 = vcmp.lt.s32.totalorder %v422, 0
      %v445 = vsub.s32 0, %v422
      %v446 = vsel %vm444, %v445, %v422
      %v447 = vshrl.u32 %v446, 6
      %v448 = vand.u32 %v446, 63
      %v449 = vsub.s32 0, %v448
      %v450 = vsel %vm444, %v449, %v448
      %vm451 = vcmp.ne.s32.totalorder %v429, 0
      %vm452 = vcmp.ne.s32.totalorder %v436, 0
      %vm453 = vcmp.ne.s32.totalorder %v443, 0
      %vm454 = vcmp.ne.s32.totalorder %v450, 0
      %vm455 = vcmp.lt.s32.totalorder %v429, 0
      %vm456 = vcmp.lt.s32.totalorder %v436, 0
      %vm457 = vcmp.lt.s32.totalorder %v443, 0
      %vm458 = vcmp.lt.s32.totalorder %v450, 0
      %vm459 = vmand %vm455, %vm451
      %vm460 = vmand %vm456, %vm452
      %vm461 = vmand %vm457, %vm453
      %vm462 = vmand %vm458, %vm454
      %v463 = vadd.s32 %v429, 64
      %v464 = vadd.s32 %v436, 64
      %v465 = vadd.s32 %v443, 64
      %v466 = vadd.s32 %v450, 64
      %v467 = vsel %vm459, %v463, %v429
      %v468 = vsel %vm460, %v464, %v436
      %v469 = vsel %vm461, %v465, %v443
      %v470 = vsel %vm462, %v466, %v450
      %v471 = vadd.s32 %v467, 4294967294
      %v472 = vadd.s32 %v468, 4294967294
      %v473 = vadd.s32 %v469, 4294967294
      %v474 = vadd.s32 %v470, 4294967294
      %vm475 = vcmp.ge.s32.totalorder %v471, 0
      %vm476 = vcmp.ge.s32.totalorder %v472, 0
      %vm477 = vcmp.ge.s32.totalorder %v473, 0
      %vm478 = vcmp.ge.s32.totalorder %v474, 0
      %vm479 = vcmp.lt.s32.totalorder %v471, 64
      %vm480 = vcmp.lt.s32.totalorder %v472, 64
      %vm481 = vcmp.lt.s32.totalorder %v473, 64
      %vm482 = vcmp.lt.s32.totalorder %v474, 64
      %vm483 = vmand %vm475, %vm479
      %vm484 = vmand %vm476, %vm480
      %vm485 = vmand %vm477, %vm481
      %vm486 = vmand %vm478, %vm482
      %v487 = vsel %vm483, 1, 0
      %v488 = vsel %vm484, 1, 0
      %v489 = vsel %vm485, 1, 0
      %v490 = vsel %vm486, 1, 0
      %v491 = vcvt.s32.f32 %v487
      %v492 = vcvt.s32.f32 %v488
      %v493 = vcvt.s32.f32 %v489
      %v494 = vcvt.s32.f32 %v490
      %v495 = vadd.s32 %v467, 4294967295
      %v496 = vadd.s32 %v468, 4294967295
      %v497 = vadd.s32 %v469, 4294967295
      %v498 = vadd.s32 %v470, 4294967295
      %vm499 = vcmp.ge.s32.totalorder %v495, 0
      %vm500 = vcmp.ge.s32.totalorder %v496, 0
      %vm501 = vcmp.ge.s32.totalorder %v497, 0
      %vm502 = vcmp.ge.s32.totalorder %v498, 0
      %vm503 = vcmp.lt.s32.totalorder %v495, 64
      %vm504 = vcmp.lt.s32.totalorder %v496, 64
      %vm505 = vcmp.lt.s32.totalorder %v497, 64
      %vm506 = vcmp.lt.s32.totalorder %v498, 64
      %vm507 = vmand %vm499, %vm503
      %vm508 = vmand %vm500, %vm504
      %vm509 = vmand %vm501, %vm505
      %vm510 = vmand %vm502, %vm506
      %v511 = vsel %vm507, 1, 0
      %v512 = vsel %vm508, 1, 0
      %v513 = vsel %vm509, 1, 0
      %v514 = vsel %vm510, 1, 0
      %v515 = vcvt.s32.f32 %v511
      %v516 = vcvt.s32.f32 %v512
      %v517 = vcvt.s32.f32 %v513
      %v518 = vcvt.s32.f32 %v514
      %v519 = vadd.s32 %v467, 1
      %v520 = vadd.s32 %v468, 1
      %v521 = vadd.s32 %v469, 1
      %v522 = vadd.s32 %v470, 1
      %vm523 = vcmp.ge.s32.totalorder %v519, 0
      %vm524 = vcmp.ge.s32.totalorder %v520, 0
      %vm525 = vcmp.ge.s32.totalorder %v521, 0
      %vm526 = vcmp.ge.s32.totalorder %v522, 0
      %vm527 = vcmp.lt.s32.totalorder %v519, 64
      %vm528 = vcmp.lt.s32.totalorder %v520, 64
      %vm529 = vcmp.lt.s32.totalorder %v521, 64
      %vm530 = vcmp.lt.s32.totalorder %v522, 64
      %vm531 = vmand %vm523, %vm527
      %vm532 = vmand %vm524, %vm528
      %vm533 = vmand %vm525, %vm529
      %vm534 = vmand %vm526, %vm530
      %v535 = vsel %vm531, 1, 0
      %v536 = vsel %vm532, 1, 0
      %v537 = vsel %vm533, 1, 0
      %v538 = vsel %vm534, 1, 0
      %v539 = vcvt.s32.f32 %v535
      %v540 = vcvt.s32.f32 %v536
      %v541 = vcvt.s32.f32 %v537
      %v542 = vcvt.s32.f32 %v538
      %v543 = vadd.s32 %v467, 2
      %v544 = vadd.s32 %v468, 2
      %v545 = vadd.s32 %v469, 2
      %v546 = vadd.s32 %v470, 2
      %vm547 = vcmp.ge.s32.totalorder %v543, 0
      %vm548 = vcmp.ge.s32.totalorder %v544, 0
      %vm549 = vcmp.ge.s32.totalorder %v545, 0
      %vm550 = vcmp.ge.s32.totalorder %v546, 0
      %vm551 = vcmp.lt.s32.totalorder %v543, 64
      %vm552 = vcmp.lt.s32.totalorder %v544, 64
      %vm553 = vcmp.lt.s32.totalorder %v545, 64
      %vm554 = vcmp.lt.s32.totalorder %v546, 64
      %vm555 = vmand %vm547, %vm551
      %vm556 = vmand %vm548, %vm552
      %vm557 = vmand %vm549, %vm553
      %vm558 = vmand %vm550, %vm554
      %v559 = vsel %vm555, 1, 0
      %v560 = vsel %vm556, 1, 0
      %v561 = vsel %vm557, 1, 0
      %v562 = vsel %vm558, 1, 0
      %v563 = vcvt.s32.f32 %v559
      %v564 = vcvt.s32.f32 %v560
      %v565 = vcvt.s32.f32 %v561
      %v566 = vcvt.s32.f32 %v562
      %v567 = vld [vmem:[%s410] sm:$0xff]
      %v568 = vld [vmem:[%s1] sm:$0xff]
      %v569 = vld [vmem:[%s1 + $0x8] sm:$0xff]
      %v570 = vld [vmem:[%s1 + $0x10] sm:$0xff]
      %v571 = vld [vmem:[%s1 + $0x18] sm:$0xff]
      %v573 = vcombine.high %v567, %v567
      %v575 = vunpack.c.l.s4 1983009808
      %v576 = vunpack.c.0.s8 %v575
      %v577 = vlaneseq
      %v578 = vshrl.u32 %v577, 7
      %v579 = vsub.s32 %v576, %v578
      %v580 = vrot.slane %v567, %v579
      %v582 = vunpack.c.l.s4 1983009808
      %v583 = vunpack.c.0.s8 %v582
      %v584 = vlaneseq
      %v585 = vshrl.u32 %v584, 7
      %v586 = vsub.s32 %v583, %v585
      %v587 = vrot.slane %v573, %v586
      %v588 = vcombine.high %v580, %v580
      %v589 = vcombine.high %v587, %v587
      %594 = vrot.lane.b32.xlu0 %v580, 2
      %v595 = vpop.permute.xlu0 %594
      %596 = vrot.lane.b32.xlu0 %v588, 2
      %v597 = vpop.permute.xlu0 %596
      %598 = vrot.lane.b32.xlu0 %v587, 2
      %v599 = vpop.permute.xlu0 %598
      %600 = vrot.lane.b32.xlu0 %v589, 2
      %v601 = vpop.permute.xlu0 %600
      %vm602 = vcmp.lt.s32.totalorder %v419, 2
      %v603 = vsel %vm602, %v599, %v601
      %v604 = vsel %vm602, %v597, %v599
      %v605 = vsel %vm602, %v595, %v597
      %v606 = vsel %vm602, %v601, %v595
      %v607 = vmul.f32 %v606, %v491
      %v608 = vmul.f32 %v605, %v492
      %v609 = vmul.f32 %v604, %v493
      %v610 = vmul.f32 %v603, %v494
      %v615 = vrot.slane %v607, 7
      %v616 = vrot.slane %v608, 7
      %v617 = vrot.slane %v609, 7
      %v618 = vrot.slane %v610, 7
      %v623 = vsub.f32 %v607, %v615
      %v624 = vsub.f32 %v608, %v616
      %v625 = vsub.f32 %v609, %v617
      %v626 = vsub.f32 %v610, %v618
      %628 = vset.pattern.permute.xlu0 0
      %629 = vperm.xlu0 %628, %v568
      %v630 = vpop.permute.xlu0 %629
      %633 = vset.pattern.permute.xlu0 0
      %634 = vperm.xlu0 %633, %v569
      %v635 = vpop.permute.xlu0 %634
      %638 = vset.pattern.permute.xlu0 0
      %639 = vperm.xlu0 %638, %v570
      %v640 = vpop.permute.xlu0 %639
      %643 = vset.pattern.permute.xlu0 0
      %644 = vperm.xlu0 %643, %v571
      %v645 = vpop.permute.xlu0 %644
      %v647 = vlaneseq
      %v648 = vshrl.u32 %v647, 7
      %v649 = vsub.s32 1, %v648
      %v650 = vrot.slane %v623, %v649
      %v651 = vlaneseq
      %v652 = vshrl.u32 %v651, 7
      %v653 = vsub.s32 1, %v652
      %v654 = vrot.slane %v624, %v653
      %v655 = vlaneseq
      %v656 = vshrl.u32 %v655, 7
      %v657 = vsub.s32 1, %v656
      %v658 = vrot.slane %v625, %v657
      %v659 = vlaneseq
      %v660 = vshrl.u32 %v659, 7
      %v661 = vsub.s32 1, %v660
      %v662 = vrot.slane %v626, %v661
      %v663 = vmul.f32 %v630, %v650
      %v664 = vmul.f32 %v630, %v654
      %v665 = vmul.f32 %v630, %v658
      %v666 = vmul.f32 %v630, %v662
      %v667 = vmul.f32 %v635, %v650
      %v668 = vmul.f32 %v635, %v654
      %v669 = vmul.f32 %v635, %v658
      %v670 = vmul.f32 %v635, %v662
      %v671 = vmul.f32 %v640, %v650
      %v672 = vmul.f32 %v640, %v654
      %v673 = vmul.f32 %v640, %v658
      %v674 = vmul.f32 %v640, %v662
      %v675 = vmul.f32 %v645, %v650
      %v676 = vmul.f32 %v645, %v654
      %v677 = vmul.f32 %v645, %v658
      %v678 = vmul.f32 %v645, %v662
      %679 = vrot.lane.b32.xlu0 %v580, 1
      %v680 = vpop.permute.xlu0 %679
      %681 = vrot.lane.b32.xlu0 %v588, 1
      %v682 = vpop.permute.xlu0 %681
      %683 = vrot.lane.b32.xlu0 %v587, 1
      %v684 = vpop.permute.xlu0 %683
      %685 = vrot.lane.b32.xlu0 %v589, 1
      %v686 = vpop.permute.xlu0 %685
      %vm687 = vcmp.lt.s32.totalorder %v419, 1
      %v688 = vsel %vm687, %v684, %v686
      %v689 = vsel %vm687, %v682, %v684
      %v690 = vsel %vm687, %v680, %v682
      %v691 = vsel %vm687, %v686, %v680
      %v692 = vmul.f32 %v691, %v515
      %v693 = vmul.f32 %v690, %v516
      %v694 = vmul.f32 %v689, %v517
      %v695 = vmul.f32 %v688, %v518
      %v700 = vrot.slane %v692, 7
      %v701 = vrot.slane %v693, 7
      %v702 = vrot.slane %v694, 7
      %v703 = vrot.slane %v695, 7
      %v708 = vsub.f32 %v692, %v700
      %v709 = vsub.f32 %v693, %v701
      %v710 = vsub.f32 %v694, %v702
      %v711 = vsub.f32 %v695, %v703
      %712 = vset.pattern.permute.xlu0 1
      %713 = vperm.xlu0 %712, %v568
      %v714 = vpop.permute.xlu0 %713
      %716 = vset.pattern.permute.xlu0 1
      %717 = vperm.xlu0 %716, %v569
      %v718 = vpop.permute.xlu0 %717
      %720 = vset.pattern.permute.xlu0 1
      %721 = vperm.xlu0 %720, %v570
      %v722 = vpop.permute.xlu0 %721
      %724 = vset.pattern.permute.xlu0 1
      %725 = vperm.xlu0 %724, %v571
      %v726 = vpop.permute.xlu0 %725
      %v728 = vlaneseq
      %v729 = vshrl.u32 %v728, 7
      %v730 = vsub.s32 1, %v729
      %v731 = vrot.slane %v708, %v730
      %v732 = vlaneseq
      %v733 = vshrl.u32 %v732, 7
      %v734 = vsub.s32 1, %v733
      %v735 = vrot.slane %v709, %v734
      %v736 = vlaneseq
      %v737 = vshrl.u32 %v736, 7
      %v738 = vsub.s32 1, %v737
      %v739 = vrot.slane %v710, %v738
      %v740 = vlaneseq
      %v741 = vshrl.u32 %v740, 7
      %v742 = vsub.s32 1, %v741
      %v743 = vrot.slane %v711, %v742
      %v744 = vmul.f32 %v714, %v731
      %v745 = vmul.f32 %v714, %v735
      %v746 = vmul.f32 %v714, %v739
      %v747 = vmul.f32 %v714, %v743
      %v748 = vmul.f32 %v718, %v731
      %v749 = vmul.f32 %v718, %v735
      %v750 = vmul.f32 %v718, %v739
      %v751 = vmul.f32 %v718, %v743
      %v752 = vmul.f32 %v722, %v731
      %v753 = vmul.f32 %v722, %v735
      %v754 = vmul.f32 %v722, %v739
      %v755 = vmul.f32 %v722, %v743
      %v756 = vmul.f32 %v726, %v731
      %v757 = vmul.f32 %v726, %v735
      %v758 = vmul.f32 %v726, %v739
      %v759 = vmul.f32 %v726, %v743
      %v760 = vadd.f32 %v663, %v744
      %v761 = vadd.f32 %v664, %v745
      %v762 = vadd.f32 %v665, %v746
      %v763 = vadd.f32 %v666, %v747
      %v764 = vadd.f32 %v667, %v748
      %v765 = vadd.f32 %v668, %v749
      %v766 = vadd.f32 %v669, %v750
      %v767 = vadd.f32 %v670, %v751
      %v768 = vadd.f32 %v671, %v752
      %v769 = vadd.f32 %v672, %v753
      %v770 = vadd.f32 %v673, %v754
      %v771 = vadd.f32 %v674, %v755
      %v772 = vadd.f32 %v675, %v756
      %v773 = vadd.f32 %v676, %v757
      %v774 = vadd.f32 %v677, %v758
      %v775 = vadd.f32 %v678, %v759
      %v776 = vrot.slane %v567, 7
      %v778 = vsub.f32 %v567, %v776
      %779 = vset.pattern.permute.xlu0 2
      %780 = vperm.xlu0 %779, %v568
      %v781 = vpop.permute.xlu0 %780
      %783 = vset.pattern.permute.xlu0 2
      %784 = vperm.xlu0 %783, %v569
      %v785 = vpop.permute.xlu0 %784
      %787 = vset.pattern.permute.xlu0 2
      %788 = vperm.xlu0 %787, %v570
      %v789 = vpop.permute.xlu0 %788
      %791 = vset.pattern.permute.xlu0 2
      %792 = vperm.xlu0 %791, %v571
      %v793 = vpop.permute.xlu0 %792
      %v796 = vlaneseq
      %v797 = vshrl.u32 %v796, 7
      %v798 = vsub.s32 1, %v797
      %v799 = vrot.slane %v778, %v798
      %v800 = vlaneseq
      %v801 = vshrl.u32 %v800, 7
      %v802 = vsub.s32 3, %v801
      %v803 = vrot.slane %v778, %v802
      %v804 = vlaneseq
      %v805 = vshrl.u32 %v804, 7
      %v806 = vsub.s32 5, %v805
      %v807 = vrot.slane %v778, %v806
      %v808 = vlaneseq
      %v809 = vshrl.u32 %v808, 7
      %v810 = vsub.s32 7, %v809
      %v811 = vrot.slane %v778, %v810
      %v816 = vlaneseq
      %v817 = vshrl.u32 %v816, 7
      %v818 = vsub.s32 1, %v817
      %v819 = vrot.slane %v799, %v818
      %v820 = vlaneseq
      %v821 = vshrl.u32 %v820, 7
      %v822 = vsub.s32 1, %v821
      %v823 = vrot.slane %v803, %v822
      %v824 = vlaneseq
      %v825 = vshrl.u32 %v824, 7
      %v826 = vsub.s32 1, %v825
      %v827 = vrot.slane %v807, %v826
      %v828 = vlaneseq
      %v829 = vshrl.u32 %v828, 7
      %v830 = vsub.s32 1, %v829
      %v831 = vrot.slane %v811, %v830
      %v832 = vmul.f32 %v781, %v819
      %v833 = vmul.f32 %v781, %v823
      %v834 = vmul.f32 %v781, %v827
      %v835 = vmul.f32 %v781, %v831
      %v836 = vmul.f32 %v785, %v819
      %v837 = vmul.f32 %v785, %v823
      %v838 = vmul.f32 %v785, %v827
      %v839 = vmul.f32 %v785, %v831
      %v840 = vmul.f32 %v789, %v819
      %v841 = vmul.f32 %v789, %v823
      %v842 = vmul.f32 %v789, %v827
      %v843 = vmul.f32 %v789, %v831
      %v844 = vmul.f32 %v793, %v819
      %v845 = vmul.f32 %v793, %v823
      %v846 = vmul.f32 %v793, %v827
      %v847 = vmul.f32 %v793, %v831
      %v848 = vadd.f32 %v760, %v832
      %v849 = vadd.f32 %v761, %v833
      %v850 = vadd.f32 %v762, %v834
      %v851 = vadd.f32 %v763, %v835
      %v852 = vadd.f32 %v764, %v836
      %v853 = vadd.f32 %v765, %v837
      %v854 = vadd.f32 %v766, %v838
      %v855 = vadd.f32 %v767, %v839
      %v856 = vadd.f32 %v768, %v840
      %v857 = vadd.f32 %v769, %v841
      %v858 = vadd.f32 %v770, %v842
      %v859 = vadd.f32 %v771, %v843
      %v860 = vadd.f32 %v772, %v844
      %v861 = vadd.f32 %v773, %v845
      %v862 = vadd.f32 %v774, %v846
      %v863 = vadd.f32 %v775, %v847
      %864 = vrot.lane.b32.xlu0 %v580, 127
      %v865 = vpop.permute.xlu0 %864
      %866 = vrot.lane.b32.xlu0 %v588, 127
      %v867 = vpop.permute.xlu0 %866
      %868 = vrot.lane.b32.xlu0 %v587, 127
      %v869 = vpop.permute.xlu0 %868
      %870 = vrot.lane.b32.xlu0 %v589, 127
      %v871 = vpop.permute.xlu0 %870
      %vm872 = vcmp.lt.s32.totalorder %v419, 127
      %v873 = vsel %vm872, %v869, %v871
      %v874 = vsel %vm872, %v867, %v869
      %v875 = vsel %vm872, %v865, %v867
      %v876 = vsel %vm872, %v871, %v865
      %v877 = vmul.f32 %v875, %v539
      %v878 = vmul.f32 %v874, %v540
      %v879 = vmul.f32 %v873, %v541
      %v880 = vmul.f32 %v876, %v542
      %v885 = vrot.slane %v877, 7
      %v886 = vrot.slane %v878, 7
      %v887 = vrot.slane %v879, 7
      %v888 = vrot.slane %v880, 7
      %v893 = vsub.f32 %v877, %v885
      %v894 = vsub.f32 %v878, %v886
      %v895 = vsub.f32 %v879, %v887
      %v896 = vsub.f32 %v880, %v888
      %897 = vset.pattern.permute.xlu0 3
      %898 = vperm.xlu0 %897, %v568
      %v899 = vpop.permute.xlu0 %898
      %901 = vset.pattern.permute.xlu0 3
      %902 = vperm.xlu0 %901, %v569
      %v903 = vpop.permute.xlu0 %902
      %905 = vset.pattern.permute.xlu0 3
      %906 = vperm.xlu0 %905, %v570
      %v907 = vpop.permute.xlu0 %906
      %909 = vset.pattern.permute.xlu0 3
      %910 = vperm.xlu0 %909, %v571
      %v911 = vpop.permute.xlu0 %910
      %v913 = vlaneseq
      %v914 = vshrl.u32 %v913, 7
      %v915 = vsub.s32 1, %v914
      %v916 = vrot.slane %v893, %v915
      %v917 = vlaneseq
      %v918 = vshrl.u32 %v917, 7
      %v919 = vsub.s32 1, %v918
      %v920 = vrot.slane %v894, %v919
      %v921 = vlaneseq
      %v922 = vshrl.u32 %v921, 7
      %v923 = vsub.s32 1, %v922
      %v924 = vrot.slane %v895, %v923
      %v925 = vlaneseq
      %v926 = vshrl.u32 %v925, 7
      %v927 = vsub.s32 1, %v926
      %v928 = vrot.slane %v896, %v927
      %v929 = vmul.f32 %v899, %v916
      %v930 = vmul.f32 %v899, %v920
      %v931 = vmul.f32 %v899, %v924
      %v932 = vmul.f32 %v899, %v928
      %v933 = vmul.f32 %v903, %v916
      %v934 = vmul.f32 %v903, %v920
      %v935 = vmul.f32 %v903, %v924
      %v936 = vmul.f32 %v903, %v928
      %v937 = vmul.f32 %v907, %v916
      %v938 = vmul.f32 %v907, %v920
      %v939 = vmul.f32 %v907, %v924
      %v940 = vmul.f32 %v907, %v928
      %v941 = vmul.f32 %v911, %v916
      %v942 = vmul.f32 %v911, %v920
      %v943 = vmul.f32 %v911, %v924
      %v944 = vmul.f32 %v911, %v928
      %v945 = vadd.f32 %v848, %v929
      %v946 = vadd.f32 %v849, %v930
      %v947 = vadd.f32 %v850, %v931
      %v948 = vadd.f32 %v851, %v932
      %v949 = vadd.f32 %v852, %v933
      %v950 = vadd.f32 %v853, %v934
      %v951 = vadd.f32 %v854, %v935
      %v952 = vadd.f32 %v855, %v936
      %v953 = vadd.f32 %v856, %v937
      %v954 = vadd.f32 %v857, %v938
      %v955 = vadd.f32 %v858, %v939
      %v956 = vadd.f32 %v859, %v940
      %v957 = vadd.f32 %v860, %v941
      %v958 = vadd.f32 %v861, %v942
      %v959 = vadd.f32 %v862, %v943
      %v960 = vadd.f32 %v863, %v944
      %961 = vrot.lane.b32.xlu0 %v580, 126
      %v962 = vpop.permute.xlu0 %961
      %963 = vrot.lane.b32.xlu0 %v588, 126
      %v964 = vpop.permute.xlu0 %963
      %965 = vrot.lane.b32.xlu0 %v587, 126
      %v966 = vpop.permute.xlu0 %965
      %967 = vrot.lane.b32.xlu0 %v589, 126
      %v968 = vpop.permute.xlu0 %967
      %vm969 = vcmp.lt.s32.totalorder %v419, 126
      %v970 = vsel %vm969, %v966, %v968
      %v971 = vsel %vm969, %v964, %v966
      %v972 = vsel %vm969, %v962, %v964
      %v973 = vsel %vm969, %v968, %v962
      %v974 = vmul.f32 %v972, %v563
      %v975 = vmul.f32 %v971, %v564
      %v976 = vmul.f32 %v970, %v565
      %v977 = vmul.f32 %v973, %v566
      %v982 = vrot.slane %v974, 7
      %v983 = vrot.slane %v975, 7
      %v984 = vrot.slane %v976, 7
      %v985 = vrot.slane %v977, 7
      %v990 = vsub.f32 %v974, %v982
      %v991 = vsub.f32 %v975, %v983
      %v992 = vsub.f32 %v976, %v984
      %v993 = vsub.f32 %v977, %v985
      %994 = vset.pattern.permute.xlu0 4
      %995 = vperm.xlu0 %994, %v568
      %v996 = vpop.permute.xlu0 %995
      %998 = vset.pattern.permute.xlu0 4
      %999 = vperm.xlu0 %998, %v569
      %v1000 = vpop.permute.xlu0 %999
      %1002 = vset.pattern.permute.xlu0 4
      %1003 = vperm.xlu0 %1002, %v570
      %v1004 = vpop.permute.xlu0 %1003
      %1006 = vset.pattern.permute.xlu0 4
      %1007 = vperm.xlu0 %1006, %v571
      %v1008 = vpop.permute.xlu0 %1007
      %v1010 = vlaneseq
      %v1011 = vshrl.u32 %v1010, 7
      %v1012 = vsub.s32 1, %v1011
      %v1013 = vrot.slane %v990, %v1012
      %v1014 = vlaneseq
      %v1015 = vshrl.u32 %v1014, 7
      %v1016 = vsub.s32 1, %v1015
      %v1017 = vrot.slane %v991, %v1016
      %v1018 = vlaneseq
      %v1019 = vshrl.u32 %v1018, 7
      %v1020 = vsub.s32 1, %v1019
      %v1021 = vrot.slane %v992, %v1020
      %v1022 = vlaneseq
      %v1023 = vshrl.u32 %v1022, 7
      %v1024 = vsub.s32 1, %v1023
      %v1025 = vrot.slane %v993, %v1024
      %v1026 = vmul.f32 %v996, %v1013
      %v1027 = vmul.f32 %v996, %v1017
      %v1028 = vmul.f32 %v996, %v1021
      %v1029 = vmul.f32 %v996, %v1025
      %v1030 = vmul.f32 %v1000, %v1013
      %v1031 = vmul.f32 %v1000, %v1017
      %v1032 = vmul.f32 %v1000, %v1021
      %v1033 = vmul.f32 %v1000, %v1025
      %v1034 = vmul.f32 %v1004, %v1013
      %v1035 = vmul.f32 %v1004, %v1017
      %v1036 = vmul.f32 %v1004, %v1021
      %v1037 = vmul.f32 %v1004, %v1025
      %v1038 = vmul.f32 %v1008, %v1013
      %v1039 = vmul.f32 %v1008, %v1017
      %v1040 = vmul.f32 %v1008, %v1021
      %v1041 = vmul.f32 %v1008, %v1025
      %v1042 = vadd.f32 %v945, %v1026
      %v1043 = vadd.f32 %v946, %v1027
      %v1044 = vadd.f32 %v947, %v1028
      %v1045 = vadd.f32 %v948, %v1029
      %v1046 = vadd.f32 %v949, %v1030
      %v1047 = vadd.f32 %v950, %v1031
      %v1048 = vadd.f32 %v951, %v1032
      %v1049 = vadd.f32 %v952, %v1033
      %v1050 = vadd.f32 %v953, %v1034
      %v1051 = vadd.f32 %v954, %v1035
      %v1052 = vadd.f32 %v955, %v1036
      %v1053 = vadd.f32 %v956, %v1037
      %v1054 = vadd.f32 %v957, %v1038
      %v1055 = vadd.f32 %v958, %v1039
      %v1056 = vadd.f32 %v959, %v1040
      %v1057 = vadd.f32 %v960, %v1041
      %v1058 = vld [vmem:[%s2] sm:$0xff]
      %v1059 = vld [vmem:[%s2 + $0x8] sm:$0xff]
      %v1060 = vld [vmem:[%s2 + $0x10] sm:$0xff]
      %v1061 = vld [vmem:[%s2 + $0x18] sm:$0xff]
      %1063 = vset.pattern.permute.xlu0 0
      %1064 = vperm.xlu0 %1063, %v1058
      %v1065 = vpop.permute.xlu0 %1064
      %1068 = vset.pattern.permute.xlu0 0
      %1069 = vperm.xlu0 %1068, %v1059
      %v1070 = vpop.permute.xlu0 %1069
      %1073 = vset.pattern.permute.xlu0 0
      %1074 = vperm.xlu0 %1073, %v1060
      %v1075 = vpop.permute.xlu0 %1074
      %1078 = vset.pattern.permute.xlu0 0
      %1079 = vperm.xlu0 %1078, %v1061
      %v1080 = vpop.permute.xlu0 %1079
      %v1082 = vadd.f32 %v1042, %v1065
      %v1083 = vadd.f32 %v1043, %v1065
      %v1084 = vadd.f32 %v1044, %v1065
      %v1085 = vadd.f32 %v1045, %v1065
      %v1086 = vadd.f32 %v1046, %v1070
      %v1087 = vadd.f32 %v1047, %v1070
      %v1088 = vadd.f32 %v1048, %v1070
      %v1089 = vadd.f32 %v1049, %v1070
      %v1090 = vadd.f32 %v1050, %v1075
      %v1091 = vadd.f32 %v1051, %v1075
      %v1092 = vadd.f32 %v1052, %v1075
      %v1093 = vadd.f32 %v1053, %v1075
      %v1094 = vadd.f32 %v1054, %v1080
      %v1095 = vadd.f32 %v1055, %v1080
      %v1096 = vadd.f32 %v1056, %v1080
      %v1097 = vadd.f32 %v1057, %v1080
      %v1098 = vrot.slane %v692, 6
      %v1099 = vrot.slane %v693, 6
      %v1100 = vrot.slane %v694, 6
      %v1101 = vrot.slane %v695, 6
      %v1106 = vcombine.low %v580, %v580
      %v1107 = vcombine.low %v587, %v587
      %v1110 = vrot.slane %v877, 2
      %v1111 = vrot.slane %v878, 2
      %v1112 = vrot.slane %v879, 2
      %v1113 = vrot.slane %v880, 2
      %vm1118 = vcmask 1041408
      %v1119 = vsel %vm1118, %v607, %v1098
      %v1120 = vsel %vm1118, %v608, %v1099
      %v1121 = vsel %vm1118, %v609, %v1100
      %v1122 = vsel %vm1118, %v610, %v1101
      %vm1123 = vcmask 1043456
      %v1124 = vsel %vm1123, %v1119, %v1106
      %v1125 = vsel %vm1123, %v1120, %v580
      %v1126 = vsel %vm1123, %v1121, %v1107
      %v1127 = vsel %vm1123, %v1122, %v587
      %vm1128 = vcmask 1045504
      %v1129 = vsel %vm1128, %v1124, %v1110
      %v1130 = vsel %vm1128, %v1125, %v1111
      %v1131 = vsel %vm1128, %v1126, %v1112
      %v1132 = vsel %vm1128, %v1127, %v1113
      %v1133 = vpack.c.bf16 %v974, %v1129
      %v1134 = vpack.c.bf16 %v975, %v1130
      %v1135 = vpack.c.bf16 %v976, %v1131
      %v1136 = vpack.c.bf16 %v977, %v1132
      loop: start=0, step=1, limit=4
      $region69: #{generator_forward.1} parent=67 // loop_pre_header
        _
      $region70: #{generator_forward.1} parent=67 // loop_header
        %s1138 = sphi 0, %s1142
        %p1139 = scmp.ge.s32.totalorder %s1138, 4
        %v1143 = vphi %v1082, %v3929
        %v1144 = vphi %v1083, %v3930
        %v1145 = vphi %v1084, %v3931
        %v1146 = vphi %v1085, %v3932
        %v1147 = vphi %v1086, %v3933
        %v1148 = vphi %v1087, %v3934
        %v1149 = vphi %v1088, %v3935
        %v1150 = vphi %v1089, %v3936
        %v1151 = vphi %v1090, %v3937
        %v1152 = vphi %v1091, %v3938
        %v1153 = vphi %v1092, %v3939
        %v1154 = vphi %v1093, %v3940
        %v1155 = vphi %v1094, %v3941
        %v1156 = vphi %v1095, %v3942
        %v1157 = vphi %v1096, %v3943
        %v1158 = vphi %v1097, %v3944
      $region71: #{generator_forward.1} parent=67 // loop_header_branch
        %1141 = sbr.rel (%p1139) target = $region75
      $region72: #{generator_forward.1} parent=67 // loop_body
        %s1159 = smul.u32 %s1138, 4
        %s1160 = smul.addr %s1159, 4
        %s1161 = scalar_lea.vmem %s3, %s1160
        %v1162 = vld [vmem:[%s1161] sm:$0xf]
        %v1163 = vld [vmem:[%s1161 + $0x4] sm:$0xf]
        %v1164 = vld [vmem:[%s1161 + $0x8] sm:$0xf]
        %v1165 = vld [vmem:[%s1161 + $0xc] sm:$0xf]
        %s1166 = smul.u32 %s1138, 3
        %s1167 = smul.u32 %s1166, 4
        %s1168 = smul.addr %s1167, 4
        %s1169 = scalar_lea.vmem %s4, %s1168
        %v1170 = vld [vmem:[%s1169] sm:$0xf]
        %v1171 = vld [vmem:[%s1169 + $0x4] sm:$0xf]
        %v1172 = vld [vmem:[%s1169 + $0x8] sm:$0xf]
        %v1173 = vld [vmem:[%s1169 + $0xc] sm:$0xf]
        %1174 = vrot.lane.b32.xlu0 %v1143, 1
        %v1175 = vpop.permute.xlu0 %1174
        %1176 = vrot.lane.b32.xlu0 %v1147, 1
        %v1177 = vpop.permute.xlu0 %1176
        %1178 = vrot.lane.b32.xlu0 %v1151, 1
        %v1179 = vpop.permute.xlu0 %1178
        %1180 = vrot.lane.b32.xlu0 %v1155, 1
        %v1181 = vpop.permute.xlu0 %1180
        %1182 = vrot.lane.b32.xlu0 %v1144, 1
        %v1183 = vpop.permute.xlu0 %1182
        %1184 = vrot.lane.b32.xlu0 %v1148, 1
        %v1185 = vpop.permute.xlu0 %1184
        %1186 = vrot.lane.b32.xlu0 %v1152, 1
        %v1187 = vpop.permute.xlu0 %1186
        %1188 = vrot.lane.b32.xlu0 %v1156, 1
        %v1189 = vpop.permute.xlu0 %1188
        %1190 = vrot.lane.b32.xlu0 %v1145, 1
        %v1191 = vpop.permute.xlu0 %1190
        %1192 = vrot.lane.b32.xlu0 %v1149, 1
        %v1193 = vpop.permute.xlu0 %1192
        %1194 = vrot.lane.b32.xlu0 %v1153, 1
        %v1195 = vpop.permute.xlu0 %1194
        %1196 = vrot.lane.b32.xlu0 %v1157, 1
        %v1197 = vpop.permute.xlu0 %1196
        %1198 = vrot.lane.b32.xlu0 %v1146, 1
        %v1199 = vpop.permute.xlu0 %1198
        %1200 = vrot.lane.b32.xlu0 %v1150, 1
        %v1201 = vpop.permute.xlu0 %1200
        %1202 = vrot.lane.b32.xlu0 %v1154, 1
        %v1203 = vpop.permute.xlu0 %1202
        %1204 = vrot.lane.b32.xlu0 %v1158, 1
        %v1205 = vpop.permute.xlu0 %1204
        %v1206 = vsel %vm687, %v1191, %v1199
        %v1207 = vsel %vm687, %v1193, %v1201
        %v1208 = vsel %vm687, %v1195, %v1203
        %v1209 = vsel %vm687, %v1197, %v1205
        %v1210 = vsel %vm687, %v1183, %v1191
        %v1211 = vsel %vm687, %v1185, %v1193
        %v1212 = vsel %vm687, %v1187, %v1195
        %v1213 = vsel %vm687, %v1189, %v1197
        %v1214 = vsel %vm687, %v1175, %v1183
        %v1215 = vsel %vm687, %v1177, %v1185
        %v1216 = vsel %vm687, %v1179, %v1187
        %v1217 = vsel %vm687, %v1181, %v1189
        %v1218 = vsel %vm687, %v1199, %v1175
        %v1219 = vsel %vm687, %v1201, %v1177
        %v1220 = vsel %vm687, %v1203, %v1179
        %v1221 = vsel %vm687, %v1205, %v1181
        %v1222 = vmul.f32 %v1218, %v515
        %v1223 = vmul.f32 %v1214, %v516
        %v1224 = vmul.f32 %v1210, %v517
        %v1225 = vmul.f32 %v1206, %v518
        %v1226 = vmul.f32 %v1219, %v515
        %v1227 = vmul.f32 %v1215, %v516
        %v1228 = vmul.f32 %v1211, %v517
        %v1229 = vmul.f32 %v1207, %v518
        %v1230 = vmul.f32 %v1220, %v515
        %v1231 = vmul.f32 %v1216, %v516
        %v1232 = vmul.f32 %v1212, %v517
        %v1233 = vmul.f32 %v1208, %v518
        %v1234 = vmul.f32 %v1221, %v515
        %v1235 = vmul.f32 %v1217, %v516
        %v1236 = vmul.f32 %v1213, %v517
        %v1237 = vmul.f32 %v1209, %v518
        %v1238 = vpack.c.bf16 %v1226, %v1222
        %v1239 = vpack.c.bf16 %v1227, %v1223
        %v1240 = vpack.c.bf16 %v1228, %v1224
        %v1241 = vpack.c.bf16 %v1229, %v1225
        %v1242 = vpack.c.bf16 %v1234, %v1230
        %v1243 = vpack.c.bf16 %v1235, %v1231
        %v1244 = vpack.c.bf16 %v1236, %v1232
        %v1245 = vpack.c.bf16 %v1237, %v1233
        %v1250 = vunpack.c.l.b16 %v1170
        %v1251 = vunpack.c.l.b16 %v1171
        %v1252 = vunpack.c.l.b16 %v1172
        %v1253 = vunpack.c.l.b16 %v1173
        %v1254 = vpack.c.b16 %v1251, %v1250
        %v1255 = vpack.c.b16 %v1253, %v1252
        %vm1256 = vcmask 261120
        %v1258 = vsel %vm1256, %v1254, 0
        %v1261 = vsel %vm1256, %v1255, 0
        %1263 = vmatprep.subr.bf16.mxu0 0
        %1264 = vmatpush1.bf16.msra.mxu0 0
        %1265 = vmatprep.subr.bf16.mxu0 0
        %1266 = vmatpush1.bf16.msra.mxu0 0
        %1267 = vmatprep.subr.bf16.mxu0 0
        %1268 = vmatpush1.bf16.msra.mxu0 0
        %1269 = vmatprep.subr.bf16.mxu0 0
        %1270 = vmatpush1.bf16.msra.mxu0 0
        %1271 = vmatprep.subr.bf16.mxu0 0
        %1272 = vmatpush1.bf16.msra.mxu0 0
        %1273 = vmatprep.subr.bf16.mxu0 0
        %1274 = vmatpush1.bf16.msra.mxu0 0
        %1275 = vmatprep.subr.bf16.mxu0 %v1243
        %1276 = vmatpush1.bf16.msra.mxu0 %v1242
        %1277 = vmatprep.subr.bf16.mxu0 %v1239
        %1278 = vmatpush1.bf16.msra.mxu0 %v1238
        %1279 = vmatprep.subr.bf16.mxu0 0
        %1280 = vmatpush2.bf16.msra.mxu0 0
        %1281 = vmatprep.subr.bf16.mxu0 0
        %1282 = vmatpush2.bf16.msra.mxu0 0
        %1283 = vmatprep.subr.bf16.mxu0 0
        %1284 = vmatpush2.bf16.msra.mxu0 0
        %1285 = vmatprep.subr.bf16.mxu0 0
        %1286 = vmatpush2.bf16.msra.mxu0 0
        %1287 = vmatprep.subr.bf16.mxu0 0
        %1288 = vmatpush2.bf16.msra.mxu0 0
        %1289 = vmatprep.subr.bf16.mxu0 0
        %1290 = vmatpush2.bf16.msra.mxu0 0
        %1291 = vmatprep.subr.bf16.mxu0 0
        %1292 = vmatpush2.bf16.msra.mxu0 0
        %1293 = vmatprep.subr.bf16.mxu0 0
        %1294 = vmatpush2.bf16.msra.mxu0 0
        %1295 = vmatprep.mubr.bf16.mxu0 0
        %1296 = vmatmul.mubr.bf16.gmra.mxu0 %v1258
        %v1297 = vpop.f32.mrf.mxu0
        %v1298 = vadd.f32 0.0, %v1297
        %v1299 = vpop.f32.mrf.mxu0
        %v1300 = vadd.f32 0.0, %v1299
        %v1301 = vpop.f32.mrf.mxu0
        %v1302 = vadd.f32 0.0, %v1301
        %v1303 = vpop.f32.mrf.mxu0
        %v1304 = vadd.f32 0.0, %v1303
        %1305 = vmatprep.mubr.bf16.mxu0 0
        %1306 = vmatmul.mubr.bf16.gmra.mxu0 %v1261
        %v1307 = vpop.f32.mrf.mxu0
        %v1308 = vadd.f32 0.0, %v1307
        %v1309 = vpop.f32.mrf.mxu0
        %v1310 = vadd.f32 0.0, %v1309
        %v1311 = vpop.f32.mrf.mxu0
        %v1312 = vadd.f32 0.0, %v1311
        %v1313 = vpop.f32.mrf.mxu0
        %v1314 = vadd.f32 0.0, %v1313
        %1315 = vdwg.mxu0
        %1316 = vmatprep.subr.bf16.mxu0 0
        %1317 = vmatpush1.bf16.msra.mxu0 0
        %1318 = vmatprep.subr.bf16.mxu0 0
        %1319 = vmatpush1.bf16.msra.mxu0 0
        %1320 = vmatprep.subr.bf16.mxu0 0
        %1321 = vmatpush1.bf16.msra.mxu0 0
        %1322 = vmatprep.subr.bf16.mxu0 0
        %1323 = vmatpush1.bf16.msra.mxu0 0
        %1324 = vmatprep.subr.bf16.mxu0 0
        %1325 = vmatpush1.bf16.msra.mxu0 0
        %1326 = vmatprep.subr.bf16.mxu0 0
        %1327 = vmatpush1.bf16.msra.mxu0 0
        %1328 = vmatprep.subr.bf16.mxu0 %v1245
        %1329 = vmatpush1.bf16.msra.mxu0 %v1244
        %1330 = vmatprep.subr.bf16.mxu0 %v1241
        %1331 = vmatpush1.bf16.msra.mxu0 %v1240
        %1332 = vmatprep.subr.bf16.mxu0 0
        %1333 = vmatpush2.bf16.msra.mxu0 0
        %1334 = vmatprep.subr.bf16.mxu0 0
        %1335 = vmatpush2.bf16.msra.mxu0 0
        %1336 = vmatprep.subr.bf16.mxu0 0
        %1337 = vmatpush2.bf16.msra.mxu0 0
        %1338 = vmatprep.subr.bf16.mxu0 0
        %1339 = vmatpush2.bf16.msra.mxu0 0
        %1340 = vmatprep.subr.bf16.mxu0 0
        %1341 = vmatpush2.bf16.msra.mxu0 0
        %1342 = vmatprep.subr.bf16.mxu0 0
        %1343 = vmatpush2.bf16.msra.mxu0 0
        %1344 = vmatprep.subr.bf16.mxu0 0
        %1345 = vmatpush2.bf16.msra.mxu0 0
        %1346 = vmatprep.subr.bf16.mxu0 0
        %1347 = vmatpush2.bf16.msra.mxu0 0
        %1348 = vmatprep.mubr.bf16.mxu0 0
        %1349 = vmatmul.mubr.bf16.gmra.mxu0 %v1258
        %v1350 = vpop.f32.mrf.mxu0
        %v1351 = vadd.f32 0.0, %v1350
        %v1352 = vpop.f32.mrf.mxu0
        %v1353 = vadd.f32 0.0, %v1352
        %v1354 = vpop.f32.mrf.mxu0
        %v1355 = vadd.f32 0.0, %v1354
        %v1356 = vpop.f32.mrf.mxu0
        %v1357 = vadd.f32 0.0, %v1356
        %1358 = vmatprep.mubr.bf16.mxu0 0
        %1359 = vmatmul.mubr.bf16.gmra.mxu0 %v1261
        %v1360 = vpop.f32.mrf.mxu0
        %v1361 = vadd.f32 0.0, %v1360
        %v1362 = vpop.f32.mrf.mxu0
        %v1363 = vadd.f32 0.0, %v1362
        %v1364 = vpop.f32.mrf.mxu0
        %v1365 = vadd.f32 0.0, %v1364
        %v1366 = vpop.f32.mrf.mxu0
        %v1367 = vadd.f32 0.0, %v1366
        %1368 = vdwg.mxu0
        %v1373 = vunpack.c.l.b16 %v1162
        %v1374 = vunpack.c.l.b16 %v1163
        %v1375 = vunpack.c.l.b16 %v1164
        %v1376 = vunpack.c.l.b16 %v1165
        %v1377 = vpack.c.b16 %v1374, %v1373
        %v1378 = vpack.c.b16 %v1376, %v1375
        %vm1379 = vcmask 80896
        %v1381 = vsel %vm1379, %v1377, 0
        %v1384 = vsel %vm1379, %v1378, 0
        %vm1386 = vcmask 1044480
        %v1388 = vsel %vm1386, %v1133, 0
        %v1391 = vsel %vm1386, %v1134, 0
        %v1394 = vsel %vm1386, %v1135, 0
        %v1397 = vsel %vm1386, %v1136, 0
        %1399 = vmatprep.subr.bf16.mxu0 0
        %1400 = vmatpush1.bf16.msra.mxu0 0
        %1401 = vmatprep.subr.bf16.mxu0 0
        %1402 = vmatpush1.bf16.msra.mxu0 0
        %1403 = vmatprep.subr.bf16.mxu0 0
        %1404 = vmatpush1.bf16.msra.mxu0 0
        %1405 = vmatprep.subr.bf16.mxu0 0
        %1406 = vmatpush1.bf16.msra.mxu0 0
        %1407 = vmatprep.subr.bf16.mxu0 0
        %1408 = vmatpush1.bf16.msra.mxu0 0
        %1409 = vmatprep.subr.bf16.mxu0 0
        %1410 = vmatpush1.bf16.msra.mxu0 0
        %1411 = vmatprep.subr.bf16.mxu0 0
        %1412 = vmatpush1.bf16.msra.mxu0 0
        %1413 = vmatprep.subr.bf16.mxu0 %v1391
        %1414 = vmatpush1.bf16.msra.mxu0 %v1388
        %1415 = vmatprep.subr.bf16.mxu0 0
        %1416 = vmatpush2.bf16.msra.mxu0 0
        %1417 = vmatprep.subr.bf16.mxu0 0
        %1418 = vmatpush2.bf16.msra.mxu0 0
        %1419 = vmatprep.subr.bf16.mxu0 0
        %1420 = vmatpush2.bf16.msra.mxu0 0
        %1421 = vmatprep.subr.bf16.mxu0 0
        %1422 = vmatpush2.bf16.msra.mxu0 0
        %1423 = vmatprep.subr.bf16.mxu0 0
        %1424 = vmatpush2.bf16.msra.mxu0 0
        %1425 = vmatprep.subr.bf16.mxu0 0
        %1426 = vmatpush2.bf16.msra.mxu0 0
        %1427 = vmatprep.subr.bf16.mxu0 0
        %1428 = vmatpush2.bf16.msra.mxu0 0
        %1429 = vmatprep.subr.bf16.mxu0 0
        %1430 = vmatpush2.bf16.msra.mxu0 0
        %1431 = vmatprep.mubr.bf16.mxu0 0
        %1432 = vmatmul.mubr.bf16.gmra.mxu0 %v1381
        %v1433 = vpop.f32.mrf.mxu0
        %v1434 = vadd.f32 %v1298, %v1433
        %v1435 = vpop.f32.mrf.mxu0
        %v1436 = vadd.f32 %v1300, %v1435
        %v1437 = vpop.f32.mrf.mxu0
        %v1438 = vadd.f32 %v1302, %v1437
        %v1439 = vpop.f32.mrf.mxu0
        %v1440 = vadd.f32 %v1304, %v1439
        %1441 = vmatprep.mubr.bf16.mxu0 0
        %1442 = vmatmul.mubr.bf16.gmra.mxu0 %v1384
        %v1443 = vpop.f32.mrf.mxu0
        %v1444 = vadd.f32 %v1308, %v1443
        %v1445 = vpop.f32.mrf.mxu0
        %v1446 = vadd.f32 %v1310, %v1445
        %v1447 = vpop.f32.mrf.mxu0
        %v1448 = vadd.f32 %v1312, %v1447
        %v1449 = vpop.f32.mrf.mxu0
        %v1450 = vadd.f32 %v1314, %v1449
        %1451 = vdwg.mxu0
        %1452 = vmatprep.subr.bf16.mxu0 0
        %1453 = vmatpush1.bf16.msra.mxu0 0
        %1454 = vmatprep.subr.bf16.mxu0 0
        %1455 = vmatpush1.bf16.msra.mxu0 0
        %1456 = vmatprep.subr.bf16.mxu0 0
        %1457 = vmatpush1.bf16.msra.mxu0 0
        %1458 = vmatprep.subr.bf16.mxu0 0
        %1459 = vmatpush1.bf16.msra.mxu0 0
        %1460 = vmatprep.subr.bf16.mxu0 0
        %1461 = vmatpush1.bf16.msra.mxu0 0
        %1462 = vmatprep.subr.bf16.mxu0 0
        %1463 = vmatpush1.bf16.msra.mxu0 0
        %1464 = vmatprep.subr.bf16.mxu0 0
        %1465 = vmatpush1.bf16.msra.mxu0 0
        %1466 = vmatprep.subr.bf16.mxu0 %v1397
        %1467 = vmatpush1.bf16.msra.mxu0 %v1394
        %1468 = vmatprep.subr.bf16.mxu0 0
        %1469 = vmatpush2.bf16.msra.mxu0 0
        %1470 = vmatprep.subr.bf16.mxu0 0
        %1471 = vmatpush2.bf16.msra.mxu0 0
        %1472 = vmatprep.subr.bf16.mxu0 0
        %1473 = vmatpush2.bf16.msra.mxu0 0
        %1474 = vmatprep.subr.bf16.mxu0 0
        %1475 = vmatpush2.bf16.msra.mxu0 0
        %1476 = vmatprep.subr.bf16.mxu0 0
        %1477 = vmatpush2.bf16.msra.mxu0 0
        %1478 = vmatprep.subr.bf16.mxu0 0
        %1479 = vmatpush2.bf16.msra.mxu0 0
        %1480 = vmatprep.subr.bf16.mxu0 0
        %1481 = vmatpush2.bf16.msra.mxu0 0
        %1482 = vmatprep.subr.bf16.mxu0 0
        %1483 = vmatpush2.bf16.msra.mxu0 0
        %1484 = vmatprep.mubr.bf16.mxu0 0
        %1485 = vmatmul.mubr.bf16.gmra.mxu0 %v1381
        %v1486 = vpop.f32.mrf.mxu0
        %v1487 = vadd.f32 %v1351, %v1486
        %v1488 = vpop.f32.mrf.mxu0
        %v1489 = vadd.f32 %v1353, %v1488
        %v1490 = vpop.f32.mrf.mxu0
        %v1491 = vadd.f32 %v1355, %v1490
        %v1492 = vpop.f32.mrf.mxu0
        %v1493 = vadd.f32 %v1357, %v1492
        %1494 = vmatprep.mubr.bf16.mxu0 0
        %1495 = vmatmul.mubr.bf16.gmra.mxu0 %v1384
        %v1496 = vpop.f32.mrf.mxu0
        %v1497 = vadd.f32 %v1361, %v1496
        %v1498 = vpop.f32.mrf.mxu0
        %v1499 = vadd.f32 %v1363, %v1498
        %v1500 = vpop.f32.mrf.mxu0
        %v1501 = vadd.f32 %v1365, %v1500
        %v1502 = vpop.f32.mrf.mxu0
        %v1503 = vadd.f32 %v1367, %v1502
        %1504 = vdwg.mxu0
        %s1505 = sadd.s32 %s1166, 1
        %s1506 = smul.u32 %s1505, 4
        %s1507 = smul.addr %s1506, 4
        %s1508 = scalar_lea.vmem %s4, %s1507
        %v1509 = vld [vmem:[%s1508] sm:$0xf]
        %v1510 = vld [vmem:[%s1508 + $0x4] sm:$0xf]
        %v1511 = vld [vmem:[%s1508 + $0x8] sm:$0xf]
        %v1512 = vld [vmem:[%s1508 + $0xc] sm:$0xf]
        %v1513 = vpack.c.bf16 %v1147, %v1143
        %v1514 = vpack.c.bf16 %v1148, %v1144
        %v1515 = vpack.c.bf16 %v1149, %v1145
        %v1516 = vpack.c.bf16 %v1150, %v1146
        %v1517 = vpack.c.bf16 %v1155, %v1151
        %v1518 = vpack.c.bf16 %v1156, %v1152
        %v1519 = vpack.c.bf16 %v1157, %v1153
        %v1520 = vpack.c.bf16 %v1158, %v1154
        %v1525 = vunpack.c.l.b16 %v1509
        %v1526 = vunpack.c.l.b16 %v1510
        %v1527 = vunpack.c.l.b16 %v1511
        %v1528 = vunpack.c.l.b16 %v1512
        %v1529 = vpack.c.b16 %v1526, %v1525
        %v1530 = vpack.c.b16 %v1528, %v1527
        %v1532 = vsel %vm1256, %v1529, 0
        %v1535 = vsel %vm1256, %v1530, 0
        %1537 = vmatprep.subr.bf16.mxu0 0
        %1538 = vmatpush1.bf16.msra.mxu0 0
        %1539 = vmatprep.subr.bf16.mxu0 0
        %1540 = vmatpush1.bf16.msra.mxu0 0
        %1541 = vmatprep.subr.bf16.mxu0 0
        %1542 = vmatpush1.bf16.msra.mxu0 0
        %1543 = vmatprep.subr.bf16.mxu0 0
        %1544 = vmatpush1.bf16.msra.mxu0 0
        %1545 = vmatprep.subr.bf16.mxu0 0
        %1546 = vmatpush1.bf16.msra.mxu0 0
        %1547 = vmatprep.subr.bf16.mxu0 0
        %1548 = vmatpush1.bf16.msra.mxu0 0
        %1549 = vmatprep.subr.bf16.mxu0 %v1518
        %1550 = vmatpush1.bf16.msra.mxu0 %v1517
        %1551 = vmatprep.subr.bf16.mxu0 %v1514
        %1552 = vmatpush1.bf16.msra.mxu0 %v1513
        %1553 = vmatprep.subr.bf16.mxu0 0
        %1554 = vmatpush2.bf16.msra.mxu0 0
        %1555 = vmatprep.subr.bf16.mxu0 0
        %1556 = vmatpush2.bf16.msra.mxu0 0
        %1557 = vmatprep.subr.bf16.mxu0 0
        %1558 = vmatpush2.bf16.msra.mxu0 0
        %1559 = vmatprep.subr.bf16.mxu0 0
        %1560 = vmatpush2.bf16.msra.mxu0 0
        %1561 = vmatprep.subr.bf16.mxu0 0
        %1562 = vmatpush2.bf16.msra.mxu0 0
        %1563 = vmatprep.subr.bf16.mxu0 0
        %1564 = vmatpush2.bf16.msra.mxu0 0
        %1565 = vmatprep.subr.bf16.mxu0 0
        %1566 = vmatpush2.bf16.msra.mxu0 0
        %1567 = vmatprep.subr.bf16.mxu0 0
        %1568 = vmatpush2.bf16.msra.mxu0 0
        %1569 = vmatprep.mubr.bf16.mxu0 0
        %1570 = vmatmul.mubr.bf16.gmra.mxu0 %v1532
        %v1571 = vpop.f32.mrf.mxu0
        %v1572 = vadd.f32 0.0, %v1571
        %v1573 = vpop.f32.mrf.mxu0
        %v1574 = vadd.f32 0.0, %v1573
        %v1575 = vpop.f32.mrf.mxu0
        %v1576 = vadd.f32 0.0, %v1575
        %v1577 = vpop.f32.mrf.mxu0
        %v1578 = vadd.f32 0.0, %v1577
        %1579 = vmatprep.mubr.bf16.mxu0 0
        %1580 = vmatmul.mubr.bf16.gmra.mxu0 %v1535
        %v1581 = vpop.f32.mrf.mxu0
        %v1582 = vadd.f32 0.0, %v1581
        %v1583 = vpop.f32.mrf.mxu0
        %v1584 = vadd.f32 0.0, %v1583
        %v1585 = vpop.f32.mrf.mxu0
        %v1586 = vadd.f32 0.0, %v1585
        %v1587 = vpop.f32.mrf.mxu0
        %v1588 = vadd.f32 0.0, %v1587
        %1589 = vdwg.mxu0
        %1590 = vmatprep.subr.bf16.mxu0 0
        %1591 = vmatpush1.bf16.msra.mxu0 0
        %1592 = vmatprep.subr.bf16.mxu0 0
        %1593 = vmatpush1.bf16.msra.mxu0 0
        %1594 = vmatprep.subr.bf16.mxu0 0
        %1595 = vmatpush1.bf16.msra.mxu0 0
        %1596 = vmatprep.subr.bf16.mxu0 0
        %1597 = vmatpush1.bf16.msra.mxu0 0
        %1598 = vmatprep.subr.bf16.mxu0 0
        %1599 = vmatpush1.bf16.msra.mxu0 0
        %1600 = vmatprep.subr.bf16.mxu0 0
        %1601 = vmatpush1.bf16.msra.mxu0 0
        %1602 = vmatprep.subr.bf16.mxu0 %v1520
        %1603 = vmatpush1.bf16.msra.mxu0 %v1519
        %1604 = vmatprep.subr.bf16.mxu0 %v1516
        %1605 = vmatpush1.bf16.msra.mxu0 %v1515
        %1606 = vmatprep.subr.bf16.mxu0 0
        %1607 = vmatpush2.bf16.msra.mxu0 0
        %1608 = vmatprep.subr.bf16.mxu0 0
        %1609 = vmatpush2.bf16.msra.mxu0 0
        %1610 = vmatprep.subr.bf16.mxu0 0
        %1611 = vmatpush2.bf16.msra.mxu0 0
        %1612 = vmatprep.subr.bf16.mxu0 0
        %1613 = vmatpush2.bf16.msra.mxu0 0
        %1614 = vmatprep.subr.bf16.mxu0 0
        %1615 = vmatpush2.bf16.msra.mxu0 0
        %1616 = vmatprep.subr.bf16.mxu0 0
        %1617 = vmatpush2.bf16.msra.mxu0 0
        %1618 = vmatprep.subr.bf16.mxu0 0
        %1619 = vmatpush2.bf16.msra.mxu0 0
        %1620 = vmatprep.subr.bf16.mxu0 0
        %1621 = vmatpush2.bf16.msra.mxu0 0
        %1622 = vmatprep.mubr.bf16.mxu0 0
        %1623 = vmatmul.mubr.bf16.gmra.mxu0 %v1532
        %v1624 = vpop.f32.mrf.mxu0
        %v1625 = vadd.f32 0.0, %v1624
        %v1626 = vpop.f32.mrf.mxu0
        %v1627 = vadd.f32 0.0, %v1626
        %v1628 = vpop.f32.mrf.mxu0
        %v1629 = vadd.f32 0.0, %v1628
        %v1630 = vpop.f32.mrf.mxu0
        %v1631 = vadd.f32 0.0, %v1630
        %1632 = vmatprep.mubr.bf16.mxu0 0
        %1633 = vmatmul.mubr.bf16.gmra.mxu0 %v1535
        %v1634 = vpop.f32.mrf.mxu0
        %v1635 = vadd.f32 0.0, %v1634
        %v1636 = vpop.f32.mrf.mxu0
        %v1637 = vadd.f32 0.0, %v1636
        %v1638 = vpop.f32.mrf.mxu0
        %v1639 = vadd.f32 0.0, %v1638
        %v1640 = vpop.f32.mrf.mxu0
        %v1641 = vadd.f32 0.0, %v1640
        %1642 = vdwg.mxu0
        %v1643 = vadd.f32 %v1434, %v1572
        %v1644 = vadd.f32 %v1436, %v1574
        %v1645 = vadd.f32 %v1487, %v1625
        %v1646 = vadd.f32 %v1489, %v1627
        %v1647 = vadd.f32 %v1438, %v1576
        %v1648 = vadd.f32 %v1440, %v1578
        %v1649 = vadd.f32 %v1491, %v1629
        %v1650 = vadd.f32 %v1493, %v1631
        %v1651 = vadd.f32 %v1444, %v1582
        %v1652 = vadd.f32 %v1446, %v1584
        %v1653 = vadd.f32 %v1497, %v1635
        %v1654 = vadd.f32 %v1499, %v1637
        %v1655 = vadd.f32 %v1448, %v1586
        %v1656 = vadd.f32 %v1450, %v1588
        %v1657 = vadd.f32 %v1501, %v1639
        %v1658 = vadd.f32 %v1503, %v1641
        %s1659 = sadd.s32 %s1166, 2
        %s1660 = smul.u32 %s1659, 4
        %s1661 = smul.addr %s1660, 4
        %s1662 = scalar_lea.vmem %s4, %s1661
        %v1663 = vld [vmem:[%s1662] sm:$0xf]
        %v1664 = vld [vmem:[%s1662 + $0x4] sm:$0xf]
        %v1665 = vld [vmem:[%s1662 + $0x8] sm:$0xf]
        %v1666 = vld [vmem:[%s1662 + $0xc] sm:$0xf]
        %1667 = vrot.lane.b32.xlu0 %v1143, 127
        %v1668 = vpop.permute.xlu0 %1667
        %1669 = vrot.lane.b32.xlu0 %v1147, 127
        %v1670 = vpop.permute.xlu0 %1669
        %1671 = vrot.lane.b32.xlu0 %v1151, 127
        %v1672 = vpop.permute.xlu0 %1671
        %1673 = vrot.lane.b32.xlu0 %v1155, 127
        %v1674 = vpop.permute.xlu0 %1673
        %1675 = vrot.lane.b32.xlu0 %v1144, 127
        %v1676 = vpop.permute.xlu0 %1675
        %1677 = vrot.lane.b32.xlu0 %v1148, 127
        %v1678 = vpop.permute.xlu0 %1677
        %1679 = vrot.lane.b32.xlu0 %v1152, 127
        %v1680 = vpop.permute.xlu0 %1679
        %1681 = vrot.lane.b32.xlu0 %v1156, 127
        %v1682 = vpop.permute.xlu0 %1681
        %1683 = vrot.lane.b32.xlu0 %v1145, 127
        %v1684 = vpop.permute.xlu0 %1683
        %1685 = vrot.lane.b32.xlu0 %v1149, 127
        %v1686 = vpop.permute.xlu0 %1685
        %1687 = vrot.lane.b32.xlu0 %v1153, 127
        %v1688 = vpop.permute.xlu0 %1687
        %1689 = vrot.lane.b32.xlu0 %v1157, 127
        %v1690 = vpop.permute.xlu0 %1689
        %1691 = vrot.lane.b32.xlu0 %v1146, 127
        %v1692 = vpop.permute.xlu0 %1691
        %1693 = vrot.lane.b32.xlu0 %v1150, 127
        %v1694 = vpop.permute.xlu0 %1693
        %1695 = vrot.lane.b32.xlu0 %v1154, 127
        %v1696 = vpop.permute.xlu0 %1695
        %1697 = vrot.lane.b32.xlu0 %v1158, 127
        %v1698 = vpop.permute.xlu0 %1697
        %v1699 = vsel %vm872, %v1684, %v1692
        %v1700 = vsel %vm872, %v1686, %v1694
        %v1701 = vsel %vm872, %v1688, %v1696
        %v1702 = vsel %vm872, %v1690, %v1698
        %v1703 = vsel %vm872, %v1676, %v1684
        %v1704 = vsel %vm872, %v1678, %v1686
        %v1705 = vsel %vm872, %v1680, %v1688
        %v1706 = vsel %vm872, %v1682, %v1690
        %v1707 = vsel %vm872, %v1668, %v1676
        %v1708 = vsel %vm872, %v1670, %v1678
        %v1709 = vsel %vm872, %v1672, %v1680
        %v1710 = vsel %vm872, %v1674, %v1682
        %v1711 = vsel %vm872, %v1692, %v1668
        %v1712 = vsel %vm872, %v1694, %v1670
        %v1713 = vsel %vm872, %v1696, %v1672
        %v1714 = vsel %vm872, %v1698, %v1674
        %v1715 = vmul.f32 %v1707, %v539
        %v1716 = vmul.f32 %v1703, %v540
        %v1717 = vmul.f32 %v1699, %v541
        %v1718 = vmul.f32 %v1711, %v542
        %v1719 = vmul.f32 %v1708, %v539
        %v1720 = vmul.f32 %v1704, %v540
        %v1721 = vmul.f32 %v1700, %v541
        %v1722 = vmul.f32 %v1712, %v542
        %v1723 = vmul.f32 %v1709, %v539
        %v1724 = vmul.f32 %v1705, %v540
        %v1725 = vmul.f32 %v1701, %v541
        %v1726 = vmul.f32 %v1713, %v542
        %v1727 = vmul.f32 %v1710, %v539
        %v1728 = vmul.f32 %v1706, %v540
        %v1729 = vmul.f32 %v1702, %v541
        %v1730 = vmul.f32 %v1714, %v542
        %v1731 = vpack.c.bf16 %v1719, %v1715
        %v1732 = vpack.c.bf16 %v1720, %v1716
        %v1733 = vpack.c.bf16 %v1721, %v1717
        %v1734 = vpack.c.bf16 %v1722, %v1718
        %v1735 = vpack.c.bf16 %v1727, %v1723
        %v1736 = vpack.c.bf16 %v1728, %v1724
        %v1737 = vpack.c.bf16 %v1729, %v1725
        %v1738 = vpack.c.bf16 %v1730, %v1726
        %v1743 = vunpack.c.l.b16 %v1663
        %v1744 = vunpack.c.l.b16 %v1664
        %v1745 = vunpack.c.l.b16 %v1665
        %v1746 = vunpack.c.l.b16 %v1666
        %v1747 = vpack.c.b16 %v1744, %v1743
        %v1748 = vpack.c.b16 %v1746, %v1745
        %v1750 = vsel %vm1256, %v1747, 0
        %v1753 = vsel %vm1256, %v1748, 0
        %1755 = vmatprep.subr.bf16.mxu0 0
        %1756 = vmatpush1.bf16.msra.mxu0 0
        %1757 = vmatprep.subr.bf16.mxu0 0
        %1758 = vmatpush1.bf16.msra.mxu0 0
        %1759 = vmatprep.subr.bf16.mxu0 0
        %1760 = vmatpush1.bf16.msra.mxu0 0
        %1761 = vmatprep.subr.bf16.mxu0 0
        %1762 = vmatpush1.bf16.msra.mxu0 0
        %1763 = vmatprep.subr.bf16.mxu0 0
        %1764 = vmatpush1.bf16.msra.mxu0 0
        %1765 = vmatprep.subr.bf16.mxu0 0
        %1766 = vmatpush1.bf16.msra.mxu0 0
        %1767 = vmatprep.subr.bf16.mxu0 %v1736
        %1768 = vmatpush1.bf16.msra.mxu0 %v1735
        %1769 = vmatprep.subr.bf16.mxu0 %v1732
        %1770 = vmatpush1.bf16.msra.mxu0 %v1731
        %1771 = vmatprep.subr.bf16.mxu0 0
        %1772 = vmatpush2.bf16.msra.mxu0 0
        %1773 = vmatprep.subr.bf16.mxu0 0
        %1774 = vmatpush2.bf16.msra.mxu0 0
        %1775 = vmatprep.subr.bf16.mxu0 0
        %1776 = vmatpush2.bf16.msra.mxu0 0
        %1777 = vmatprep.subr.bf16.mxu0 0
        %1778 = vmatpush2.bf16.msra.mxu0 0
        %1779 = vmatprep.subr.bf16.mxu0 0
        %1780 = vmatpush2.bf16.msra.mxu0 0
        %1781 = vmatprep.subr.bf16.mxu0 0
        %1782 = vmatpush2.bf16.msra.mxu0 0
        %1783 = vmatprep.subr.bf16.mxu0 0
        %1784 = vmatpush2.bf16.msra.mxu0 0
        %1785 = vmatprep.subr.bf16.mxu0 0
        %1786 = vmatpush2.bf16.msra.mxu0 0
        %1787 = vmatprep.mubr.bf16.mxu0 0
        %1788 = vmatmul.mubr.bf16.gmra.mxu0 %v1750
        %v1789 = vpop.f32.mrf.mxu0
        %v1790 = vadd.f32 0.0, %v1789
        %v1791 = vpop.f32.mrf.mxu0
        %v1792 = vadd.f32 0.0, %v1791
        %v1793 = vpop.f32.mrf.mxu0
        %v1794 = vadd.f32 0.0, %v1793
        %v1795 = vpop.f32.mrf.mxu0
        %v1796 = vadd.f32 0.0, %v1795
        %1797 = vmatprep.mubr.bf16.mxu0 0
        %1798 = vmatmul.mubr.bf16.gmra.mxu0 %v1753
        %v1799 = vpop.f32.mrf.mxu0
        %v1800 = vadd.f32 0.0, %v1799
        %v1801 = vpop.f32.mrf.mxu0
        %v1802 = vadd.f32 0.0, %v1801
        %v1803 = vpop.f32.mrf.mxu0
        %v1804 = vadd.f32 0.0, %v1803
        %v1805 = vpop.f32.mrf.mxu0
        %v1806 = vadd.f32 0.0, %v1805
        %1807 = vdwg.mxu0
        %1808 = vmatprep.subr.bf16.mxu0 0
        %1809 = vmatpush1.bf16.msra.mxu0 0
        %1810 = vmatprep.subr.bf16.mxu0 0
        %1811 = vmatpush1.bf16.msra.mxu0 0
        %1812 = vmatprep.subr.bf16.mxu0 0
        %1813 = vmatpush1.bf16.msra.mxu0 0
        %1814 = vmatprep.subr.bf16.mxu0 0
        %1815 = vmatpush1.bf16.msra.mxu0 0
        %1816 = vmatprep.subr.bf16.mxu0 0
        %1817 = vmatpush1.bf16.msra.mxu0 0
        %1818 = vmatprep.subr.bf16.mxu0 0
        %1819 = vmatpush1.bf16.msra.mxu0 0
        %1820 = vmatprep.subr.bf16.mxu0 %v1738
        %1821 = vmatpush1.bf16.msra.mxu0 %v1737
        %1822 = vmatprep.subr.bf16.mxu0 %v1734
        %1823 = vmatpush1.bf16.msra.mxu0 %v1733
        %1824 = vmatprep.subr.bf16.mxu0 0
        %1825 = vmatpush2.bf16.msra.mxu0 0
        %1826 = vmatprep.subr.bf16.mxu0 0
        %1827 = vmatpush2.bf16.msra.mxu0 0
        %1828 = vmatprep.subr.bf16.mxu0 0
        %1829 = vmatpush2.bf16.msra.mxu0 0
        %1830 = vmatprep.subr.bf16.mxu0 0
        %1831 = vmatpush2.bf16.msra.mxu0 0
        %1832 = vmatprep.subr.bf16.mxu0 0
        %1833 = vmatpush2.bf16.msra.mxu0 0
        %1834 = vmatprep.subr.bf16.mxu0 0
        %1835 = vmatpush2.bf16.msra.mxu0 0
        %1836 = vmatprep.subr.bf16.mxu0 0
        %1837 = vmatpush2.bf16.msra.mxu0 0
        %1838 = vmatprep.subr.bf16.mxu0 0
        %1839 = vmatpush2.bf16.msra.mxu0 0
        %1840 = vmatprep.mubr.bf16.mxu0 0
        %1841 = vmatmul.mubr.bf16.gmra.mxu0 %v1750
        %v1842 = vpop.f32.mrf.mxu0
        %v1843 = vadd.f32 0.0, %v1842
        %v1844 = vpop.f32.mrf.mxu0
        %v1845 = vadd.f32 0.0, %v1844
        %v1846 = vpop.f32.mrf.mxu0
        %v1847 = vadd.f32 0.0, %v1846
        %v1848 = vpop.f32.mrf.mxu0
        %v1849 = vadd.f32 0.0, %v1848
        %1850 = vmatprep.mubr.bf16.mxu0 0
        %1851 = vmatmul.mubr.bf16.gmra.mxu0 %v1753
        %v1852 = vpop.f32.mrf.mxu0
        %v1853 = vadd.f32 0.0, %v1852
        %v1854 = vpop.f32.mrf.mxu0
        %v1855 = vadd.f32 0.0, %v1854
        %v1856 = vpop.f32.mrf.mxu0
        %v1857 = vadd.f32 0.0, %v1856
        %v1858 = vpop.f32.mrf.mxu0
        %v1859 = vadd.f32 0.0, %v1858
        %1860 = vdwg.mxu0
        %v1861 = vadd.f32 %v1643, %v1790
        %v1862 = vadd.f32 %v1644, %v1792
        %v1863 = vadd.f32 %v1645, %v1843
        %v1864 = vadd.f32 %v1646, %v1845
        %v1865 = vadd.f32 %v1647, %v1794
        %v1866 = vadd.f32 %v1648, %v1796
        %v1867 = vadd.f32 %v1649, %v1847
        %v1868 = vadd.f32 %v1650, %v1849
        %v1869 = vadd.f32 %v1651, %v1800
        %v1870 = vadd.f32 %v1652, %v1802
        %v1871 = vadd.f32 %v1653, %v1853
        %v1872 = vadd.f32 %v1654, %v1855
        %v1873 = vadd.f32 %v1655, %v1804
        %v1874 = vadd.f32 %v1656, %v1806
        %v1875 = vadd.f32 %v1657, %v1857
        %v1876 = vadd.f32 %v1658, %v1859
        %s1877 = smul.u32 %s1138, 32
        %s1878 = scalar_lea.vmem %s5, %s1877
        %v1879 = vld [vmem:[%s1878] sm:$0xff]
        %v1880 = vld [vmem:[%s1878 + $0x8] sm:$0xff]
        %v1881 = vld [vmem:[%s1878 + $0x10] sm:$0xff]
        %v1882 = vld [vmem:[%s1878 + $0x18] sm:$0xff]
        %1884 = vset.pattern.permute.xlu0 0
        %1885 = vperm.xlu0 %1884, %v1879
        %v1886 = vpop.permute.xlu0 %1885
        %1889 = vset.pattern.permute.xlu0 0
        %1890 = vperm.xlu0 %1889, %v1880
        %v1891 = vpop.permute.xlu0 %1890
        %1894 = vset.pattern.permute.xlu0 0
        %1895 = vperm.xlu0 %1894, %v1881
        %v1896 = vpop.permute.xlu0 %1895
        %1899 = vset.pattern.permute.xlu0 0
        %1900 = vperm.xlu0 %1899, %v1882
        %v1901 = vpop.permute.xlu0 %1900
        %v1903 = vadd.f32 %v1861, %v1886
        %v1904 = vadd.f32 %v1862, %v1886
        %v1905 = vadd.f32 %v1863, %v1886
        %v1906 = vadd.f32 %v1864, %v1886
        %v1907 = vadd.f32 %v1865, %v1891
        %v1908 = vadd.f32 %v1866, %v1891
        %v1909 = vadd.f32 %v1867, %v1891
        %v1910 = vadd.f32 %v1868, %v1891
        %v1911 = vadd.f32 %v1869, %v1896
        %v1912 = vadd.f32 %v1870, %v1896
        %v1913 = vadd.f32 %v1871, %v1896
        %v1914 = vadd.f32 %v1872, %v1896
        %v1915 = vadd.f32 %v1873, %v1901
        %v1916 = vadd.f32 %v1874, %v1901
        %v1917 = vadd.f32 %v1875, %v1901
        %v1918 = vadd.f32 %v1876, %v1901
        %s1919 = smul.u32 %s1138, 9
        %s1920 = smul.u32 %s1919, 4
        %s1921 = smul.addr %s1920, 4
        %s1922 = scalar_lea.vmem %s6, %s1921
        %v1923 = vld [vmem:[%s1922] sm:$0xf]
        %v1924 = vld [vmem:[%s1922 + $0x4] sm:$0xf]
        %v1925 = vld [vmem:[%s1922 + $0x8] sm:$0xf]
        %v1926 = vld [vmem:[%s1922 + $0xc] sm:$0xf]
        %1927 = vrot.lane.b32.xlu0 %v1903, 1
        %v1928 = vpop.permute.xlu0 %1927
        %1929 = vrot.lane.b32.xlu0 %v1907, 1
        %v1930 = vpop.permute.xlu0 %1929
        %1931 = vrot.lane.b32.xlu0 %v1911, 1
        %v1932 = vpop.permute.xlu0 %1931
        %1933 = vrot.lane.b32.xlu0 %v1915, 1
        %v1934 = vpop.permute.xlu0 %1933
        %1935 = vrot.lane.b32.xlu0 %v1904, 1
        %v1936 = vpop.permute.xlu0 %1935
        %1937 = vrot.lane.b32.xlu0 %v1908, 1
        %v1938 = vpop.permute.xlu0 %1937
        %1939 = vrot.lane.b32.xlu0 %v1912, 1
        %v1940 = vpop.permute.xlu0 %1939
        %1941 = vrot.lane.b32.xlu0 %v1916, 1
        %v1942 = vpop.permute.xlu0 %1941
        %1943 = vrot.lane.b32.xlu0 %v1905, 1
        %v1944 = vpop.permute.xlu0 %1943
        %1945 = vrot.lane.b32.xlu0 %v1909, 1
        %v1946 = vpop.permute.xlu0 %1945
        %1947 = vrot.lane.b32.xlu0 %v1913, 1
        %v1948 = vpop.permute.xlu0 %1947
        %1949 = vrot.lane.b32.xlu0 %v1917, 1
        %v1950 = vpop.permute.xlu0 %1949
        %1951 = vrot.lane.b32.xlu0 %v1906, 1
        %v1952 = vpop.permute.xlu0 %1951
        %1953 = vrot.lane.b32.xlu0 %v1910, 1
        %v1954 = vpop.permute.xlu0 %1953
        %1955 = vrot.lane.b32.xlu0 %v1914, 1
        %v1956 = vpop.permute.xlu0 %1955
        %1957 = vrot.lane.b32.xlu0 %v1918, 1
        %v1958 = vpop.permute.xlu0 %1957
        %v1959 = vsel %vm687, %v1944, %v1952
        %v1960 = vsel %vm687, %v1946, %v1954
        %v1961 = vsel %vm687, %v1948, %v1956
        %v1962 = vsel %vm687, %v1950, %v1958
        %v1963 = vsel %vm687, %v1936, %v1944
        %v1964 = vsel %vm687, %v1938, %v1946
        %v1965 = vsel %vm687, %v1940, %v1948
        %v1966 = vsel %vm687, %v1942, %v1950
        %v1967 = vsel %vm687, %v1928, %v1936
        %v1968 = vsel %vm687, %v1930, %v1938
        %v1969 = vsel %vm687, %v1932, %v1940
        %v1970 = vsel %vm687, %v1934, %v1942
        %v1971 = vsel %vm687, %v1952, %v1928
        %v1972 = vsel %vm687, %v1954, %v1930
        %v1973 = vsel %vm687, %v1956, %v1932
        %v1974 = vsel %vm687, %v1958, %v1934
        %v1975 = vmul.f32 %v1971, %v515
        %v1976 = vmul.f32 %v1967, %v516
        %v1977 = vmul.f32 %v1963, %v517
        %v1978 = vmul.f32 %v1959, %v518
        %v1979 = vmul.f32 %v1972, %v515
        %v1980 = vmul.f32 %v1968, %v516
        %v1981 = vmul.f32 %v1964, %v517
        %v1982 = vmul.f32 %v1960, %v518
        %v1983 = vmul.f32 %v1973, %v515
        %v1984 = vmul.f32 %v1969, %v516
        %v1985 = vmul.f32 %v1965, %v517
        %v1986 = vmul.f32 %v1961, %v518
        %v1987 = vmul.f32 %v1974, %v515
        %v1988 = vmul.f32 %v1970, %v516
        %v1989 = vmul.f32 %v1966, %v517
        %v1990 = vmul.f32 %v1962, %v518
        %v1991 = vpack.c.bf16 %v1979, %v1975
        %v1992 = vpack.c.bf16 %v1980, %v1976
        %v1993 = vpack.c.bf16 %v1981, %v1977
        %v1994 = vpack.c.bf16 %v1982, %v1978
        %v1995 = vpack.c.bf16 %v1987, %v1983
        %v1996 = vpack.c.bf16 %v1988, %v1984
        %v1997 = vpack.c.bf16 %v1989, %v1985
        %v1998 = vpack.c.bf16 %v1990, %v1986
        %s1999 = sadd.s32 %s1919, 1
        %s2000 = smul.u32 %s1999, 4
        %s2001 = smul.addr %s2000, 4
        %s2002 = scalar_lea.vmem %s6, %s2001
        %v2003 = vld [vmem:[%s2002] sm:$0xf]
        %v2004 = vld [vmem:[%s2002 + $0x4] sm:$0xf]
        %v2005 = vld [vmem:[%s2002 + $0x8] sm:$0xf]
        %v2006 = vld [vmem:[%s2002 + $0xc] sm:$0xf]
        %v2007 = vpack.c.bf16 %v1907, %v1903
        %v2008 = vpack.c.bf16 %v1908, %v1904
        %v2009 = vpack.c.bf16 %v1909, %v1905
        %v2010 = vpack.c.bf16 %v1910, %v1906
        %v2011 = vpack.c.bf16 %v1915, %v1911
        %v2012 = vpack.c.bf16 %v1916, %v1912
        %v2013 = vpack.c.bf16 %v1917, %v1913
        %v2014 = vpack.c.bf16 %v1918, %v1914
        %v2019 = vunpack.c.l.b16 %v2003
        %v2020 = vunpack.c.l.b16 %v2004
        %v2021 = vunpack.c.l.b16 %v2005
        %v2022 = vunpack.c.l.b16 %v2006
        %v2023 = vpack.c.b16 %v2020, %v2019
        %v2024 = vpack.c.b16 %v2022, %v2021
        %v2026 = vsel %vm1256, %v2023, 0
        %v2029 = vsel %vm1256, %v2024, 0
        %2031 = vmatprep.subr.bf16.mxu0 0
        %2032 = vmatpush1.bf16.msra.mxu0 0
        %2033 = vmatprep.subr.bf16.mxu0 0
        %2034 = vmatpush1.bf16.msra.mxu0 0
        %2035 = vmatprep.subr.bf16.mxu0 0
        %2036 = vmatpush1.bf16.msra.mxu0 0
        %2037 = vmatprep.subr.bf16.mxu0 0
        %2038 = vmatpush1.bf16.msra.mxu0 0
        %2039 = vmatprep.subr.bf16.mxu0 0
        %2040 = vmatpush1.bf16.msra.mxu0 0
        %2041 = vmatprep.subr.bf16.mxu0 0
        %2042 = vmatpush1.bf16.msra.mxu0 0
        %2043 = vmatprep.subr.bf16.mxu0 %v2012
        %2044 = vmatpush1.bf16.msra.mxu0 %v2011
        %2045 = vmatprep.subr.bf16.mxu0 %v2008
        %2046 = vmatpush1.bf16.msra.mxu0 %v2007
        %2047 = vmatprep.subr.bf16.mxu0 0
        %2048 = vmatpush2.bf16.msra.mxu0 0
        %2049 = vmatprep.subr.bf16.mxu0 0
        %2050 = vmatpush2.bf16.msra.mxu0 0
        %2051 = vmatprep.subr.bf16.mxu0 0
        %2052 = vmatpush2.bf16.msra.mxu0 0
        %2053 = vmatprep.subr.bf16.mxu0 0
        %2054 = vmatpush2.bf16.msra.mxu0 0
        %2055 = vmatprep.subr.bf16.mxu0 0
        %2056 = vmatpush2.bf16.msra.mxu0 0
        %2057 = vmatprep.subr.bf16.mxu0 0
        %2058 = vmatpush2.bf16.msra.mxu0 0
        %2059 = vmatprep.subr.bf16.mxu0 0
        %2060 = vmatpush2.bf16.msra.mxu0 0
        %2061 = vmatprep.subr.bf16.mxu0 0
        %2062 = vmatpush2.bf16.msra.mxu0 0
        %2063 = vmatprep.mubr.bf16.mxu0 0
        %2064 = vmatmul.mubr.bf16.gmra.mxu0 %v2026
        %v2065 = vpop.f32.mrf.mxu0
        %v2066 = vadd.f32 0.0, %v2065
        %v2067 = vpop.f32.mrf.mxu0
        %v2068 = vadd.f32 0.0, %v2067
        %v2069 = vpop.f32.mrf.mxu0
        %v2070 = vadd.f32 0.0, %v2069
        %v2071 = vpop.f32.mrf.mxu0
        %v2072 = vadd.f32 0.0, %v2071
        %2073 = vmatprep.mubr.bf16.mxu0 0
        %2074 = vmatmul.mubr.bf16.gmra.mxu0 %v2029
        %v2075 = vpop.f32.mrf.mxu0
        %v2076 = vadd.f32 0.0, %v2075
        %v2077 = vpop.f32.mrf.mxu0
        %v2078 = vadd.f32 0.0, %v2077
        %v2079 = vpop.f32.mrf.mxu0
        %v2080 = vadd.f32 0.0, %v2079
        %v2081 = vpop.f32.mrf.mxu0
        %v2082 = vadd.f32 0.0, %v2081
        %2083 = vdwg.mxu0
        %2084 = vmatprep.subr.bf16.mxu0 0
        %2085 = vmatpush1.bf16.msra.mxu0 0
        %2086 = vmatprep.subr.bf16.mxu0 0
        %2087 = vmatpush1.bf16.msra.mxu0 0
        %2088 = vmatprep.subr.bf16.mxu0 0
        %2089 = vmatpush1.bf16.msra.mxu0 0
        %2090 = vmatprep.subr.bf16.mxu0 0
        %2091 = vmatpush1.bf16.msra.mxu0 0
        %2092 = vmatprep.subr.bf16.mxu0 0
        %2093 = vmatpush1.bf16.msra.mxu0 0
        %2094 = vmatprep.subr.bf16.mxu0 0
        %2095 = vmatpush1.bf16.msra.mxu0 0
        %2096 = vmatprep.subr.bf16.mxu0 %v2014
        %2097 = vmatpush1.bf16.msra.mxu0 %v2013
        %2098 = vmatprep.subr.bf16.mxu0 %v2010
        %2099 = vmatpush1.bf16.msra.mxu0 %v2009
        %2100 = vmatprep.subr.bf16.mxu0 0
        %2101 = vmatpush2.bf16.msra.mxu0 0
        %2102 = vmatprep.subr.bf16.mxu0 0
        %2103 = vmatpush2.bf16.msra.mxu0 0
        %2104 = vmatprep.subr.bf16.mxu0 0
        %2105 = vmatpush2.bf16.msra.mxu0 0
        %2106 = vmatprep.subr.bf16.mxu0 0
        %2107 = vmatpush2.bf16.msra.mxu0 0
        %2108 = vmatprep.subr.bf16.mxu0 0
        %2109 = vmatpush2.bf16.msra.mxu0 0
        %2110 = vmatprep.subr.bf16.mxu0 0
        %2111 = vmatpush2.bf16.msra.mxu0 0
        %2112 = vmatprep.subr.bf16.mxu0 0
        %2113 = vmatpush2.bf16.msra.mxu0 0
        %2114 = vmatprep.subr.bf16.mxu0 0
        %2115 = vmatpush2.bf16.msra.mxu0 0
        %2116 = vmatprep.mubr.bf16.mxu0 0
        %2117 = vmatmul.mubr.bf16.gmra.mxu0 %v2026
        %v2118 = vpop.f32.mrf.mxu0
        %v2119 = vadd.f32 0.0, %v2118
        %v2120 = vpop.f32.mrf.mxu0
        %v2121 = vadd.f32 0.0, %v2120
        %v2122 = vpop.f32.mrf.mxu0
        %v2123 = vadd.f32 0.0, %v2122
        %v2124 = vpop.f32.mrf.mxu0
        %v2125 = vadd.f32 0.0, %v2124
        %2126 = vmatprep.mubr.bf16.mxu0 0
        %2127 = vmatmul.mubr.bf16.gmra.mxu0 %v2029
        %v2128 = vpop.f32.mrf.mxu0
        %v2129 = vadd.f32 0.0, %v2128
        %v2130 = vpop.f32.mrf.mxu0
        %v2131 = vadd.f32 0.0, %v2130
        %v2132 = vpop.f32.mrf.mxu0
        %v2133 = vadd.f32 0.0, %v2132
        %v2134 = vpop.f32.mrf.mxu0
        %v2135 = vadd.f32 0.0, %v2134
        %2136 = vdwg.mxu0
        %v2141 = vunpack.c.l.b16 %v1923
        %v2142 = vunpack.c.l.b16 %v1924
        %v2143 = vunpack.c.l.b16 %v1925
        %v2144 = vunpack.c.l.b16 %v1926
        %v2145 = vpack.c.b16 %v2142, %v2141
        %v2146 = vpack.c.b16 %v2144, %v2143
        %v2148 = vsel %vm1256, %v2145, 0
        %v2151 = vsel %vm1256, %v2146, 0
        %2153 = vmatprep.subr.bf16.mxu0 0
        %2154 = vmatpush1.bf16.msra.mxu0 0
        %2155 = vmatprep.subr.bf16.mxu0 0
        %2156 = vmatpush1.bf16.msra.mxu0 0
        %2157 = vmatprep.subr.bf16.mxu0 0
        %2158 = vmatpush1.bf16.msra.mxu0 0
        %2159 = vmatprep.subr.bf16.mxu0 0
        %2160 = vmatpush1.bf16.msra.mxu0 0
        %2161 = vmatprep.subr.bf16.mxu0 0
        %2162 = vmatpush1.bf16.msra.mxu0 0
        %2163 = vmatprep.subr.bf16.mxu0 0
        %2164 = vmatpush1.bf16.msra.mxu0 0
        %2165 = vmatprep.subr.bf16.mxu0 %v1996
        %2166 = vmatpush1.bf16.msra.mxu0 %v1995
        %2167 = vmatprep.subr.bf16.mxu0 %v1992
        %2168 = vmatpush1.bf16.msra.mxu0 %v1991
        %2169 = vmatprep.subr.bf16.mxu0 0
        %2170 = vmatpush2.bf16.msra.mxu0 0
        %2171 = vmatprep.subr.bf16.mxu0 0
        %2172 = vmatpush2.bf16.msra.mxu0 0
        %2173 = vmatprep.subr.bf16.mxu0 0
        %2174 = vmatpush2.bf16.msra.mxu0 0
        %2175 = vmatprep.subr.bf16.mxu0 0
        %2176 = vmatpush2.bf16.msra.mxu0 0
        %2177 = vmatprep.subr.bf16.mxu0 0
        %2178 = vmatpush2.bf16.msra.mxu0 0
        %2179 = vmatprep.subr.bf16.mxu0 0
        %2180 = vmatpush2.bf16.msra.mxu0 0
        %2181 = vmatprep.subr.bf16.mxu0 0
        %2182 = vmatpush2.bf16.msra.mxu0 0
        %2183 = vmatprep.subr.bf16.mxu0 0
        %2184 = vmatpush2.bf16.msra.mxu0 0
        %2185 = vmatprep.mubr.bf16.mxu0 0
        %2186 = vmatmul.mubr.bf16.gmra.mxu0 %v2148
        %v2187 = vpop.f32.mrf.mxu0
        %v2188 = vadd.f32 %v2066, %v2187
        %v2189 = vpop.f32.mrf.mxu0
        %v2190 = vadd.f32 %v2068, %v2189
        %v2191 = vpop.f32.mrf.mxu0
        %v2192 = vadd.f32 %v2070, %v2191
        %v2193 = vpop.f32.mrf.mxu0
        %v2194 = vadd.f32 %v2072, %v2193
        %2195 = vmatprep.mubr.bf16.mxu0 0
        %2196 = vmatmul.mubr.bf16.gmra.mxu0 %v2151
        %v2197 = vpop.f32.mrf.mxu0
        %v2198 = vadd.f32 %v2076, %v2197
        %v2199 = vpop.f32.mrf.mxu0
        %v2200 = vadd.f32 %v2078, %v2199
        %v2201 = vpop.f32.mrf.mxu0
        %v2202 = vadd.f32 %v2080, %v2201
        %v2203 = vpop.f32.mrf.mxu0
        %v2204 = vadd.f32 %v2082, %v2203
        %2205 = vdwg.mxu0
        %2206 = vmatprep.subr.bf16.mxu0 0
        %2207 = vmatpush1.bf16.msra.mxu0 0
        %2208 = vmatprep.subr.bf16.mxu0 0
        %2209 = vmatpush1.bf16.msra.mxu0 0
        %2210 = vmatprep.subr.bf16.mxu0 0
        %2211 = vmatpush1.bf16.msra.mxu0 0
        %2212 = vmatprep.subr.bf16.mxu0 0
        %2213 = vmatpush1.bf16.msra.mxu0 0
        %2214 = vmatprep.subr.bf16.mxu0 0
        %2215 = vmatpush1.bf16.msra.mxu0 0
        %2216 = vmatprep.subr.bf16.mxu0 0
        %2217 = vmatpush1.bf16.msra.mxu0 0
        %2218 = vmatprep.subr.bf16.mxu0 %v1998
        %2219 = vmatpush1.bf16.msra.mxu0 %v1997
        %2220 = vmatprep.subr.bf16.mxu0 %v1994
        %2221 = vmatpush1.bf16.msra.mxu0 %v1993
        %2222 = vmatprep.subr.bf16.mxu0 0
        %2223 = vmatpush2.bf16.msra.mxu0 0
        %2224 = vmatprep.subr.bf16.mxu0 0
        %2225 = vmatpush2.bf16.msra.mxu0 0
        %2226 = vmatprep.subr.bf16.mxu0 0
        %2227 = vmatpush2.bf16.msra.mxu0 0
        %2228 = vmatprep.subr.bf16.mxu0 0
        %2229 = vmatpush2.bf16.msra.mxu0 0
        %2230 = vmatprep.subr.bf16.mxu0 0
        %2231 = vmatpush2.bf16.msra.mxu0 0
        %2232 = vmatprep.subr.bf16.mxu0 0
        %2233 = vmatpush2.bf16.msra.mxu0 0
        %2234 = vmatprep.subr.bf16.mxu0 0
        %2235 = vmatpush2.bf16.msra.mxu0 0
        %2236 = vmatprep.subr.bf16.mxu0 0
        %2237 = vmatpush2.bf16.msra.mxu0 0
        %2238 = vmatprep.mubr.bf16.mxu0 0
        %2239 = vmatmul.mubr.bf16.gmra.mxu0 %v2148
        %v2240 = vpop.f32.mrf.mxu0
        %v2241 = vadd.f32 %v2119, %v2240
        %v2242 = vpop.f32.mrf.mxu0
        %v2243 = vadd.f32 %v2121, %v2242
        %v2244 = vpop.f32.mrf.mxu0
        %v2245 = vadd.f32 %v2123, %v2244
        %v2246 = vpop.f32.mrf.mxu0
        %v2247 = vadd.f32 %v2125, %v2246
        %2248 = vmatprep.mubr.bf16.mxu0 0
        %2249 = vmatmul.mubr.bf16.gmra.mxu0 %v2151
        %v2250 = vpop.f32.mrf.mxu0
        %v2251 = vadd.f32 %v2129, %v2250
        %v2252 = vpop.f32.mrf.mxu0
        %v2253 = vadd.f32 %v2131, %v2252
        %v2254 = vpop.f32.mrf.mxu0
        %v2255 = vadd.f32 %v2133, %v2254
        %v2256 = vpop.f32.mrf.mxu0
        %v2257 = vadd.f32 %v2135, %v2256
        %2258 = vdwg.mxu0
        %s2259 = sadd.s32 %s1919, 2
        %s2260 = smul.u32 %s2259, 4
        %s2261 = smul.addr %s2260, 4
        %s2262 = scalar_lea.vmem %s6, %s2261
        %v2263 = vld [vmem:[%s2262] sm:$0xf]
        %v2264 = vld [vmem:[%s2262 + $0x4] sm:$0xf]
        %v2265 = vld [vmem:[%s2262 + $0x8] sm:$0xf]
        %v2266 = vld [vmem:[%s2262 + $0xc] sm:$0xf]
        %2267 = vrot.lane.b32.xlu0 %v1903, 127
        %v2268 = vpop.permute.xlu0 %2267
        %2269 = vrot.lane.b32.xlu0 %v1907, 127
        %v2270 = vpop.permute.xlu0 %2269
        %2271 = vrot.lane.b32.xlu0 %v1911, 127
        %v2272 = vpop.permute.xlu0 %2271
        %2273 = vrot.lane.b32.xlu0 %v1915, 127
        %v2274 = vpop.permute.xlu0 %2273
        %2275 = vrot.lane.b32.xlu0 %v1904, 127
        %v2276 = vpop.permute.xlu0 %2275
        %2277 = vrot.lane.b32.xlu0 %v1908, 127
        %v2278 = vpop.permute.xlu0 %2277
        %2279 = vrot.lane.b32.xlu0 %v1912, 127
        %v2280 = vpop.permute.xlu0 %2279
        %2281 = vrot.lane.b32.xlu0 %v1916, 127
        %v2282 = vpop.permute.xlu0 %2281
        %2283 = vrot.lane.b32.xlu0 %v1905, 127
        %v2284 = vpop.permute.xlu0 %2283
        %2285 = vrot.lane.b32.xlu0 %v1909, 127
        %v2286 = vpop.permute.xlu0 %2285
        %2287 = vrot.lane.b32.xlu0 %v1913, 127
        %v2288 = vpop.permute.xlu0 %2287
        %2289 = vrot.lane.b32.xlu0 %v1917, 127
        %v2290 = vpop.permute.xlu0 %2289
        %2291 = vrot.lane.b32.xlu0 %v1906, 127
        %v2292 = vpop.permute.xlu0 %2291
        %2293 = vrot.lane.b32.xlu0 %v1910, 127
        %v2294 = vpop.permute.xlu0 %2293
        %2295 = vrot.lane.b32.xlu0 %v1914, 127
        %v2296 = vpop.permute.xlu0 %2295
        %2297 = vrot.lane.b32.xlu0 %v1918, 127
        %v2298 = vpop.permute.xlu0 %2297
        %v2299 = vsel %vm872, %v2284, %v2292
        %v2300 = vsel %vm872, %v2286, %v2294
        %v2301 = vsel %vm872, %v2288, %v2296
        %v2302 = vsel %vm872, %v2290, %v2298
        %v2303 = vsel %vm872, %v2276, %v2284
        %v2304 = vsel %vm872, %v2278, %v2286
        %v2305 = vsel %vm872, %v2280, %v2288
        %v2306 = vsel %vm872, %v2282, %v2290
        %v2307 = vsel %vm872, %v2268, %v2276
        %v2308 = vsel %vm872, %v2270, %v2278
        %v2309 = vsel %vm872, %v2272, %v2280
        %v2310 = vsel %vm872, %v2274, %v2282
        %v2311 = vsel %vm872, %v2292, %v2268
        %v2312 = vsel %vm872, %v2294, %v2270
        %v2313 = vsel %vm872, %v2296, %v2272
        %v2314 = vsel %vm872, %v2298, %v2274
        %v2315 = vmul.f32 %v2307, %v539
        %v2316 = vmul.f32 %v2303, %v540
        %v2317 = vmul.f32 %v2299, %v541
        %v2318 = vmul.f32 %v2311, %v542
        %v2319 = vmul.f32 %v2308, %v539
        %v2320 = vmul.f32 %v2304, %v540
        %v2321 = vmul.f32 %v2300, %v541
        %v2322 = vmul.f32 %v2312, %v542
        %v2323 = vmul.f32 %v2309, %v539
        %v2324 = vmul.f32 %v2305, %v540
        %v2325 = vmul.f32 %v2301, %v541
        %v2326 = vmul.f32 %v2313, %v542
        %v2327 = vmul.f32 %v2310, %v539
        %v2328 = vmul.f32 %v2306, %v540
        %v2329 = vmul.f32 %v2302, %v541
        %v2330 = vmul.f32 %v2314, %v542
        %v2331 = vpack.c.bf16 %v2319, %v2315
        %v2332 = vpack.c.bf16 %v2320, %v2316
        %v2333 = vpack.c.bf16 %v2321, %v2317
        %v2334 = vpack.c.bf16 %v2322, %v2318
        %v2335 = vpack.c.bf16 %v2327, %v2323
        %v2336 = vpack.c.bf16 %v2328, %v2324
        %v2337 = vpack.c.bf16 %v2329, %v2325
        %v2338 = vpack.c.bf16 %v2330, %v2326
        %v2343 = vunpack.c.l.b16 %v2263
        %v2344 = vunpack.c.l.b16 %v2264
        %v2345 = vunpack.c.l.b16 %v2265
        %v2346 = vunpack.c.l.b16 %v2266
        %v2347 = vpack.c.b16 %v2344, %v2343
        %v2348 = vpack.c.b16 %v2346, %v2345
        %v2350 = vsel %vm1256, %v2347, 0
        %v2353 = vsel %vm1256, %v2348, 0
        %2355 = vmatprep.subr.bf16.mxu0 0
        %2356 = vmatpush1.bf16.msra.mxu0 0
        %2357 = vmatprep.subr.bf16.mxu0 0
        %2358 = vmatpush1.bf16.msra.mxu0 0
        %2359 = vmatprep.subr.bf16.mxu0 0
        %2360 = vmatpush1.bf16.msra.mxu0 0
        %2361 = vmatprep.subr.bf16.mxu0 0
        %2362 = vmatpush1.bf16.msra.mxu0 0
        %2363 = vmatprep.subr.bf16.mxu0 0
        %2364 = vmatpush1.bf16.msra.mxu0 0
        %2365 = vmatprep.subr.bf16.mxu0 0
        %2366 = vmatpush1.bf16.msra.mxu0 0
        %2367 = vmatprep.subr.bf16.mxu0 %v2336
        %2368 = vmatpush1.bf16.msra.mxu0 %v2335
        %2369 = vmatprep.subr.bf16.mxu0 %v2332
        %2370 = vmatpush1.bf16.msra.mxu0 %v2331
        %2371 = vmatprep.subr.bf16.mxu0 0
        %2372 = vmatpush2.bf16.msra.mxu0 0
        %2373 = vmatprep.subr.bf16.mxu0 0
        %2374 = vmatpush2.bf16.msra.mxu0 0
        %2375 = vmatprep.subr.bf16.mxu0 0
        %2376 = vmatpush2.bf16.msra.mxu0 0
        %2377 = vmatprep.subr.bf16.mxu0 0
        %2378 = vmatpush2.bf16.msra.mxu0 0
        %2379 = vmatprep.subr.bf16.mxu0 0
        %2380 = vmatpush2.bf16.msra.mxu0 0
        %2381 = vmatprep.subr.bf16.mxu0 0
        %2382 = vmatpush2.bf16.msra.mxu0 0
        %2383 = vmatprep.subr.bf16.mxu0 0
        %2384 = vmatpush2.bf16.msra.mxu0 0
        %2385 = vmatprep.subr.bf16.mxu0 0
        %2386 = vmatpush2.bf16.msra.mxu0 0
        %2387 = vmatprep.mubr.bf16.mxu0 0
        %2388 = vmatmul.mubr.bf16.gmra.mxu0 %v2350
        %v2389 = vpop.f32.mrf.mxu0
        %v2390 = vadd.f32 0.0, %v2389
        %v2391 = vpop.f32.mrf.mxu0
        %v2392 = vadd.f32 0.0, %v2391
        %v2393 = vpop.f32.mrf.mxu0
        %v2394 = vadd.f32 0.0, %v2393
        %v2395 = vpop.f32.mrf.mxu0
        %v2396 = vadd.f32 0.0, %v2395
        %2397 = vmatprep.mubr.bf16.mxu0 0
        %2398 = vmatmul.mubr.bf16.gmra.mxu0 %v2353
        %v2399 = vpop.f32.mrf.mxu0
        %v2400 = vadd.f32 0.0, %v2399
        %v2401 = vpop.f32.mrf.mxu0
        %v2402 = vadd.f32 0.0, %v2401
        %v2403 = vpop.f32.mrf.mxu0
        %v2404 = vadd.f32 0.0, %v2403
        %v2405 = vpop.f32.mrf.mxu0
        %v2406 = vadd.f32 0.0, %v2405
        %2407 = vdwg.mxu0
        %2408 = vmatprep.subr.bf16.mxu0 0
        %2409 = vmatpush1.bf16.msra.mxu0 0
        %2410 = vmatprep.subr.bf16.mxu0 0
        %2411 = vmatpush1.bf16.msra.mxu0 0
        %2412 = vmatprep.subr.bf16.mxu0 0
        %2413 = vmatpush1.bf16.msra.mxu0 0
        %2414 = vmatprep.subr.bf16.mxu0 0
        %2415 = vmatpush1.bf16.msra.mxu0 0
        %2416 = vmatprep.subr.bf16.mxu0 0
        %2417 = vmatpush1.bf16.msra.mxu0 0
        %2418 = vmatprep.subr.bf16.mxu0 0
        %2419 = vmatpush1.bf16.msra.mxu0 0
        %2420 = vmatprep.subr.bf16.mxu0 %v2338
        %2421 = vmatpush1.bf16.msra.mxu0 %v2337
        %2422 = vmatprep.subr.bf16.mxu0 %v2334
        %2423 = vmatpush1.bf16.msra.mxu0 %v2333
        %2424 = vmatprep.subr.bf16.mxu0 0
        %2425 = vmatpush2.bf16.msra.mxu0 0
        %2426 = vmatprep.subr.bf16.mxu0 0
        %2427 = vmatpush2.bf16.msra.mxu0 0
        %2428 = vmatprep.subr.bf16.mxu0 0
        %2429 = vmatpush2.bf16.msra.mxu0 0
        %2430 = vmatprep.subr.bf16.mxu0 0
        %2431 = vmatpush2.bf16.msra.mxu0 0
        %2432 = vmatprep.subr.bf16.mxu0 0
        %2433 = vmatpush2.bf16.msra.mxu0 0
        %2434 = vmatprep.subr.bf16.mxu0 0
        %2435 = vmatpush2.bf16.msra.mxu0 0
        %2436 = vmatprep.subr.bf16.mxu0 0
        %2437 = vmatpush2.bf16.msra.mxu0 0
        %2438 = vmatprep.subr.bf16.mxu0 0
        %2439 = vmatpush2.bf16.msra.mxu0 0
        %2440 = vmatprep.mubr.bf16.mxu0 0
        %2441 = vmatmul.mubr.bf16.gmra.mxu0 %v2350
        %v2442 = vpop.f32.mrf.mxu0
        %v2443 = vadd.f32 0.0, %v2442
        %v2444 = vpop.f32.mrf.mxu0
        %v2445 = vadd.f32 0.0, %v2444
        %v2446 = vpop.f32.mrf.mxu0
        %v2447 = vadd.f32 0.0, %v2446
        %v2448 = vpop.f32.mrf.mxu0
        %v2449 = vadd.f32 0.0, %v2448
        %2450 = vmatprep.mubr.bf16.mxu0 0
        %2451 = vmatmul.mubr.bf16.gmra.mxu0 %v2353
        %v2452 = vpop.f32.mrf.mxu0
        %v2453 = vadd.f32 0.0, %v2452
        %v2454 = vpop.f32.mrf.mxu0
        %v2455 = vadd.f32 0.0, %v2454
        %v2456 = vpop.f32.mrf.mxu0
        %v2457 = vadd.f32 0.0, %v2456
        %v2458 = vpop.f32.mrf.mxu0
        %v2459 = vadd.f32 0.0, %v2458
        %2460 = vdwg.mxu0
        %v2461 = vadd.f32 %v2188, %v2390
        %v2462 = vadd.f32 %v2190, %v2392
        %v2463 = vadd.f32 %v2241, %v2443
        %v2464 = vadd.f32 %v2243, %v2445
        %v2465 = vadd.f32 %v2192, %v2394
        %v2466 = vadd.f32 %v2194, %v2396
        %v2467 = vadd.f32 %v2245, %v2447
        %v2468 = vadd.f32 %v2247, %v2449
        %v2469 = vadd.f32 %v2198, %v2400
        %v2470 = vadd.f32 %v2200, %v2402
        %v2471 = vadd.f32 %v2251, %v2453
        %v2472 = vadd.f32 %v2253, %v2455
        %v2473 = vadd.f32 %v2202, %v2404
        %v2474 = vadd.f32 %v2204, %v2406
        %v2475 = vadd.f32 %v2255, %v2457
        %v2476 = vadd.f32 %v2257, %v2459
        %s2477 = smul.u32 %s1166, 32
        %s2478 = scalar_lea.vmem %s7, %s2477
        %v2479 = vld [vmem:[%s2478] sm:$0xff]
        %v2480 = vld [vmem:[%s2478 + $0x8] sm:$0xff]
        %v2481 = vld [vmem:[%s2478 + $0x10] sm:$0xff]
        %v2482 = vld [vmem:[%s2478 + $0x18] sm:$0xff]
        %2484 = vset.pattern.permute.xlu0 0
        %2485 = vperm.xlu0 %2484, %v2479
        %v2486 = vpop.permute.xlu0 %2485
        %2489 = vset.pattern.permute.xlu0 0
        %2490 = vperm.xlu0 %2489, %v2480
        %v2491 = vpop.permute.xlu0 %2490
        %2494 = vset.pattern.permute.xlu0 0
        %2495 = vperm.xlu0 %2494, %v2481
        %v2496 = vpop.permute.xlu0 %2495
        %2499 = vset.pattern.permute.xlu0 0
        %2500 = vperm.xlu0 %2499, %v2482
        %v2501 = vpop.permute.xlu0 %2500
        %v2503 = vadd.f32 %v2461, %v2486
        %v2504 = vadd.f32 %v2462, %v2486
        %v2505 = vadd.f32 %v2463, %v2486
        %v2506 = vadd.f32 %v2464, %v2486
        %v2507 = vadd.f32 %v2465, %v2491
        %v2508 = vadd.f32 %v2466, %v2491
        %v2509 = vadd.f32 %v2467, %v2491
        %v2510 = vadd.f32 %v2468, %v2491
        %v2511 = vadd.f32 %v2469, %v2496
        %v2512 = vadd.f32 %v2470, %v2496
        %v2513 = vadd.f32 %v2471, %v2496
        %v2514 = vadd.f32 %v2472, %v2496
        %v2515 = vadd.f32 %v2473, %v2501
        %v2516 = vadd.f32 %v2474, %v2501
        %v2517 = vadd.f32 %v2475, %v2501
        %v2518 = vadd.f32 %v2476, %v2501
        %v2519 = vmul.f32 %v2503, 0.2
        %v2520 = vmul.f32 %v2504, 0.2
        %v2521 = vmul.f32 %v2505, 0.2
        %v2522 = vmul.f32 %v2506, 0.2
        %v2523 = vmul.f32 %v2507, 0.2
        %v2524 = vmul.f32 %v2508, 0.2
        %v2525 = vmul.f32 %v2509, 0.2
        %v2526 = vmul.f32 %v2510, 0.2
        %v2527 = vmul.f32 %v2511, 0.2
        %v2528 = vmul.f32 %v2512, 0.2
        %v2529 = vmul.f32 %v2513, 0.2
        %v2530 = vmul.f32 %v2514, 0.2
        %v2531 = vmul.f32 %v2515, 0.2
        %v2532 = vmul.f32 %v2516, 0.2
        %v2533 = vmul.f32 %v2517, 0.2
        %v2534 = vmul.f32 %v2518, 0.2
        %v2535 = vmax.f32 %v2503, %v2519
        %v2536 = vmax.f32 %v2504, %v2520
        %v2537 = vmax.f32 %v2505, %v2521
        %v2538 = vmax.f32 %v2506, %v2522
        %v2539 = vmax.f32 %v2507, %v2523
        %v2540 = vmax.f32 %v2508, %v2524
        %v2541 = vmax.f32 %v2509, %v2525
        %v2542 = vmax.f32 %v2510, %v2526
        %v2543 = vmax.f32 %v2511, %v2527
        %v2544 = vmax.f32 %v2512, %v2528
        %v2545 = vmax.f32 %v2513, %v2529
        %v2546 = vmax.f32 %v2514, %v2530
        %v2547 = vmax.f32 %v2515, %v2531
        %v2548 = vmax.f32 %v2516, %v2532
        %v2549 = vmax.f32 %v2517, %v2533
        %v2550 = vmax.f32 %v2518, %v2534
        %v2551 = vadd.f32 %v1903, %v2535
        %v2552 = vadd.f32 %v1904, %v2536
        %v2553 = vadd.f32 %v1905, %v2537
        %v2554 = vadd.f32 %v1906, %v2538
        %v2555 = vadd.f32 %v1907, %v2539
        %v2556 = vadd.f32 %v1908, %v2540
        %v2557 = vadd.f32 %v1909, %v2541
        %v2558 = vadd.f32 %v1910, %v2542
        %v2559 = vadd.f32 %v1911, %v2543
        %v2560 = vadd.f32 %v1912, %v2544
        %v2561 = vadd.f32 %v1913, %v2545
        %v2562 = vadd.f32 %v1914, %v2546
        %v2563 = vadd.f32 %v1915, %v2547
        %v2564 = vadd.f32 %v1916, %v2548
        %v2565 = vadd.f32 %v1917, %v2549
        %v2566 = vadd.f32 %v1918, %v2550
        %s2567 = sadd.s32 %s1919, 3
        %s2568 = smul.u32 %s2567, 4
        %s2569 = smul.addr %s2568, 4
        %s2570 = scalar_lea.vmem %s6, %s2569
        %v2571 = vld [vmem:[%s2570] sm:$0xf]
        %v2572 = vld [vmem:[%s2570 + $0x4] sm:$0xf]
        %v2573 = vld [vmem:[%s2570 + $0x8] sm:$0xf]
        %v2574 = vld [vmem:[%s2570 + $0xc] sm:$0xf]
        %2575 = vrot.lane.b32.xlu0 %v2551, 1
        %v2576 = vpop.permute.xlu0 %2575
        %2577 = vrot.lane.b32.xlu0 %v2555, 1
        %v2578 = vpop.permute.xlu0 %2577
        %2579 = vrot.lane.b32.xlu0 %v2559, 1
        %v2580 = vpop.permute.xlu0 %2579
        %2581 = vrot.lane.b32.xlu0 %v2563, 1
        %v2582 = vpop.permute.xlu0 %2581
        %2583 = vrot.lane.b32.xlu0 %v2552, 1
        %v2584 = vpop.permute.xlu0 %2583
        %2585 = vrot.lane.b32.xlu0 %v2556, 1
        %v2586 = vpop.permute.xlu0 %2585
        %2587 = vrot.lane.b32.xlu0 %v2560, 1
        %v2588 = vpop.permute.xlu0 %2587
        %2589 = vrot.lane.b32.xlu0 %v2564, 1
        %v2590 = vpop.permute.xlu0 %2589
        %2591 = vrot.lane.b32.xlu0 %v2553, 1
        %v2592 = vpop.permute.xlu0 %2591
        %2593 = vrot.lane.b32.xlu0 %v2557, 1
        %v2594 = vpop.permute.xlu0 %2593
        %2595 = vrot.lane.b32.xlu0 %v2561, 1
        %v2596 = vpop.permute.xlu0 %2595
        %2597 = vrot.lane.b32.xlu0 %v2565, 1
        %v2598 = vpop.permute.xlu0 %2597
        %2599 = vrot.lane.b32.xlu0 %v2554, 1
        %v2600 = vpop.permute.xlu0 %2599
        %2601 = vrot.lane.b32.xlu0 %v2558, 1
        %v2602 = vpop.permute.xlu0 %2601
        %2603 = vrot.lane.b32.xlu0 %v2562, 1
        %v2604 = vpop.permute.xlu0 %2603
        %2605 = vrot.lane.b32.xlu0 %v2566, 1
        %v2606 = vpop.permute.xlu0 %2605
        %v2607 = vsel %vm687, %v2592, %v2600
        %v2608 = vsel %vm687, %v2594, %v2602
        %v2609 = vsel %vm687, %v2596, %v2604
        %v2610 = vsel %vm687, %v2598, %v2606
        %v2611 = vsel %vm687, %v2584, %v2592
        %v2612 = vsel %vm687, %v2586, %v2594
        %v2613 = vsel %vm687, %v2588, %v2596
        %v2614 = vsel %vm687, %v2590, %v2598
        %v2615 = vsel %vm687, %v2576, %v2584
        %v2616 = vsel %vm687, %v2578, %v2586
        %v2617 = vsel %vm687, %v2580, %v2588
        %v2618 = vsel %vm687, %v2582, %v2590
        %v2619 = vsel %vm687, %v2600, %v2576
        %v2620 = vsel %vm687, %v2602, %v2578
        %v2621 = vsel %vm687, %v2604, %v2580
        %v2622 = vsel %vm687, %v2606, %v2582
        %v2623 = vmul.f32 %v2619, %v515
        %v2624 = vmul.f32 %v2615, %v516
        %v2625 = vmul.f32 %v2611, %v517
        %v2626 = vmul.f32 %v2607, %v518
        %v2627 = vmul.f32 %v2620, %v515
        %v2628 = vmul.f32 %v2616, %v516
        %v2629 = vmul.f32 %v2612, %v517
        %v2630 = vmul.f32 %v2608, %v518
        %v2631 = vmul.f32 %v2621, %v515
        %v2632 = vmul.f32 %v2617, %v516
        %v2633 = vmul.f32 %v2613, %v517
        %v2634 = vmul.f32 %v2609, %v518
        %v2635 = vmul.f32 %v2622, %v515
        %v2636 = vmul.f32 %v2618, %v516
        %v2637 = vmul.f32 %v2614, %v517
        %v2638 = vmul.f32 %v2610, %v518
        %v2639 = vpack.c.bf16 %v2627, %v2623
        %v2640 = vpack.c.bf16 %v2628, %v2624
        %v2641 = vpack.c.bf16 %v2629, %v2625
        %v2642 = vpack.c.bf16 %v2630, %v2626
        %v2643 = vpack.c.bf16 %v2635, %v2631
        %v2644 = vpack.c.bf16 %v2636, %v2632
        %v2645 = vpack.c.bf16 %v2637, %v2633
        %v2646 = vpack.c.bf16 %v2638, %v2634
        %s2647 = sadd.s32 %s1919, 4
        %s2648 = smul.u32 %s2647, 4
        %s2649 = smul.addr %s2648, 4
        %s2650 = scalar_lea.vmem %s6, %s2649
        %v2651 = vld [vmem:[%s2650] sm:$0xf]
        %v2652 = vld [vmem:[%s2650 + $0x4] sm:$0xf]
        %v2653 = vld [vmem:[%s2650 + $0x8] sm:$0xf]
        %v2654 = vld [vmem:[%s2650 + $0xc] sm:$0xf]
        %v2655 = vpack.c.bf16 %v2555, %v2551
        %v2656 = vpack.c.bf16 %v2556, %v2552
        %v2657 = vpack.c.bf16 %v2557, %v2553
        %v2658 = vpack.c.bf16 %v2558, %v2554
        %v2659 = vpack.c.bf16 %v2563, %v2559
        %v2660 = vpack.c.bf16 %v2564, %v2560
        %v2661 = vpack.c.bf16 %v2565, %v2561
        %v2662 = vpack.c.bf16 %v2566, %v2562
        %v2667 = vunpack.c.l.b16 %v2651
        %v2668 = vunpack.c.l.b16 %v2652
        %v2669 = vunpack.c.l.b16 %v2653
        %v2670 = vunpack.c.l.b16 %v2654
        %v2671 = vpack.c.b16 %v2668, %v2667
        %v2672 = vpack.c.b16 %v2670, %v2669
        %v2674 = vsel %vm1256, %v2671, 0
        %v2677 = vsel %vm1256, %v2672, 0
        %2679 = vmatprep.subr.bf16.mxu0 0
        %2680 = vmatpush1.bf16.msra.mxu0 0
        %2681 = vmatprep.subr.bf16.mxu0 0
        %2682 = vmatpush1.bf16.msra.mxu0 0
        %2683 = vmatprep.subr.bf16.mxu0 0
        %2684 = vmatpush1.bf16.msra.mxu0 0
        %2685 = vmatprep.subr.bf16.mxu0 0
        %2686 = vmatpush1.bf16.msra.mxu0 0
        %2687 = vmatprep.subr.bf16.mxu0 0
        %2688 = vmatpush1.bf16.msra.mxu0 0
        %2689 = vmatprep.subr.bf16.mxu0 0
        %2690 = vmatpush1.bf16.msra.mxu0 0
        %2691 = vmatprep.subr.bf16.mxu0 %v2660
        %2692 = vmatpush1.bf16.msra.mxu0 %v2659
        %2693 = vmatprep.subr.bf16.mxu0 %v2656
        %2694 = vmatpush1.bf16.msra.mxu0 %v2655
        %2695 = vmatprep.subr.bf16.mxu0 0
        %2696 = vmatpush2.bf16.msra.mxu0 0
        %2697 = vmatprep.subr.bf16.mxu0 0
        %2698 = vmatpush2.bf16.msra.mxu0 0
        %2699 = vmatprep.subr.bf16.mxu0 0
        %2700 = vmatpush2.bf16.msra.mxu0 0
        %2701 = vmatprep.subr.bf16.mxu0 0
        %2702 = vmatpush2.bf16.msra.mxu0 0
        %2703 = vmatprep.subr.bf16.mxu0 0
        %2704 = vmatpush2.bf16.msra.mxu0 0
        %2705 = vmatprep.subr.bf16.mxu0 0
        %2706 = vmatpush2.bf16.msra.mxu0 0
        %2707 = vmatprep.subr.bf16.mxu0 0
        %2708 = vmatpush2.bf16.msra.mxu0 0
        %2709 = vmatprep.subr.bf16.mxu0 0
        %2710 = vmatpush2.bf16.msra.mxu0 0
        %2711 = vmatprep.mubr.bf16.mxu0 0
        %2712 = vmatmul.mubr.bf16.gmra.mxu0 %v2674
        %v2713 = vpop.f32.mrf.mxu0
        %v2714 = vadd.f32 0.0, %v2713
        %v2715 = vpop.f32.mrf.mxu0
        %v2716 = vadd.f32 0.0, %v2715
        %v2717 = vpop.f32.mrf.mxu0
        %v2718 = vadd.f32 0.0, %v2717
        %v2719 = vpop.f32.mrf.mxu0
        %v2720 = vadd.f32 0.0, %v2719
        %2721 = vmatprep.mubr.bf16.mxu0 0
        %2722 = vmatmul.mubr.bf16.gmra.mxu0 %v2677
        %v2723 = vpop.f32.mrf.mxu0
        %v2724 = vadd.f32 0.0, %v2723
        %v2725 = vpop.f32.mrf.mxu0
        %v2726 = vadd.f32 0.0, %v2725
        %v2727 = vpop.f32.mrf.mxu0
        %v2728 = vadd.f32 0.0, %v2727
        %v2729 = vpop.f32.mrf.mxu0
        %v2730 = vadd.f32 0.0, %v2729
        %2731 = vdwg.mxu0
        %2732 = vmatprep.subr.bf16.mxu0 0
        %2733 = vmatpush1.bf16.msra.mxu0 0
        %2734 = vmatprep.subr.bf16.mxu0 0
        %2735 = vmatpush1.bf16.msra.mxu0 0
        %2736 = vmatprep.subr.bf16.mxu0 0
        %2737 = vmatpush1.bf16.msra.mxu0 0
        %2738 = vmatprep.subr.bf16.mxu0 0
        %2739 = vmatpush1.bf16.msra.mxu0 0
        %2740 = vmatprep.subr.bf16.mxu0 0
        %2741 = vmatpush1.bf16.msra.mxu0 0
        %2742 = vmatprep.subr.bf16.mxu0 0
        %2743 = vmatpush1.bf16.msra.mxu0 0
        %2744 = vmatprep.subr.bf16.mxu0 %v2662
        %2745 = vmatpush1.bf16.msra.mxu0 %v2661
        %2746 = vmatprep.subr.bf16.mxu0 %v2658
        %2747 = vmatpush1.bf16.msra.mxu0 %v2657
        %2748 = vmatprep.subr.bf16.mxu0 0
        %2749 = vmatpush2.bf16.msra.mxu0 0
        %2750 = vmatprep.subr.bf16.mxu0 0
        %2751 = vmatpush2.bf16.msra.mxu0 0
        %2752 = vmatprep.subr.bf16.mxu0 0
        %2753 = vmatpush2.bf16.msra.mxu0 0
        %2754 = vmatprep.subr.bf16.mxu0 0
        %2755 = vmatpush2.bf16.msra.mxu0 0
        %2756 = vmatprep.subr.bf16.mxu0 0
        %2757 = vmatpush2.bf16.msra.mxu0 0
        %2758 = vmatprep.subr.bf16.mxu0 0
        %2759 = vmatpush2.bf16.msra.mxu0 0
        %2760 = vmatprep.subr.bf16.mxu0 0
        %2761 = vmatpush2.bf16.msra.mxu0 0
        %2762 = vmatprep.subr.bf16.mxu0 0
        %2763 = vmatpush2.bf16.msra.mxu0 0
        %2764 = vmatprep.mubr.bf16.mxu0 0
        %2765 = vmatmul.mubr.bf16.gmra.mxu0 %v2674
        %v2766 = vpop.f32.mrf.mxu0
        %v2767 = vadd.f32 0.0, %v2766
        %v2768 = vpop.f32.mrf.mxu0
        %v2769 = vadd.f32 0.0, %v2768
        %v2770 = vpop.f32.mrf.mxu0
        %v2771 = vadd.f32 0.0, %v2770
        %v2772 = vpop.f32.mrf.mxu0
        %v2773 = vadd.f32 0.0, %v2772
        %2774 = vmatprep.mubr.bf16.mxu0 0
        %2775 = vmatmul.mubr.bf16.gmra.mxu0 %v2677
        %v2776 = vpop.f32.mrf.mxu0
        %v2777 = vadd.f32 0.0, %v2776
        %v2778 = vpop.f32.mrf.mxu0
        %v2779 = vadd.f32 0.0, %v2778
        %v2780 = vpop.f32.mrf.mxu0
        %v2781 = vadd.f32 0.0, %v2780
        %v2782 = vpop.f32.mrf.mxu0
        %v2783 = vadd.f32 0.0, %v2782
        %2784 = vdwg.mxu0
        %v2789 = vunpack.c.l.b16 %v2571
        %v2790 = vunpack.c.l.b16 %v2572
        %v2791 = vunpack.c.l.b16 %v2573
        %v2792 = vunpack.c.l.b16 %v2574
        %v2793 = vpack.c.b16 %v2790, %v2789
        %v2794 = vpack.c.b16 %v2792, %v2791
        %v2796 = vsel %vm1256, %v2793, 0
        %v2799 = vsel %vm1256, %v2794, 0
        %2801 = vmatprep.subr.bf16.mxu0 0
        %2802 = vmatpush1.bf16.msra.mxu0 0
        %2803 = vmatprep.subr.bf16.mxu0 0
        %2804 = vmatpush1.bf16.msra.mxu0 0
        %2805 = vmatprep.subr.bf16.mxu0 0
        %2806 = vmatpush1.bf16.msra.mxu0 0
        %2807 = vmatprep.subr.bf16.mxu0 0
        %2808 = vmatpush1.bf16.msra.mxu0 0
        %2809 = vmatprep.subr.bf16.mxu0 0
        %2810 = vmatpush1.bf16.msra.mxu0 0
        %2811 = vmatprep.subr.bf16.mxu0 0
        %2812 = vmatpush1.bf16.msra.mxu0 0
        %2813 = vmatprep.subr.bf16.mxu0 %v2644
        %2814 = vmatpush1.bf16.msra.mxu0 %v2643
        %2815 = vmatprep.subr.bf16.mxu0 %v2640
        %2816 = vmatpush1.bf16.msra.mxu0 %v2639
        %2817 = vmatprep.subr.bf16.mxu0 0
        %2818 = vmatpush2.bf16.msra.mxu0 0
        %2819 = vmatprep.subr.bf16.mxu0 0
        %2820 = vmatpush2.bf16.msra.mxu0 0
        %2821 = vmatprep.subr.bf16.mxu0 0
        %2822 = vmatpush2.bf16.msra.mxu0 0
        %2823 = vmatprep.subr.bf16.mxu0 0
        %2824 = vmatpush2.bf16.msra.mxu0 0
        %2825 = vmatprep.subr.bf16.mxu0 0
        %2826 = vmatpush2.bf16.msra.mxu0 0
        %2827 = vmatprep.subr.bf16.mxu0 0
        %2828 = vmatpush2.bf16.msra.mxu0 0
        %2829 = vmatprep.subr.bf16.mxu0 0
        %2830 = vmatpush2.bf16.msra.mxu0 0
        %2831 = vmatprep.subr.bf16.mxu0 0
        %2832 = vmatpush2.bf16.msra.mxu0 0
        %2833 = vmatprep.mubr.bf16.mxu0 0
        %2834 = vmatmul.mubr.bf16.gmra.mxu0 %v2796
        %v2835 = vpop.f32.mrf.mxu0
        %v2836 = vadd.f32 %v2714, %v2835
        %v2837 = vpop.f32.mrf.mxu0
        %v2838 = vadd.f32 %v2716, %v2837
        %v2839 = vpop.f32.mrf.mxu0
        %v2840 = vadd.f32 %v2718, %v2839
        %v2841 = vpop.f32.mrf.mxu0
        %v2842 = vadd.f32 %v2720, %v2841
        %2843 = vmatprep.mubr.bf16.mxu0 0
        %2844 = vmatmul.mubr.bf16.gmra.mxu0 %v2799
        %v2845 = vpop.f32.mrf.mxu0
        %v2846 = vadd.f32 %v2724, %v2845
        %v2847 = vpop.f32.mrf.mxu0
        %v2848 = vadd.f32 %v2726, %v2847
        %v2849 = vpop.f32.mrf.mxu0
        %v2850 = vadd.f32 %v2728, %v2849
        %v2851 = vpop.f32.mrf.mxu0
        %v2852 = vadd.f32 %v2730, %v2851
        %2853 = vdwg.mxu0
        %2854 = vmatprep.subr.bf16.mxu0 0
        %2855 = vmatpush1.bf16.msra.mxu0 0
        %2856 = vmatprep.subr.bf16.mxu0 0
        %2857 = vmatpush1.bf16.msra.mxu0 0
        %2858 = vmatprep.subr.bf16.mxu0 0
        %2859 = vmatpush1.bf16.msra.mxu0 0
        %2860 = vmatprep.subr.bf16.mxu0 0
        %2861 = vmatpush1.bf16.msra.mxu0 0
        %2862 = vmatprep.subr.bf16.mxu0 0
        %2863 = vmatpush1.bf16.msra.mxu0 0
        %2864 = vmatprep.subr.bf16.mxu0 0
        %2865 = vmatpush1.bf16.msra.mxu0 0
        %2866 = vmatprep.subr.bf16.mxu0 %v2646
        %2867 = vmatpush1.bf16.msra.mxu0 %v2645
        %2868 = vmatprep.subr.bf16.mxu0 %v2642
        %2869 = vmatpush1.bf16.msra.mxu0 %v2641
        %2870 = vmatprep.subr.bf16.mxu0 0
        %2871 = vmatpush2.bf16.msra.mxu0 0
        %2872 = vmatprep.subr.bf16.mxu0 0
        %2873 = vmatpush2.bf16.msra.mxu0 0
        %2874 = vmatprep.subr.bf16.mxu0 0
        %2875 = vmatpush2.bf16.msra.mxu0 0
        %2876 = vmatprep.subr.bf16.mxu0 0
        %2877 = vmatpush2.bf16.msra.mxu0 0
        %2878 = vmatprep.subr.bf16.mxu0 0
        %2879 = vmatpush2.bf16.msra.mxu0 0
        %2880 = vmatprep.subr.bf16.mxu0 0
        %2881 = vmatpush2.bf16.msra.mxu0 0
        %2882 = vmatprep.subr.bf16.mxu0 0
        %2883 = vmatpush2.bf16.msra.mxu0 0
        %2884 = vmatprep.subr.bf16.mxu0 0
        %2885 = vmatpush2.bf16.msra.mxu0 0
        %2886 = vmatprep.mubr.bf16.mxu0 0
        %2887 = vmatmul.mubr.bf16.gmra.mxu0 %v2796
        %v2888 = vpop.f32.mrf.mxu0
        %v2889 = vadd.f32 %v2767, %v2888
        %v2890 = vpop.f32.mrf.mxu0
        %v2891 = vadd.f32 %v2769, %v2890
        %v2892 = vpop.f32.mrf.mxu0
        %v2893 = vadd.f32 %v2771, %v2892
        %v2894 = vpop.f32.mrf.mxu0
        %v2895 = vadd.f32 %v2773, %v2894
        %2896 = vmatprep.mubr.bf16.mxu0 0
        %2897 = vmatmul.mubr.bf16.gmra.mxu0 %v2799
        %v2898 = vpop.f32.mrf.mxu0
        %v2899 = vadd.f32 %v2777, %v2898
        %v2900 = vpop.f32.mrf.mxu0
        %v2901 = vadd.f32 %v2779, %v2900
        %v2902 = vpop.f32.mrf.mxu0
        %v2903 = vadd.f32 %v2781, %v2902
        %v2904 = vpop.f32.mrf.mxu0
        %v2905 = vadd.f32 %v2783, %v2904
        %2906 = vdwg.mxu0
        %s2907 = sadd.s32 %s1919, 5
        %s2908 = smul.u32 %s2907, 4
        %s2909 = smul.addr %s2908, 4
        %s2910 = scalar_lea.vmem %s6, %s2909
        %v2911 = vld [vmem:[%s2910] sm:$0xf]
        %v2912 = vld [vmem:[%s2910 + $0x4] sm:$0xf]
        %v2913 = vld [vmem:[%s2910 + $0x8] sm:$0xf]
        %v2914 = vld [vmem:[%s2910 + $0xc] sm:$0xf]
        %2915 = vrot.lane.b32.xlu0 %v2551, 127
        %v2916 = vpop.permute.xlu0 %2915
        %2917 = vrot.lane.b32.xlu0 %v2555, 127
        %v2918 = vpop.permute.xlu0 %2917
        %2919 = vrot.lane.b32.xlu0 %v2559, 127
        %v2920 = vpop.permute.xlu0 %2919
        %2921 = vrot.lane.b32.xlu0 %v2563, 127
        %v2922 = vpop.permute.xlu0 %2921
        %2923 = vrot.lane.b32.xlu0 %v2552, 127
        %v2924 = vpop.permute.xlu0 %2923
        %2925 = vrot.lane.b32.xlu0 %v2556, 127
        %v2926 = vpop.permute.xlu0 %2925
        %2927 = vrot.lane.b32.xlu0 %v2560, 127
        %v2928 = vpop.permute.xlu0 %2927
        %2929 = vrot.lane.b32.xlu0 %v2564, 127
        %v2930 = vpop.permute.xlu0 %2929
        %2931 = vrot.lane.b32.xlu0 %v2553, 127
        %v2932 = vpop.permute.xlu0 %2931
        %2933 = vrot.lane.b32.xlu0 %v2557, 127
        %v2934 = vpop.permute.xlu0 %2933
        %2935 = vrot.lane.b32.xlu0 %v2561, 127
        %v2936 = vpop.permute.xlu0 %2935
        %2937 = vrot.lane.b32.xlu0 %v2565, 127
        %v2938 = vpop.permute.xlu0 %2937
        %2939 = vrot.lane.b32.xlu0 %v2554, 127
        %v2940 = vpop.permute.xlu0 %2939
        %2941 = vrot.lane.b32.xlu0 %v2558, 127
        %v2942 = vpop.permute.xlu0 %2941
        %2943 = vrot.lane.b32.xlu0 %v2562, 127
        %v2944 = vpop.permute.xlu0 %2943
        %2945 = vrot.lane.b32.xlu0 %v2566, 127
        %v2946 = vpop.permute.xlu0 %2945
        %v2947 = vsel %vm872, %v2932, %v2940
        %v2948 = vsel %vm872, %v2934, %v2942
        %v2949 = vsel %vm872, %v2936, %v2944
        %v2950 = vsel %vm872, %v2938, %v2946
        %v2951 = vsel %vm872, %v2924, %v2932
        %v2952 = vsel %vm872, %v2926, %v2934
        %v2953 = vsel %vm872, %v2928, %v2936
        %v2954 = vsel %vm872, %v2930, %v2938
        %v2955 = vsel %vm872, %v2916, %v2924
        %v2956 = vsel %vm872, %v2918, %v2926
        %v2957 = vsel %vm872, %v2920, %v2928
        %v2958 = vsel %vm872, %v2922, %v2930
        %v2959 = vsel %vm872, %v2940, %v2916
        %v2960 = vsel %vm872, %v2942, %v2918
        %v2961 = vsel %vm872, %v2944, %v2920
        %v2962 = vsel %vm872, %v2946, %v2922
        %v2963 = vmul.f32 %v2955, %v539
        %v2964 = vmul.f32 %v2951, %v540
        %v2965 = vmul.f32 %v2947, %v541
        %v2966 = vmul.f32 %v2959, %v542
        %v2967 = vmul.f32 %v2956, %v539
        %v2968 = vmul.f32 %v2952, %v540
        %v2969 = vmul.f32 %v2948, %v541
        %v2970 = vmul.f32 %v2960, %v542
        %v2971 = vmul.f32 %v2957, %v539
        %v2972 = vmul.f32 %v2953, %v540
        %v2973 = vmul.f32 %v2949, %v541
        %v2974 = vmul.f32 %v2961, %v542
        %v2975 = vmul.f32 %v2958, %v539
        %v2976 = vmul.f32 %v2954, %v540
        %v2977 = vmul.f32 %v2950, %v541
        %v2978 = vmul.f32 %v2962, %v542
        %v2979 = vpack.c.bf16 %v2967, %v2963
        %v2980 = vpack.c.bf16 %v2968, %v2964
        %v2981 = vpack.c.bf16 %v2969, %v2965
        %v2982 = vpack.c.bf16 %v2970, %v2966
        %v2983 = vpack.c.bf16 %v2975, %v2971
        %v2984 = vpack.c.bf16 %v2976, %v2972
        %v2985 = vpack.c.bf16 %v2977, %v2973
        %v2986 = vpack.c.bf16 %v2978, %v2974
        %v2991 = vunpack.c.l.b16 %v2911
        %v2992 = vunpack.c.l.b16 %v2912
        %v2993 = vunpack.c.l.b16 %v2913
        %v2994 = vunpack.c.l.b16 %v2914
        %v2995 = vpack.c.b16 %v2992, %v2991
        %v2996 = vpack.c.b16 %v2994, %v2993
        %v2998 = vsel %vm1256, %v2995, 0
        %v3001 = vsel %vm1256, %v2996, 0
        %3003 = vmatprep.subr.bf16.mxu0 0
        %3004 = vmatpush1.bf16.msra.mxu0 0
        %3005 = vmatprep.subr.bf16.mxu0 0
        %3006 = vmatpush1.bf16.msra.mxu0 0
        %3007 = vmatprep.subr.bf16.mxu0 0
        %3008 = vmatpush1.bf16.msra.mxu0 0
        %3009 = vmatprep.subr.bf16.mxu0 0
        %3010 = vmatpush1.bf16.msra.mxu0 0
        %3011 = vmatprep.subr.bf16.mxu0 0
        %3012 = vmatpush1.bf16.msra.mxu0 0
        %3013 = vmatprep.subr.bf16.mxu0 0
        %3014 = vmatpush1.bf16.msra.mxu0 0
        %3015 = vmatprep.subr.bf16.mxu0 %v2984
        %3016 = vmatpush1.bf16.msra.mxu0 %v2983
        %3017 = vmatprep.subr.bf16.mxu0 %v2980
        %3018 = vmatpush1.bf16.msra.mxu0 %v2979
        %3019 = vmatprep.subr.bf16.mxu0 0
        %3020 = vmatpush2.bf16.msra.mxu0 0
        %3021 = vmatprep.subr.bf16.mxu0 0
        %3022 = vmatpush2.bf16.msra.mxu0 0
        %3023 = vmatprep.subr.bf16.mxu0 0
        %3024 = vmatpush2.bf16.msra.mxu0 0
        %3025 = vmatprep.subr.bf16.mxu0 0
        %3026 = vmatpush2.bf16.msra.mxu0 0
        %3027 = vmatprep.subr.bf16.mxu0 0
        %3028 = vmatpush2.bf16.msra.mxu0 0
        %3029 = vmatprep.subr.bf16.mxu0 0
        %3030 = vmatpush2.bf16.msra.mxu0 0
        %3031 = vmatprep.subr.bf16.mxu0 0
        %3032 = vmatpush2.bf16.msra.mxu0 0
        %3033 = vmatprep.subr.bf16.mxu0 0
        %3034 = vmatpush2.bf16.msra.mxu0 0
        %3035 = vmatprep.mubr.bf16.mxu0 0
        %3036 = vmatmul.mubr.bf16.gmra.mxu0 %v2998
        %v3037 = vpop.f32.mrf.mxu0
        %v3038 = vadd.f32 0.0, %v3037
        %v3039 = vpop.f32.mrf.mxu0
        %v3040 = vadd.f32 0.0, %v3039
        %v3041 = vpop.f32.mrf.mxu0
        %v3042 = vadd.f32 0.0, %v3041
        %v3043 = vpop.f32.mrf.mxu0
        %v3044 = vadd.f32 0.0, %v3043
        %3045 = vmatprep.mubr.bf16.mxu0 0
        %3046 = vmatmul.mubr.bf16.gmra.mxu0 %v3001
        %v3047 = vpop.f32.mrf.mxu0
        %v3048 = vadd.f32 0.0, %v3047
        %v3049 = vpop.f32.mrf.mxu0
        %v3050 = vadd.f32 0.0, %v3049
        %v3051 = vpop.f32.mrf.mxu0
        %v3052 = vadd.f32 0.0, %v3051
        %v3053 = vpop.f32.mrf.mxu0
        %v3054 = vadd.f32 0.0, %v3053
        %3055 = vdwg.mxu0
        %3056 = vmatprep.subr.bf16.mxu0 0
        %3057 = vmatpush1.bf16.msra.mxu0 0
        %3058 = vmatprep.subr.bf16.mxu0 0
        %3059 = vmatpush1.bf16.msra.mxu0 0
        %3060 = vmatprep.subr.bf16.mxu0 0
        %3061 = vmatpush1.bf16.msra.mxu0 0
        %3062 = vmatprep.subr.bf16.mxu0 0
        %3063 = vmatpush1.bf16.msra.mxu0 0
        %3064 = vmatprep.subr.bf16.mxu0 0
        %3065 = vmatpush1.bf16.msra.mxu0 0
        %3066 = vmatprep.subr.bf16.mxu0 0
        %3067 = vmatpush1.bf16.msra.mxu0 0
        %3068 = vmatprep.subr.bf16.mxu0 %v2986
        %3069 = vmatpush1.bf16.msra.mxu0 %v2985
        %3070 = vmatprep.subr.bf16.mxu0 %v2982
        %3071 = vmatpush1.bf16.msra.mxu0 %v2981
        %3072 = vmatprep.subr.bf16.mxu0 0
        %3073 = vmatpush2.bf16.msra.mxu0 0
        %3074 = vmatprep.subr.bf16.mxu0 0
        %3075 = vmatpush2.bf16.msra.mxu0 0
        %3076 = vmatprep.subr.bf16.mxu0 0
        %3077 = vmatpush2.bf16.msra.mxu0 0
        %3078 = vmatprep.subr.bf16.mxu0 0
        %3079 = vmatpush2.bf16.msra.mxu0 0
        %3080 = vmatprep.subr.bf16.mxu0 0
        %3081 = vmatpush2.bf16.msra.mxu0 0
        %3082 = vmatprep.subr.bf16.mxu0 0
        %3083 = vmatpush2.bf16.msra.mxu0 0
        %3084 = vmatprep.subr.bf16.mxu0 0
        %3085 = vmatpush2.bf16.msra.mxu0 0
        %3086 = vmatprep.subr.bf16.mxu0 0
        %3087 = vmatpush2.bf16.msra.mxu0 0
        %3088 = vmatprep.mubr.bf16.mxu0 0
        %3089 = vmatmul.mubr.bf16.gmra.mxu0 %v2998
        %v3090 = vpop.f32.mrf.mxu0
        %v3091 = vadd.f32 0.0, %v3090
        %v3092 = vpop.f32.mrf.mxu0
        %v3093 = vadd.f32 0.0, %v3092
        %v3094 = vpop.f32.mrf.mxu0
        %v3095 = vadd.f32 0.0, %v3094
        %v3096 = vpop.f32.mrf.mxu0
        %v3097 = vadd.f32 0.0, %v3096
        %3098 = vmatprep.mubr.bf16.mxu0 0
        %3099 = vmatmul.mubr.bf16.gmra.mxu0 %v3001
        %v3100 = vpop.f32.mrf.mxu0
        %v3101 = vadd.f32 0.0, %v3100
        %v3102 = vpop.f32.mrf.mxu0
        %v3103 = vadd.f32 0.0, %v3102
        %v3104 = vpop.f32.mrf.mxu0
        %v3105 = vadd.f32 0.0, %v3104
        %v3106 = vpop.f32.mrf.mxu0
        %v3107 = vadd.f32 0.0, %v3106
        %3108 = vdwg.mxu0
        %v3109 = vadd.f32 %v2836, %v3038
        %v3110 = vadd.f32 %v2838, %v3040
        %v3111 = vadd.f32 %v2889, %v3091
        %v3112 = vadd.f32 %v2891, %v3093
        %v3113 = vadd.f32 %v2840, %v3042
        %v3114 = vadd.f32 %v2842, %v3044
        %v3115 = vadd.f32 %v2893, %v3095
        %v3116 = vadd.f32 %v2895, %v3097
        %v3117 = vadd.f32 %v2846, %v3048
        %v3118 = vadd.f32 %v2848, %v3050
        %v3119 = vadd.f32 %v2899, %v3101
        %v3120 = vadd.f32 %v2901, %v3103
        %v3121 = vadd.f32 %v2850, %v3052
        %v3122 = vadd.f32 %v2852, %v3054
        %v3123 = vadd.f32 %v2903, %v3105
        %v3124 = vadd.f32 %v2905, %v3107
        %s3125 = smul.u32 %s1505, 32
        %s3126 = scalar_lea.vmem %s7, %s3125
        %v3127 = vld [vmem:[%s3126] sm:$0xff]
        %v3128 = vld [vmem:[%s3126 + $0x8] sm:$0xff]
        %v3129 = vld [vmem:[%s3126 + $0x10] sm:$0xff]
        %v3130 = vld [vmem:[%s3126 + $0x18] sm:$0xff]
        %3132 = vset.pattern.permute.xlu0 0
        %3133 = vperm.xlu0 %3132, %v3127
        %v3134 = vpop.permute.xlu0 %3133
        %3137 = vset.pattern.permute.xlu0 0
        %3138 = vperm.xlu0 %3137, %v3128
        %v3139 = vpop.permute.xlu0 %3138
        %3142 = vset.pattern.permute.xlu0 0
        %3143 = vperm.xlu0 %3142, %v3129
        %v3144 = vpop.permute.xlu0 %3143
        %3147 = vset.pattern.permute.xlu0 0
        %3148 = vperm.xlu0 %3147, %v3130
        %v3149 = vpop.permute.xlu0 %3148
        %v3151 = vadd.f32 %v3109, %v3134
        %v3152 = vadd.f32 %v3110, %v3134
        %v3153 = vadd.f32 %v3111, %v3134
        %v3154 = vadd.f32 %v3112, %v3134
        %v3155 = vadd.f32 %v3113, %v3139
        %v3156 = vadd.f32 %v3114, %v3139
        %v3157 = vadd.f32 %v3115, %v3139
        %v3158 = vadd.f32 %v3116, %v3139
        %v3159 = vadd.f32 %v3117, %v3144
        %v3160 = vadd.f32 %v3118, %v3144
        %v3161 = vadd.f32 %v3119, %v3144
        %v3162 = vadd.f32 %v3120, %v3144
        %v3163 = vadd.f32 %v3121, %v3149
        %v3164 = vadd.f32 %v3122, %v3149
        %v3165 = vadd.f32 %v3123, %v3149
        %v3166 = vadd.f32 %v3124, %v3149
        %v3167 = vmul.f32 %v3151, 0.2
        %v3168 = vmul.f32 %v3152, 0.2
        %v3169 = vmul.f32 %v3153, 0.2
        %v3170 = vmul.f32 %v3154, 0.2
        %v3171 = vmul.f32 %v3155, 0.2
        %v3172 = vmul.f32 %v3156, 0.2
        %v3173 = vmul.f32 %v3157, 0.2
        %v3174 = vmul.f32 %v3158, 0.2
        %v3175 = vmul.f32 %v3159, 0.2
        %v3176 = vmul.f32 %v3160, 0.2
        %v3177 = vmul.f32 %v3161, 0.2
        %v3178 = vmul.f32 %v3162, 0.2
        %v3179 = vmul.f32 %v3163, 0.2
        %v3180 = vmul.f32 %v3164, 0.2
        %v3181 = vmul.f32 %v3165, 0.2
        %v3182 = vmul.f32 %v3166, 0.2
        %v3183 = vmax.f32 %v3151, %v3167
        %v3184 = vmax.f32 %v3152, %v3168
        %v3185 = vmax.f32 %v3153, %v3169
        %v3186 = vmax.f32 %v3154, %v3170
        %v3187 = vmax.f32 %v3155, %v3171
        %v3188 = vmax.f32 %v3156, %v3172
        %v3189 = vmax.f32 %v3157, %v3173
        %v3190 = vmax.f32 %v3158, %v3174
        %v3191 = vmax.f32 %v3159, %v3175
        %v3192 = vmax.f32 %v3160, %v3176
        %v3193 = vmax.f32 %v3161, %v3177
        %v3194 = vmax.f32 %v3162, %v3178
        %v3195 = vmax.f32 %v3163, %v3179
        %v3196 = vmax.f32 %v3164, %v3180
        %v3197 = vmax.f32 %v3165, %v3181
        %v3198 = vmax.f32 %v3166, %v3182
        %v3199 = vadd.f32 %v2551, %v3183
        %v3200 = vadd.f32 %v2552, %v3184
        %v3201 = vadd.f32 %v2553, %v3185
        %v3202 = vadd.f32 %v2554, %v3186
        %v3203 = vadd.f32 %v2555, %v3187
        %v3204 = vadd.f32 %v2556, %v3188
        %v3205 = vadd.f32 %v2557, %v3189
        %v3206 = vadd.f32 %v2558, %v3190
        %v3207 = vadd.f32 %v2559, %v3191
        %v3208 = vadd.f32 %v2560, %v3192
        %v3209 = vadd.f32 %v2561, %v3193
        %v3210 = vadd.f32 %v2562, %v3194
        %v3211 = vadd.f32 %v2563, %v3195
        %v3212 = vadd.f32 %v2564, %v3196
        %v3213 = vadd.f32 %v2565, %v3197
        %v3214 = vadd.f32 %v2566, %v3198
        %s3215 = sadd.s32 %s1919, 6
        %s3216 = smul.u32 %s3215, 4
        %s3217 = smul.addr %s3216, 4
        %s3218 = scalar_lea.vmem %s6, %s3217
        %v3219 = vld [vmem:[%s3218] sm:$0xf]
        %v3220 = vld [vmem:[%s3218 + $0x4] sm:$0xf]
        %v3221 = vld [vmem:[%s3218 + $0x8] sm:$0xf]
        %v3222 = vld [vmem:[%s3218 + $0xc] sm:$0xf]
        %3223 = vrot.lane.b32.xlu0 %v3199, 1
        %v3224 = vpop.permute.xlu0 %3223
        %3225 = vrot.lane.b32.xlu0 %v3203, 1
        %v3226 = vpop.permute.xlu0 %3225
        %3227 = vrot.lane.b32.xlu0 %v3207, 1
        %v3228 = vpop.permute.xlu0 %3227
        %3229 = vrot.lane.b32.xlu0 %v3211, 1
        %v3230 = vpop.permute.xlu0 %3229
        %3231 = vrot.lane.b32.xlu0 %v3200, 1
        %v3232 = vpop.permute.xlu0 %3231
        %3233 = vrot.lane.b32.xlu0 %v3204, 1
        %v3234 = vpop.permute.xlu0 %3233
        %3235 = vrot.lane.b32.xlu0 %v3208, 1
        %v3236 = vpop.permute.xlu0 %3235
        %3237 = vrot.lane.b32.xlu0 %v3212, 1
        %v3238 = vpop.permute.xlu0 %3237
        %3239 = vrot.lane.b32.xlu0 %v3201, 1
        %v3240 = vpop.permute.xlu0 %3239
        %3241 = vrot.lane.b32.xlu0 %v3205, 1
        %v3242 = vpop.permute.xlu0 %3241
        %3243 = vrot.lane.b32.xlu0 %v3209, 1
        %v3244 = vpop.permute.xlu0 %3243
        %3245 = vrot.lane.b32.xlu0 %v3213, 1
        %v3246 = vpop.permute.xlu0 %3245
        %3247 = vrot.lane.b32.xlu0 %v3202, 1
        %v3248 = vpop.permute.xlu0 %3247
        %3249 = vrot.lane.b32.xlu0 %v3206, 1
        %v3250 = vpop.permute.xlu0 %3249
        %3251 = vrot.lane.b32.xlu0 %v3210, 1
        %v3252 = vpop.permute.xlu0 %3251
        %3253 = vrot.lane.b32.xlu0 %v3214, 1
        %v3254 = vpop.permute.xlu0 %3253
        %v3255 = vsel %vm687, %v3240, %v3248
        %v3256 = vsel %vm687, %v3242, %v3250
        %v3257 = vsel %vm687, %v3244, %v3252
        %v3258 = vsel %vm687, %v3246, %v3254
        %v3259 = vsel %vm687, %v3232, %v3240
        %v3260 = vsel %vm687, %v3234, %v3242
        %v3261 = vsel %vm687, %v3236, %v3244
        %v3262 = vsel %vm687, %v3238, %v3246
        %v3263 = vsel %vm687, %v3224, %v3232
        %v3264 = vsel %vm687, %v3226, %v3234
        %v3265 = vsel %vm687, %v3228, %v3236
        %v3266 = vsel %vm687, %v3230, %v3238
        %v3267 = vsel %vm687, %v3248, %v3224
        %v3268 = vsel %vm687, %v3250, %v3226
        %v3269 = vsel %vm687, %v3252, %v3228
        %v3270 = vsel %vm687, %v3254, %v3230
        %v3271 = vmul.f32 %v3267, %v515
        %v3272 = vmul.f32 %v3263, %v516
        %v3273 = vmul.f32 %v3259, %v517
        %v3274 = vmul.f32 %v3255, %v518
        %v3275 = vmul.f32 %v3268, %v515
        %v3276 = vmul.f32 %v3264, %v516
        %v3277 = vmul.f32 %v3260, %v517
        %v3278 = vmul.f32 %v3256, %v518
        %v3279 = vmul.f32 %v3269, %v515
        %v3280 = vmul.f32 %v3265, %v516
        %v3281 = vmul.f32 %v3261, %v517
        %v3282 = vmul.f32 %v3257, %v518
        %v3283 = vmul.f32 %v3270, %v515
        %v3284 = vmul.f32 %v3266, %v516
        %v3285 = vmul.f32 %v3262, %v517
        %v3286 = vmul.f32 %v3258, %v518
        %v3287 = vpack.c.bf16 %v3275, %v3271
        %v3288 = vpack.c.bf16 %v3276, %v3272
        %v3289 = vpack.c.bf16 %v3277, %v3273
        %v3290 = vpack.c.bf16 %v3278, %v3274
        %v3291 = vpack.c.bf16 %v3283, %v3279
        %v3292 = vpack.c.bf16 %v3284, %v3280
        %v3293 = vpack.c.bf16 %v3285, %v3281
        %v3294 = vpack.c.bf16 %v3286, %v3282
        %s3295 = sadd.s32 %s1919, 7
        %s3296 = smul.u32 %s3295, 4
        %s3297 = smul.addr %s3296, 4
        %s3298 = scalar_lea.vmem %s6, %s3297
        %v3299 = vld [vmem:[%s3298] sm:$0xf]
        %v3300 = vld [vmem:[%s3298 + $0x4] sm:$0xf]
        %v3301 = vld [vmem:[%s3298 + $0x8] sm:$0xf]
        %v3302 = vld [vmem:[%s3298 + $0xc] sm:$0xf]
        %v3303 = vpack.c.bf16 %v3203, %v3199
        %v3304 = vpack.c.bf16 %v3204, %v3200
        %v3305 = vpack.c.bf16 %v3205, %v3201
        %v3306 = vpack.c.bf16 %v3206, %v3202
        %v3307 = vpack.c.bf16 %v3211, %v3207
        %v3308 = vpack.c.bf16 %v3212, %v3208
        %v3309 = vpack.c.bf16 %v3213, %v3209
        %v3310 = vpack.c.bf16 %v3214, %v3210
        %v3315 = vunpack.c.l.b16 %v3299
        %v3316 = vunpack.c.l.b16 %v3300
        %v3317 = vunpack.c.l.b16 %v3301
        %v3318 = vunpack.c.l.b16 %v3302
        %v3319 = vpack.c.b16 %v3316, %v3315
        %v3320 = vpack.c.b16 %v3318, %v3317
        %v3322 = vsel %vm1256, %v3319, 0
        %v3325 = vsel %vm1256, %v3320, 0
        %3327 = vmatprep.subr.bf16.mxu0 0
        %3328 = vmatpush1.bf16.msra.mxu0 0
        %3329 = vmatprep.subr.bf16.mxu0 0
        %3330 = vmatpush1.bf16.msra.mxu0 0
        %3331 = vmatprep.subr.bf16.mxu0 0
        %3332 = vmatpush1.bf16.msra.mxu0 0
        %3333 = vmatprep.subr.bf16.mxu0 0
        %3334 = vmatpush1.bf16.msra.mxu0 0
        %3335 = vmatprep.subr.bf16.mxu0 0
        %3336 = vmatpush1.bf16.msra.mxu0 0
        %3337 = vmatprep.subr.bf16.mxu0 0
        %3338 = vmatpush1.bf16.msra.mxu0 0
        %3339 = vmatprep.subr.bf16.mxu0 %v3308
        %3340 = vmatpush1.bf16.msra.mxu0 %v3307
        %3341 = vmatprep.subr.bf16.mxu0 %v3304
        %3342 = vmatpush1.bf16.msra.mxu0 %v3303
        %3343 = vmatprep.subr.bf16.mxu0 0
        %3344 = vmatpush2.bf16.msra.mxu0 0
        %3345 = vmatprep.subr.bf16.mxu0 0
        %3346 = vmatpush2.bf16.msra.mxu0 0
        %3347 = vmatprep.subr.bf16.mxu0 0
        %3348 = vmatpush2.bf16.msra.mxu0 0
        %3349 = vmatprep.subr.bf16.mxu0 0
        %3350 = vmatpush2.bf16.msra.mxu0 0
        %3351 = vmatprep.subr.bf16.mxu0 0
        %3352 = vmatpush2.bf16.msra.mxu0 0
        %3353 = vmatprep.subr.bf16.mxu0 0
        %3354 = vmatpush2.bf16.msra.mxu0 0
        %3355 = vmatprep.subr.bf16.mxu0 0
        %3356 = vmatpush2.bf16.msra.mxu0 0
        %3357 = vmatprep.subr.bf16.mxu0 0
        %3358 = vmatpush2.bf16.msra.mxu0 0
        %3359 = vmatprep.mubr.bf16.mxu0 0
        %3360 = vmatmul.mubr.bf16.gmra.mxu0 %v3322
        %v3361 = vpop.f32.mrf.mxu0
        %v3362 = vadd.f32 0.0, %v3361
        %v3363 = vpop.f32.mrf.mxu0
        %v3364 = vadd.f32 0.0, %v3363
        %v3365 = vpop.f32.mrf.mxu0
        %v3366 = vadd.f32 0.0, %v3365
        %v3367 = vpop.f32.mrf.mxu0
        %v3368 = vadd.f32 0.0, %v3367
        %3369 = vmatprep.mubr.bf16.mxu0 0
        %3370 = vmatmul.mubr.bf16.gmra.mxu0 %v3325
        %v3371 = vpop.f32.mrf.mxu0
        %v3372 = vadd.f32 0.0, %v3371
        %v3373 = vpop.f32.mrf.mxu0
        %v3374 = vadd.f32 0.0, %v3373
        %v3375 = vpop.f32.mrf.mxu0
        %v3376 = vadd.f32 0.0, %v3375
        %v3377 = vpop.f32.mrf.mxu0
        %v3378 = vadd.f32 0.0, %v3377
        %3379 = vdwg.mxu0
        %3380 = vmatprep.subr.bf16.mxu0 0
        %3381 = vmatpush1.bf16.msra.mxu0 0
        %3382 = vmatprep.subr.bf16.mxu0 0
        %3383 = vmatpush1.bf16.msra.mxu0 0
        %3384 = vmatprep.subr.bf16.mxu0 0
        %3385 = vmatpush1.bf16.msra.mxu0 0
        %3386 = vmatprep.subr.bf16.mxu0 0
        %3387 = vmatpush1.bf16.msra.mxu0 0
        %3388 = vmatprep.subr.bf16.mxu0 0
        %3389 = vmatpush1.bf16.msra.mxu0 0
        %3390 = vmatprep.subr.bf16.mxu0 0
        %3391 = vmatpush1.bf16.msra.mxu0 0
        %3392 = vmatprep.subr.bf16.mxu0 %v3310
        %3393 = vmatpush1.bf16.msra.mxu0 %v3309
        %3394 = vmatprep.subr.bf16.mxu0 %v3306
        %3395 = vmatpush1.bf16.msra.mxu0 %v3305
        %3396 = vmatprep.subr.bf16.mxu0 0
        %3397 = vmatpush2.bf16.msra.mxu0 0
        %3398 = vmatprep.subr.bf16.mxu0 0
        %3399 = vmatpush2.bf16.msra.mxu0 0
        %3400 = vmatprep.subr.bf16.mxu0 0
        %3401 = vmatpush2.bf16.msra.mxu0 0
        %3402 = vmatprep.subr.bf16.mxu0 0
        %3403 = vmatpush2.bf16.msra.mxu0 0
        %3404 = vmatprep.subr.bf16.mxu0 0
        %3405 = vmatpush2.bf16.msra.mxu0 0
        %3406 = vmatprep.subr.bf16.mxu0 0
        %3407 = vmatpush2.bf16.msra.mxu0 0
        %3408 = vmatprep.subr.bf16.mxu0 0
        %3409 = vmatpush2.bf16.msra.mxu0 0
        %3410 = vmatprep.subr.bf16.mxu0 0
        %3411 = vmatpush2.bf16.msra.mxu0 0
        %3412 = vmatprep.mubr.bf16.mxu0 0
        %3413 = vmatmul.mubr.bf16.gmra.mxu0 %v3322
        %v3414 = vpop.f32.mrf.mxu0
        %v3415 = vadd.f32 0.0, %v3414
        %v3416 = vpop.f32.mrf.mxu0
        %v3417 = vadd.f32 0.0, %v3416
        %v3418 = vpop.f32.mrf.mxu0
        %v3419 = vadd.f32 0.0, %v3418
        %v3420 = vpop.f32.mrf.mxu0
        %v3421 = vadd.f32 0.0, %v3420
        %3422 = vmatprep.mubr.bf16.mxu0 0
        %3423 = vmatmul.mubr.bf16.gmra.mxu0 %v3325
        %v3424 = vpop.f32.mrf.mxu0
        %v3425 = vadd.f32 0.0, %v3424
        %v3426 = vpop.f32.mrf.mxu0
        %v3427 = vadd.f32 0.0, %v3426
        %v3428 = vpop.f32.mrf.mxu0
        %v3429 = vadd.f32 0.0, %v3428
        %v3430 = vpop.f32.mrf.mxu0
        %v3431 = vadd.f32 0.0, %v3430
        %3432 = vdwg.mxu0
        %v3437 = vunpack.c.l.b16 %v3219
        %v3438 = vunpack.c.l.b16 %v3220
        %v3439 = vunpack.c.l.b16 %v3221
        %v3440 = vunpack.c.l.b16 %v3222
        %v3441 = vpack.c.b16 %v3438, %v3437
        %v3442 = vpack.c.b16 %v3440, %v3439
        %v3444 = vsel %vm1256, %v3441, 0
        %v3447 = vsel %vm1256, %v3442, 0
        %3449 = vmatprep.subr.bf16.mxu0 0
        %3450 = vmatpush1.bf16.msra.mxu0 0
        %3451 = vmatprep.subr.bf16.mxu0 0
        %3452 = vmatpush1.bf16.msra.mxu0 0
        %3453 = vmatprep.subr.bf16.mxu0 0
        %3454 = vmatpush1.bf16.msra.mxu0 0
        %3455 = vmatprep.subr.bf16.mxu0 0
        %3456 = vmatpush1.bf16.msra.mxu0 0
        %3457 = vmatprep.subr.bf16.mxu0 0
        %3458 = vmatpush1.bf16.msra.mxu0 0
        %3459 = vmatprep.subr.bf16.mxu0 0
        %3460 = vmatpush1.bf16.msra.mxu0 0
        %3461 = vmatprep.subr.bf16.mxu0 %v3292
        %3462 = vmatpush1.bf16.msra.mxu0 %v3291
        %3463 = vmatprep.subr.bf16.mxu0 %v3288
        %3464 = vmatpush1.bf16.msra.mxu0 %v3287
        %3465 = vmatprep.subr.bf16.mxu0 0
        %3466 = vmatpush2.bf16.msra.mxu0 0
        %3467 = vmatprep.subr.bf16.mxu0 0
        %3468 = vmatpush2.bf16.msra.mxu0 0
        %3469 = vmatprep.subr.bf16.mxu0 0
        %3470 = vmatpush2.bf16.msra.mxu0 0
        %3471 = vmatprep.subr.bf16.mxu0 0
        %3472 = vmatpush2.bf16.msra.mxu0 0
        %3473 = vmatprep.subr.bf16.mxu0 0
        %3474 = vmatpush2.bf16.msra.mxu0 0
        %3475 = vmatprep.subr.bf16.mxu0 0
        %3476 = vmatpush2.bf16.msra.mxu0 0
        %3477 = vmatprep.subr.bf16.mxu0 0
        %3478 = vmatpush2.bf16.msra.mxu0 0
        %3479 = vmatprep.subr.bf16.mxu0 0
        %3480 = vmatpush2.bf16.msra.mxu0 0
        %3481 = vmatprep.mubr.bf16.mxu0 0
        %3482 = vmatmul.mubr.bf16.gmra.mxu0 %v3444
        %v3483 = vpop.f32.mrf.mxu0
        %v3484 = vadd.f32 %v3362, %v3483
        %v3485 = vpop.f32.mrf.mxu0
        %v3486 = vadd.f32 %v3364, %v3485
        %v3487 = vpop.f32.mrf.mxu0
        %v3488 = vadd.f32 %v3366, %v3487
        %v3489 = vpop.f32.mrf.mxu0
        %v3490 = vadd.f32 %v3368, %v3489
        %3491 = vmatprep.mubr.bf16.mxu0 0
        %3492 = vmatmul.mubr.bf16.gmra.mxu0 %v3447
        %v3493 = vpop.f32.mrf.mxu0
        %v3494 = vadd.f32 %v3372, %v3493
        %v3495 = vpop.f32.mrf.mxu0
        %v3496 = vadd.f32 %v3374, %v3495
        %v3497 = vpop.f32.mrf.mxu0
        %v3498 = vadd.f32 %v3376, %v3497
        %v3499 = vpop.f32.mrf.mxu0
        %v3500 = vadd.f32 %v3378, %v3499
        %3501 = vdwg.mxu0
        %3502 = vmatprep.subr.bf16.mxu0 0
        %3503 = vmatpush1.bf16.msra.mxu0 0
        %3504 = vmatprep.subr.bf16.mxu0 0
        %3505 = vmatpush1.bf16.msra.mxu0 0
        %3506 = vmatprep.subr.bf16.mxu0 0
        %3507 = vmatpush1.bf16.msra.mxu0 0
        %3508 = vmatprep.subr.bf16.mxu0 0
        %3509 = vmatpush1.bf16.msra.mxu0 0
        %3510 = vmatprep.subr.bf16.mxu0 0
        %3511 = vmatpush1.bf16.msra.mxu0 0
        %3512 = vmatprep.subr.bf16.mxu0 0
        %3513 = vmatpush1.bf16.msra.mxu0 0
        %3514 = vmatprep.subr.bf16.mxu0 %v3294
        %3515 = vmatpush1.bf16.msra.mxu0 %v3293
        %3516 = vmatprep.subr.bf16.mxu0 %v3290
        %3517 = vmatpush1.bf16.msra.mxu0 %v3289
        %3518 = vmatprep.subr.bf16.mxu0 0
        %3519 = vmatpush2.bf16.msra.mxu0 0
        %3520 = vmatprep.subr.bf16.mxu0 0
        %3521 = vmatpush2.bf16.msra.mxu0 0
        %3522 = vmatprep.subr.bf16.mxu0 0
        %3523 = vmatpush2.bf16.msra.mxu0 0
        %3524 = vmatprep.subr.bf16.mxu0 0
        %3525 = vmatpush2.bf16.msra.mxu0 0
        %3526 = vmatprep.subr.bf16.mxu0 0
        %3527 = vmatpush2.bf16.msra.mxu0 0
        %3528 = vmatprep.subr.bf16.mxu0 0
        %3529 = vmatpush2.bf16.msra.mxu0 0
        %3530 = vmatprep.subr.bf16.mxu0 0
        %3531 = vmatpush2.bf16.msra.mxu0 0
        %3532 = vmatprep.subr.bf16.mxu0 0
        %3533 = vmatpush2.bf16.msra.mxu0 0
        %3534 = vmatprep.mubr.bf16.mxu0 0
        %3535 = vmatmul.mubr.bf16.gmra.mxu0 %v3444
        %v3536 = vpop.f32.mrf.mxu0
        %v3537 = vadd.f32 %v3415, %v3536
        %v3538 = vpop.f32.mrf.mxu0
        %v3539 = vadd.f32 %v3417, %v3538
        %v3540 = vpop.f32.mrf.mxu0
        %v3541 = vadd.f32 %v3419, %v3540
        %v3542 = vpop.f32.mrf.mxu0
        %v3543 = vadd.f32 %v3421, %v3542
        %3544 = vmatprep.mubr.bf16.mxu0 0
        %3545 = vmatmul.mubr.bf16.gmra.mxu0 %v3447
        %v3546 = vpop.f32.mrf.mxu0
        %v3547 = vadd.f32 %v3425, %v3546
        %v3548 = vpop.f32.mrf.mxu0
        %v3549 = vadd.f32 %v3427, %v3548
        %v3550 = vpop.f32.mrf.mxu0
        %v3551 = vadd.f32 %v3429, %v3550
        %v3552 = vpop.f32.mrf.mxu0
        %v3553 = vadd.f32 %v3431, %v3552
        %3554 = vdwg.mxu0
        %s3555 = sadd.s32 %s1919, 8
        %s3556 = smul.u32 %s3555, 4
        %s3557 = smul.addr %s3556, 4
        %s3558 = scalar_lea.vmem %s6, %s3557
        %v3559 = vld [vmem:[%s3558] sm:$0xf]
        %v3560 = vld [vmem:[%s3558 + $0x4] sm:$0xf]
        %v3561 = vld [vmem:[%s3558 + $0x8] sm:$0xf]
        %v3562 = vld [vmem:[%s3558 + $0xc] sm:$0xf]
        %3563 = vrot.lane.b32.xlu0 %v3199, 127
        %v3564 = vpop.permute.xlu0 %3563
        %3565 = vrot.lane.b32.xlu0 %v3203, 127
        %v3566 = vpop.permute.xlu0 %3565
        %3567 = vrot.lane.b32.xlu0 %v3207, 127
        %v3568 = vpop.permute.xlu0 %3567
        %3569 = vrot.lane.b32.xlu0 %v3211, 127
        %v3570 = vpop.permute.xlu0 %3569
        %3571 = vrot.lane.b32.xlu0 %v3200, 127
        %v3572 = vpop.permute.xlu0 %3571
        %3573 = vrot.lane.b32.xlu0 %v3204, 127
        %v3574 = vpop.permute.xlu0 %3573
        %3575 = vrot.lane.b32.xlu0 %v3208, 127
        %v3576 = vpop.permute.xlu0 %3575
        %3577 = vrot.lane.b32.xlu0 %v3212, 127
        %v3578 = vpop.permute.xlu0 %3577
        %3579 = vrot.lane.b32.xlu0 %v3201, 127
        %v3580 = vpop.permute.xlu0 %3579
        %3581 = vrot.lane.b32.xlu0 %v3205, 127
        %v3582 = vpop.permute.xlu0 %3581
        %3583 = vrot.lane.b32.xlu0 %v3209, 127
        %v3584 = vpop.permute.xlu0 %3583
        %3585 = vrot.lane.b32.xlu0 %v3213, 127
        %v3586 = vpop.permute.xlu0 %3585
        %3587 = vrot.lane.b32.xlu0 %v3202, 127
        %v3588 = vpop.permute.xlu0 %3587
        %3589 = vrot.lane.b32.xlu0 %v3206, 127
        %v3590 = vpop.permute.xlu0 %3589
        %3591 = vrot.lane.b32.xlu0 %v3210, 127
        %v3592 = vpop.permute.xlu0 %3591
        %3593 = vrot.lane.b32.xlu0 %v3214, 127
        %v3594 = vpop.permute.xlu0 %3593
        %v3595 = vsel %vm872, %v3580, %v3588
        %v3596 = vsel %vm872, %v3582, %v3590
        %v3597 = vsel %vm872, %v3584, %v3592
        %v3598 = vsel %vm872, %v3586, %v3594
        %v3599 = vsel %vm872, %v3572, %v3580
        %v3600 = vsel %vm872, %v3574, %v3582
        %v3601 = vsel %vm872, %v3576, %v3584
        %v3602 = vsel %vm872, %v3578, %v3586
        %v3603 = vsel %vm872, %v3564, %v3572
        %v3604 = vsel %vm872, %v3566, %v3574
        %v3605 = vsel %vm872, %v3568, %v3576
        %v3606 = vsel %vm872, %v3570, %v3578
        %v3607 = vsel %vm872, %v3588, %v3564
        %v3608 = vsel %vm872, %v3590, %v3566
        %v3609 = vsel %vm872, %v3592, %v3568
        %v3610 = vsel %vm872, %v3594, %v3570
        %v3611 = vmul.f32 %v3603, %v539
        %v3612 = vmul.f32 %v3599, %v540
        %v3613 = vmul.f32 %v3595, %v541
        %v3614 = vmul.f32 %v3607, %v542
        %v3615 = vmul.f32 %v3604, %v539
        %v3616 = vmul.f32 %v3600, %v540
        %v3617 = vmul.f32 %v3596, %v541
        %v3618 = vmul.f32 %v3608, %v542
        %v3619 = vmul.f32 %v3605, %v539
        %v3620 = vmul.f32 %v3601, %v540
        %v3621 = vmul.f32 %v3597, %v541
        %v3622 = vmul.f32 %v3609, %v542
        %v3623 = vmul.f32 %v3606, %v539
        %v3624 = vmul.f32 %v3602, %v540
        %v3625 = vmul.f32 %v3598, %v541
        %v3626 = vmul.f32 %v3610, %v542
        %v3627 = vpack.c.bf16 %v3615, %v3611
        %v3628 = vpack.c.bf16 %v3616, %v3612
        %v3629 = vpack.c.bf16 %v3617, %v3613
        %v3630 = vpack.c.bf16 %v3618, %v3614
        %v3631 = vpack.c.bf16 %v3623, %v3619
        %v3632 = vpack.c.bf16 %v3624, %v3620
        %v3633 = vpack.c.bf16 %v3625, %v3621
        %v3634 = vpack.c.bf16 %v3626, %v3622
        %v3639 = vunpack.c.l.b16 %v3559
        %v3640 = vunpack.c.l.b16 %v3560
        %v3641 = vunpack.c.l.b16 %v3561
        %v3642 = vunpack.c.l.b16 %v3562
        %v3643 = vpack.c.b16 %v3640, %v3639
        %v3644 = vpack.c.b16 %v3642, %v3641
        %v3646 = vsel %vm1256, %v3643, 0
        %v3649 = vsel %vm1256, %v3644, 0
        %3651 = vmatprep.subr.bf16.mxu0 0
        %3652 = vmatpush1.bf16.msra.mxu0 0
        %3653 = vmatprep.subr.bf16.mxu0 0
        %3654 = vmatpush1.bf16.msra.mxu0 0
        %3655 = vmatprep.subr.bf16.mxu0 0
        %3656 = vmatpush1.bf16.msra.mxu0 0
        %3657 = vmatprep.subr.bf16.mxu0 0
        %3658 = vmatpush1.bf16.msra.mxu0 0
        %3659 = vmatprep.subr.bf16.mxu0 0
        %3660 = vmatpush1.bf16.msra.mxu0 0
        %3661 = vmatprep.subr.bf16.mxu0 0
        %3662 = vmatpush1.bf16.msra.mxu0 0
        %3663 = vmatprep.subr.bf16.mxu0 %v3632
        %3664 = vmatpush1.bf16.msra.mxu0 %v3631
        %3665 = vmatprep.subr.bf16.mxu0 %v3628
        %3666 = vmatpush1.bf16.msra.mxu0 %v3627
        %3667 = vmatprep.subr.bf16.mxu0 0
        %3668 = vmatpush2.bf16.msra.mxu0 0
        %3669 = vmatprep.subr.bf16.mxu0 0
        %3670 = vmatpush2.bf16.msra.mxu0 0
        %3671 = vmatprep.subr.bf16.mxu0 0
        %3672 = vmatpush2.bf16.msra.mxu0 0
        %3673 = vmatprep.subr.bf16.mxu0 0
        %3674 = vmatpush2.bf16.msra.mxu0 0
        %3675 = vmatprep.subr.bf16.mxu0 0
        %3676 = vmatpush2.bf16.msra.mxu0 0
        %3677 = vmatprep.subr.bf16.mxu0 0
        %3678 = vmatpush2.bf16.msra.mxu0 0
        %3679 = vmatprep.subr.bf16.mxu0 0
        %3680 = vmatpush2.bf16.msra.mxu0 0
        %3681 = vmatprep.subr.bf16.mxu0 0
        %3682 = vmatpush2.bf16.msra.mxu0 0
        %3683 = vmatprep.mubr.bf16.mxu0 0
        %3684 = vmatmul.mubr.bf16.gmra.mxu0 %v3646
        %v3685 = vpop.f32.mrf.mxu0
        %v3686 = vadd.f32 0.0, %v3685
        %v3687 = vpop.f32.mrf.mxu0
        %v3688 = vadd.f32 0.0, %v3687
        %v3689 = vpop.f32.mrf.mxu0
        %v3690 = vadd.f32 0.0, %v3689
        %v3691 = vpop.f32.mrf.mxu0
        %v3692 = vadd.f32 0.0, %v3691
        %3693 = vmatprep.mubr.bf16.mxu0 0
        %3694 = vmatmul.mubr.bf16.gmra.mxu0 %v3649
        %v3695 = vpop.f32.mrf.mxu0
        %v3696 = vadd.f32 0.0, %v3695
        %v3697 = vpop.f32.mrf.mxu0
        %v3698 = vadd.f32 0.0, %v3697
        %v3699 = vpop.f32.mrf.mxu0
        %v3700 = vadd.f32 0.0, %v3699
        %v3701 = vpop.f32.mrf.mxu0
        %v3702 = vadd.f32 0.0, %v3701
        %3703 = vdwg.mxu0
        %3704 = vmatprep.subr.bf16.mxu0 0
        %3705 = vmatpush1.bf16.msra.mxu0 0
        %3706 = vmatprep.subr.bf16.mxu0 0
        %3707 = vmatpush1.bf16.msra.mxu0 0
        %3708 = vmatprep.subr.bf16.mxu0 0
        %3709 = vmatpush1.bf16.msra.mxu0 0
        %3710 = vmatprep.subr.bf16.mxu0 0
        %3711 = vmatpush1.bf16.msra.mxu0 0
        %3712 = vmatprep.subr.bf16.mxu0 0
        %3713 = vmatpush1.bf16.msra.mxu0 0
        %3714 = vmatprep.subr.bf16.mxu0 0
        %3715 = vmatpush1.bf16.msra.mxu0 0
        %3716 = vmatprep.subr.bf16.mxu0 %v3634
        %3717 = vmatpush1.bf16.msra.mxu0 %v3633
        %3718 = vmatprep.subr.bf16.mxu0 %v3630
        %3719 = vmatpush1.bf16.msra.mxu0 %v3629
        %3720 = vmatprep.subr.bf16.mxu0 0
        %3721 = vmatpush2.bf16.msra.mxu0 0
        %3722 = vmatprep.subr.bf16.mxu0 0
        %3723 = vmatpush2.bf16.msra.mxu0 0
        %3724 = vmatprep.subr.bf16.mxu0 0
        %3725 = vmatpush2.bf16.msra.mxu0 0
        %3726 = vmatprep.subr.bf16.mxu0 0
        %3727 = vmatpush2.bf16.msra.mxu0 0
        %3728 = vmatprep.subr.bf16.mxu0 0
        %3729 = vmatpush2.bf16.msra.mxu0 0
        %3730 = vmatprep.subr.bf16.mxu0 0
        %3731 = vmatpush2.bf16.msra.mxu0 0
        %3732 = vmatprep.subr.bf16.mxu0 0
        %3733 = vmatpush2.bf16.msra.mxu0 0
        %3734 = vmatprep.subr.bf16.mxu0 0
        %3735 = vmatpush2.bf16.msra.mxu0 0
        %3736 = vmatprep.mubr.bf16.mxu0 0
        %3737 = vmatmul.mubr.bf16.gmra.mxu0 %v3646
        %v3738 = vpop.f32.mrf.mxu0
        %v3739 = vadd.f32 0.0, %v3738
        %v3740 = vpop.f32.mrf.mxu0
        %v3741 = vadd.f32 0.0, %v3740
        %v3742 = vpop.f32.mrf.mxu0
        %v3743 = vadd.f32 0.0, %v3742
        %v3744 = vpop.f32.mrf.mxu0
        %v3745 = vadd.f32 0.0, %v3744
        %3746 = vmatprep.mubr.bf16.mxu0 0
        %3747 = vmatmul.mubr.bf16.gmra.mxu0 %v3649
        %v3748 = vpop.f32.mrf.mxu0
        %v3749 = vadd.f32 0.0, %v3748
        %v3750 = vpop.f32.mrf.mxu0
        %v3751 = vadd.f32 0.0, %v3750
        %v3752 = vpop.f32.mrf.mxu0
        %v3753 = vadd.f32 0.0, %v3752
        %v3754 = vpop.f32.mrf.mxu0
        %v3755 = vadd.f32 0.0, %v3754
        %3756 = vdwg.mxu0
        %v3757 = vadd.f32 %v3484, %v3686
        %v3758 = vadd.f32 %v3486, %v3688
        %v3759 = vadd.f32 %v3537, %v3739
        %v3760 = vadd.f32 %v3539, %v3741
        %v3761 = vadd.f32 %v3488, %v3690
        %v3762 = vadd.f32 %v3490, %v3692
        %v3763 = vadd.f32 %v3541, %v3743
        %v3764 = vadd.f32 %v3543, %v3745
        %v3765 = vadd.f32 %v3494, %v3696
        %v3766 = vadd.f32 %v3496, %v3698
        %v3767 = vadd.f32 %v3547, %v3749
        %v3768 = vadd.f32 %v3549, %v3751
        %v3769 = vadd.f32 %v3498, %v3700
        %v3770 = vadd.f32 %v3500, %v3702
        %v3771 = vadd.f32 %v3551, %v3753
        %v3772 = vadd.f32 %v3553, %v3755
        %s3773 = smul.u32 %s1659, 32
        %s3774 = scalar_lea.vmem %s7, %s3773
        %v3775 = vld [vmem:[%s3774] sm:$0xff]
        %v3776 = vld [vmem:[%s3774 + $0x8] sm:$0xff]
        %v3777 = vld [vmem:[%s3774 + $0x10] sm:$0xff]
        %v3778 = vld [vmem:[%s3774 + $0x18] sm:$0xff]
        %3780 = vset.pattern.permute.xlu0 0
        %3781 = vperm.xlu0 %3780, %v3775
        %v3782 = vpop.permute.xlu0 %3781
        %3785 = vset.pattern.permute.xlu0 0
        %3786 = vperm.xlu0 %3785, %v3776
        %v3787 = vpop.permute.xlu0 %3786
        %3790 = vset.pattern.permute.xlu0 0
        %3791 = vperm.xlu0 %3790, %v3777
        %v3792 = vpop.permute.xlu0 %3791
        %3795 = vset.pattern.permute.xlu0 0
        %3796 = vperm.xlu0 %3795, %v3778
        %v3797 = vpop.permute.xlu0 %3796
        %v3799 = vadd.f32 %v3757, %v3782
        %v3800 = vadd.f32 %v3758, %v3782
        %v3801 = vadd.f32 %v3759, %v3782
        %v3802 = vadd.f32 %v3760, %v3782
        %v3803 = vadd.f32 %v3761, %v3787
        %v3804 = vadd.f32 %v3762, %v3787
        %v3805 = vadd.f32 %v3763, %v3787
        %v3806 = vadd.f32 %v3764, %v3787
        %v3807 = vadd.f32 %v3765, %v3792
        %v3808 = vadd.f32 %v3766, %v3792
        %v3809 = vadd.f32 %v3767, %v3792
        %v3810 = vadd.f32 %v3768, %v3792
        %v3811 = vadd.f32 %v3769, %v3797
        %v3812 = vadd.f32 %v3770, %v3797
        %v3813 = vadd.f32 %v3771, %v3797
        %v3814 = vadd.f32 %v3772, %v3797
        %v3815 = vmul.f32 %v3799, 0.2
        %v3816 = vmul.f32 %v3800, 0.2
        %v3817 = vmul.f32 %v3801, 0.2
        %v3818 = vmul.f32 %v3802, 0.2
        %v3819 = vmul.f32 %v3803, 0.2
        %v3820 = vmul.f32 %v3804, 0.2
        %v3821 = vmul.f32 %v3805, 0.2
        %v3822 = vmul.f32 %v3806, 0.2
        %v3823 = vmul.f32 %v3807, 0.2
        %v3824 = vmul.f32 %v3808, 0.2
        %v3825 = vmul.f32 %v3809, 0.2
        %v3826 = vmul.f32 %v3810, 0.2
        %v3827 = vmul.f32 %v3811, 0.2
        %v3828 = vmul.f32 %v3812, 0.2
        %v3829 = vmul.f32 %v3813, 0.2
        %v3830 = vmul.f32 %v3814, 0.2
        %v3831 = vmax.f32 %v3799, %v3815
        %v3832 = vmax.f32 %v3800, %v3816
        %v3833 = vmax.f32 %v3801, %v3817
        %v3834 = vmax.f32 %v3802, %v3818
        %v3835 = vmax.f32 %v3803, %v3819
        %v3836 = vmax.f32 %v3804, %v3820
        %v3837 = vmax.f32 %v3805, %v3821
        %v3838 = vmax.f32 %v3806, %v3822
        %v3839 = vmax.f32 %v3807, %v3823
        %v3840 = vmax.f32 %v3808, %v3824
        %v3841 = vmax.f32 %v3809, %v3825
        %v3842 = vmax.f32 %v3810, %v3826
        %v3843 = vmax.f32 %v3811, %v3827
        %v3844 = vmax.f32 %v3812, %v3828
        %v3845 = vmax.f32 %v3813, %v3829
        %v3846 = vmax.f32 %v3814, %v3830
        %v3847 = vadd.f32 %v3199, %v3831
        %v3848 = vadd.f32 %v3200, %v3832
        %v3849 = vadd.f32 %v3201, %v3833
        %v3850 = vadd.f32 %v3202, %v3834
        %v3851 = vadd.f32 %v3203, %v3835
        %v3852 = vadd.f32 %v3204, %v3836
        %v3853 = vadd.f32 %v3205, %v3837
        %v3854 = vadd.f32 %v3206, %v3838
        %v3855 = vadd.f32 %v3207, %v3839
        %v3856 = vadd.f32 %v3208, %v3840
        %v3857 = vadd.f32 %v3209, %v3841
        %v3858 = vadd.f32 %v3210, %v3842
        %v3859 = vadd.f32 %v3211, %v3843
        %v3860 = vadd.f32 %v3212, %v3844
        %v3861 = vadd.f32 %v3213, %v3845
        %v3862 = vadd.f32 %v3214, %v3846
        %s3863 = scalar_lea.vmem %s8, %s1877
        %v3864 = vld [vmem:[%s3863] sm:$0xff]
        %v3865 = vld [vmem:[%s3863 + $0x8] sm:$0xff]
        %v3866 = vld [vmem:[%s3863 + $0x10] sm:$0xff]
        %v3867 = vld [vmem:[%s3863 + $0x18] sm:$0xff]
        %3869 = vset.pattern.permute.xlu0 0
        %3870 = vperm.xlu0 %3869, %v3864
        %v3871 = vpop.permute.xlu0 %3870
        %3874 = vset.pattern.permute.xlu0 0
        %3875 = vperm.xlu0 %3874, %v3865
        %v3876 = vpop.permute.xlu0 %3875
        %3879 = vset.pattern.permute.xlu0 0
        %3880 = vperm.xlu0 %3879, %v3866
        %v3881 = vpop.permute.xlu0 %3880
        %3884 = vset.pattern.permute.xlu0 0
        %3885 = vperm.xlu0 %3884, %v3867
        %v3886 = vpop.permute.xlu0 %3885
        %v3888 = vmul.f32 %v3847, %v3871
        %v3889 = vmul.f32 %v3848, %v3871
        %v3890 = vmul.f32 %v3849, %v3871
        %v3891 = vmul.f32 %v3850, %v3871
        %v3892 = vmul.f32 %v3851, %v3876
        %v3893 = vmul.f32 %v3852, %v3876
        %v3894 = vmul.f32 %v3853, %v3876
        %v3895 = vmul.f32 %v3854, %v3876
        %v3896 = vmul.f32 %v3855, %v3881
        %v3897 = vmul.f32 %v3856, %v3881
        %v3898 = vmul.f32 %v3857, %v3881
        %v3899 = vmul.f32 %v3858, %v3881
        %v3900 = vmul.f32 %v3859, %v3886
        %v3901 = vmul.f32 %v3860, %v3886
        %v3902 = vmul.f32 %v3861, %v3886
        %v3903 = vmul.f32 %v3862, %v3886
        %s3904 = scalar_lea.vmem %s9, %s1877
        %v3905 = vld [vmem:[%s3904] sm:$0xff]
        %v3906 = vld [vmem:[%s3904 + $0x8] sm:$0xff]
        %v3907 = vld [vmem:[%s3904 + $0x10] sm:$0xff]
        %v3908 = vld [vmem:[%s3904 + $0x18] sm:$0xff]
        %3910 = vset.pattern.permute.xlu0 0
        %3911 = vperm.xlu0 %3910, %v3905
        %v3912 = vpop.permute.xlu0 %3911
        %3915 = vset.pattern.permute.xlu0 0
        %3916 = vperm.xlu0 %3915, %v3906
        %v3917 = vpop.permute.xlu0 %3916
        %3920 = vset.pattern.permute.xlu0 0
        %3921 = vperm.xlu0 %3920, %v3907
        %v3922 = vpop.permute.xlu0 %3921
        %3925 = vset.pattern.permute.xlu0 0
        %3926 = vperm.xlu0 %3925, %v3908
        %v3927 = vpop.permute.xlu0 %3926
        %v3929 = vadd.f32 %v3888, %v3912
        %v3930 = vadd.f32 %v3889, %v3912
        %v3931 = vadd.f32 %v3890, %v3912
        %v3932 = vadd.f32 %v3891, %v3912
        %v3933 = vadd.f32 %v3892, %v3917
        %v3934 = vadd.f32 %v3893, %v3917
        %v3935 = vadd.f32 %v3894, %v3917
        %v3936 = vadd.f32 %v3895, %v3917
        %v3937 = vadd.f32 %v3896, %v3922
        %v3938 = vadd.f32 %v3897, %v3922
        %v3939 = vadd.f32 %v3898, %v3922
        %v3940 = vadd.f32 %v3899, %v3922
        %v3941 = vadd.f32 %v3900, %v3927
        %v3942 = vadd.f32 %v3901, %v3927
        %v3943 = vadd.f32 %v3902, %v3927
        %v3944 = vadd.f32 %v3903, %v3927
      $region73: #{generator_forward.1} parent=67 // loop_footer
        %s1142 = sadd.s32 1, %s1138
      $region74: #{generator_forward.1} parent=67 // loop_footer_branch
        %1137 = sbr.rel target = $region70
      $region75: #{generator_forward.1} parent=67 // loop_exit
        _
      %v3945 = vld [vmem:[%s10] sm:$0x1]
      %3946 = vrot.lane.b32.xlu0 %v1143, 2
      %v3947 = vpop.permute.xlu0 %3946
      %3948 = vrot.lane.b32.xlu0 %v1147, 2
      %v3949 = vpop.permute.xlu0 %3948
      %3950 = vrot.lane.b32.xlu0 %v1151, 2
      %v3951 = vpop.permute.xlu0 %3950
      %3952 = vrot.lane.b32.xlu0 %v1155, 2
      %v3953 = vpop.permute.xlu0 %3952
      %3954 = vrot.lane.b32.xlu0 %v1144, 2
      %v3955 = vpop.permute.xlu0 %3954
      %3956 = vrot.lane.b32.xlu0 %v1148, 2
      %v3957 = vpop.permute.xlu0 %3956
      %3958 = vrot.lane.b32.xlu0 %v1152, 2
      %v3959 = vpop.permute.xlu0 %3958
      %3960 = vrot.lane.b32.xlu0 %v1156, 2
      %v3961 = vpop.permute.xlu0 %3960
      %3962 = vrot.lane.b32.xlu0 %v1145, 2
      %v3963 = vpop.permute.xlu0 %3962
      %3964 = vrot.lane.b32.xlu0 %v1149, 2
      %v3965 = vpop.permute.xlu0 %3964
      %3966 = vrot.lane.b32.xlu0 %v1153, 2
      %v3967 = vpop.permute.xlu0 %3966
      %3968 = vrot.lane.b32.xlu0 %v1157, 2
      %v3969 = vpop.permute.xlu0 %3968
      %3970 = vrot.lane.b32.xlu0 %v1146, 2
      %v3971 = vpop.permute.xlu0 %3970
      %3972 = vrot.lane.b32.xlu0 %v1150, 2
      %v3973 = vpop.permute.xlu0 %3972
      %3974 = vrot.lane.b32.xlu0 %v1154, 2
      %v3975 = vpop.permute.xlu0 %3974
      %3976 = vrot.lane.b32.xlu0 %v1158, 2
      %v3977 = vpop.permute.xlu0 %3976
      %v3978 = vsel %vm602, %v3963, %v3971
      %v3979 = vsel %vm602, %v3965, %v3973
      %v3980 = vsel %vm602, %v3967, %v3975
      %v3981 = vsel %vm602, %v3969, %v3977
      %v3982 = vsel %vm602, %v3955, %v3963
      %v3983 = vsel %vm602, %v3957, %v3965
      %v3984 = vsel %vm602, %v3959, %v3967
      %v3985 = vsel %vm602, %v3961, %v3969
      %v3986 = vsel %vm602, %v3947, %v3955
      %v3987 = vsel %vm602, %v3949, %v3957
      %v3988 = vsel %vm602, %v3951, %v3959
      %v3989 = vsel %vm602, %v3953, %v3961
      %v3990 = vsel %vm602, %v3971, %v3947
      %v3991 = vsel %vm602, %v3973, %v3949
      %v3992 = vsel %vm602, %v3975, %v3951
      %v3993 = vsel %vm602, %v3977, %v3953
      %v3994 = vmul.f32 %v3990, %v491
      %v3995 = vmul.f32 %v3986, %v492
      %v3996 = vmul.f32 %v3982, %v493
      %v3997 = vmul.f32 %v3978, %v494
      %v3998 = vmul.f32 %v3991, %v491
      %v3999 = vmul.f32 %v3987, %v492
      %v4000 = vmul.f32 %v3983, %v493
      %v4001 = vmul.f32 %v3979, %v494
      %v4002 = vmul.f32 %v3992, %v491
      %v4003 = vmul.f32 %v3988, %v492
      %v4004 = vmul.f32 %v3984, %v493
      %v4005 = vmul.f32 %v3980, %v494
      %v4006 = vmul.f32 %v3993, %v491
      %v4007 = vmul.f32 %v3989, %v492
      %v4008 = vmul.f32 %v3985, %v493
      %v4009 = vmul.f32 %v3981, %v494
      %v4010 = vpack.c.bf16 %v3998, %v3994
      %v4011 = vpack.c.bf16 %v3999, %v3995
      %v4012 = vpack.c.bf16 %v4000, %v3996
      %v4013 = vpack.c.bf16 %v4001, %v3997
      %v4014 = vpack.c.bf16 %v4006, %v4002
      %v4015 = vpack.c.bf16 %v4007, %v4003
      %v4016 = vpack.c.bf16 %v4008, %v4004
      %v4017 = vpack.c.bf16 %v4009, %v4005
      %s4018 = scalar_lea.vmem %s10, 1
      %v4019 = vld [vmem:[%s4018] sm:$0x1]
      %4020 = vrot.lane.b32.xlu0 %v1143, 1
      %v4021 = vpop.permute.xlu0 %4020
      %4022 = vrot.lane.b32.xlu0 %v1147, 1
      %v4023 = vpop.permute.xlu0 %4022
      %4024 = vrot.lane.b32.xlu0 %v1151, 1
      %v4025 = vpop.permute.xlu0 %4024
      %4026 = vrot.lane.b32.xlu0 %v1155, 1
      %v4027 = vpop.permute.xlu0 %4026
      %4028 = vrot.lane.b32.xlu0 %v1144, 1
      %v4029 = vpop.permute.xlu0 %4028
      %4030 = vrot.lane.b32.xlu0 %v1148, 1
      %v4031 = vpop.permute.xlu0 %4030
      %4032 = vrot.lane.b32.xlu0 %v1152, 1
      %v4033 = vpop.permute.xlu0 %4032
      %4034 = vrot.lane.b32.xlu0 %v1156, 1
      %v4035 = vpop.permute.xlu0 %4034
      %4036 = vrot.lane.b32.xlu0 %v1145, 1
      %v4037 = vpop.permute.xlu0 %4036
      %4038 = vrot.lane.b32.xlu0 %v1149, 1
      %v4039 = vpop.permute.xlu0 %4038
      %4040 = vrot.lane.b32.xlu0 %v1153, 1
      %v4041 = vpop.permute.xlu0 %4040
      %4042 = vrot.lane.b32.xlu0 %v1157, 1
      %v4043 = vpop.permute.xlu0 %4042
      %4044 = vrot.lane.b32.xlu0 %v1146, 1
      %v4045 = vpop.permute.xlu0 %4044
      %4046 = vrot.lane.b32.xlu0 %v1150, 1
      %v4047 = vpop.permute.xlu0 %4046
      %4048 = vrot.lane.b32.xlu0 %v1154, 1
      %v4049 = vpop.permute.xlu0 %4048
      %4050 = vrot.lane.b32.xlu0 %v1158, 1
      %v4051 = vpop.permute.xlu0 %4050
      %v4052 = vsel %vm687, %v4037, %v4045
      %v4053 = vsel %vm687, %v4039, %v4047
      %v4054 = vsel %vm687, %v4041, %v4049
      %v4055 = vsel %vm687, %v4043, %v4051
      %v4056 = vsel %vm687, %v4029, %v4037
      %v4057 = vsel %vm687, %v4031, %v4039
      %v4058 = vsel %vm687, %v4033, %v4041
      %v4059 = vsel %vm687, %v4035, %v4043
      %v4060 = vsel %vm687, %v4021, %v4029
      %v4061 = vsel %vm687, %v4023, %v4031
      %v4062 = vsel %vm687, %v4025, %v4033
      %v4063 = vsel %vm687, %v4027, %v4035
      %v4064 = vsel %vm687, %v4045, %v4021
      %v4065 = vsel %vm687, %v4047, %v4023
      %v4066 = vsel %vm687, %v4049, %v4025
      %v4067 = vsel %vm687, %v4051, %v4027
      %v4068 = vmul.f32 %v4064, %v515
      %v4069 = vmul.f32 %v4060, %v516
      %v4070 = vmul.f32 %v4056, %v517
      %v4071 = vmul.f32 %v4052, %v518
      %v4072 = vmul.f32 %v4065, %v515
      %v4073 = vmul.f32 %v4061, %v516
      %v4074 = vmul.f32 %v4057, %v517
      %v4075 = vmul.f32 %v4053, %v518
      %v4076 = vmul.f32 %v4066, %v515
      %v4077 = vmul.f32 %v4062, %v516
      %v4078 = vmul.f32 %v4058, %v517
      %v4079 = vmul.f32 %v4054, %v518
      %v4080 = vmul.f32 %v4067, %v515
      %v4081 = vmul.f32 %v4063, %v516
      %v4082 = vmul.f32 %v4059, %v517
      %v4083 = vmul.f32 %v4055, %v518
      %v4084 = vpack.c.bf16 %v4072, %v4068
      %v4085 = vpack.c.bf16 %v4073, %v4069
      %v4086 = vpack.c.bf16 %v4074, %v4070
      %v4087 = vpack.c.bf16 %v4075, %v4071
      %v4088 = vpack.c.bf16 %v4080, %v4076
      %v4089 = vpack.c.bf16 %v4081, %v4077
      %v4090 = vpack.c.bf16 %v4082, %v4078
      %v4091 = vpack.c.bf16 %v4083, %v4079
      %vm4092 = vcmask 261120
      %v4094 = vsel %vm4092, %v4019, 0
      %4096 = vmatprep.subr.bf16.mxu0 0
      %4097 = vmatpush1.bf16.msra.mxu0 0
      %4098 = vmatprep.subr.bf16.mxu0 0
      %4099 = vmatpush1.bf16.msra.mxu0 0
      %4100 = vmatprep.subr.bf16.mxu0 0
      %4101 = vmatpush1.bf16.msra.mxu0 0
      %4102 = vmatprep.subr.bf16.mxu0 0
      %4103 = vmatpush1.bf16.msra.mxu0 0
      %4104 = vmatprep.subr.bf16.mxu0 0
      %4105 = vmatpush1.bf16.msra.mxu0 0
      %4106 = vmatprep.subr.bf16.mxu0 0
      %4107 = vmatpush1.bf16.msra.mxu0 0
      %4108 = vmatprep.subr.bf16.mxu0 %v4089
      %4109 = vmatpush1.bf16.msra.mxu0 %v4088
      %4110 = vmatprep.subr.bf16.mxu0 %v4085
      %4111 = vmatpush1.bf16.msra.mxu0 %v4084
      %4112 = vmatprep.subr.bf16.mxu0 0
      %4113 = vmatpush2.bf16.msra.mxu0 0
      %4114 = vmatprep.subr.bf16.mxu0 0
      %4115 = vmatpush2.bf16.msra.mxu0 0
      %4116 = vmatprep.subr.bf16.mxu0 0
      %4117 = vmatpush2.bf16.msra.mxu0 0
      %4118 = vmatprep.subr.bf16.mxu0 0
      %4119 = vmatpush2.bf16.msra.mxu0 0
      %4120 = vmatprep.subr.bf16.mxu0 0
      %4121 = vmatpush2.bf16.msra.mxu0 0
      %4122 = vmatprep.subr.bf16.mxu0 0
      %4123 = vmatpush2.bf16.msra.mxu0 0
      %4124 = vmatprep.subr.bf16.mxu0 0
      %4125 = vmatpush2.bf16.msra.mxu0 0
      %4126 = vmatprep.subr.bf16.mxu0 0
      %4127 = vmatpush2.bf16.msra.mxu0 0
      %4128 = vmatprep.mubr.bf16.mxu0 0
      %4129 = vmatmul.mubr.bf16.gmra.mxu0 %v4094
      %v4130 = vpop.f32.mrf.mxu0
      %v4131 = vadd.f32 0.0, %v4130
      %v4132 = vpop.f32.mrf.mxu0
      %v4133 = vadd.f32 0.0, %v4132
      %v4134 = vpop.f32.mrf.mxu0
      %v4135 = vpop.f32.mrf.mxu0
      %4136 = vdwg.mxu0
      %4137 = vmatprep.subr.bf16.mxu0 0
      %4138 = vmatpush1.bf16.msra.mxu0 0
      %4139 = vmatprep.subr.bf16.mxu0 0
      %4140 = vmatpush1.bf16.msra.mxu0 0
      %4141 = vmatprep.subr.bf16.mxu0 0
      %4142 = vmatpush1.bf16.msra.mxu0 0
      %4143 = vmatprep.subr.bf16.mxu0 0
      %4144 = vmatpush1.bf16.msra.mxu0 0
      %4145 = vmatprep.subr.bf16.mxu0 0
      %4146 = vmatpush1.bf16.msra.mxu0 0
      %4147 = vmatprep.subr.bf16.mxu0 0
      %4148 = vmatpush1.bf16.msra.mxu0 0
      %4149 = vmatprep.subr.bf16.mxu0 %v4091
      %4150 = vmatpush1.bf16.msra.mxu0 %v4090
      %4151 = vmatprep.subr.bf16.mxu0 %v4087
      %4152 = vmatpush1.bf16.msra.mxu0 %v4086
      %4153 = vmatprep.subr.bf16.mxu0 0
      %4154 = vmatpush2.bf16.msra.mxu0 0
      %4155 = vmatprep.subr.bf16.mxu0 0
      %4156 = vmatpush2.bf16.msra.mxu0 0
      %4157 = vmatprep.subr.bf16.mxu0 0
      %4158 = vmatpush2.bf16.msra.mxu0 0
      %4159 = vmatprep.subr.bf16.mxu0 0
      %4160 = vmatpush2.bf16.msra.mxu0 0
      %4161 = vmatprep.subr.bf16.mxu0 0
      %4162 = vmatpush2.bf16.msra.mxu0 0
      %4163 = vmatprep.subr.bf16.mxu0 0
      %4164 = vmatpush2.bf16.msra.mxu0 0
      %4165 = vmatprep.subr.bf16.mxu0 0
      %4166 = vmatpush2.bf16.msra.mxu0 0
      %4167 = vmatprep.subr.bf16.mxu0 0
      %4168 = vmatpush2.bf16.msra.mxu0 0
      %4169 = vmatprep.mubr.bf16.mxu0 0
      %4170 = vmatmul.mubr.bf16.gmra.mxu0 %v4094
      %v4171 = vpop.f32.mrf.mxu0
      %v4172 = vadd.f32 0.0, %v4171
      %v4173 = vpop.f32.mrf.mxu0
      %v4174 = vadd.f32 0.0, %v4173
      %v4175 = vpop.f32.mrf.mxu0
      %v4176 = vpop.f32.mrf.mxu0
      %4177 = vdwg.mxu0
      %v4179 = vsel %vm4092, %v3945, 0
      %4181 = vmatprep.subr.bf16.mxu0 0
      %4182 = vmatpush1.bf16.msra.mxu0 0
      %4183 = vmatprep.subr.bf16.mxu0 0
      %4184 = vmatpush1.bf16.msra.mxu0 0
      %4185 = vmatprep.subr.bf16.mxu0 0
      %4186 = vmatpush1.bf16.msra.mxu0 0
      %4187 = vmatprep.subr.bf16.mxu0 0
      %4188 = vmatpush1.bf16.msra.mxu0 0
      %4189 = vmatprep.subr.bf16.mxu0 0
      %4190 = vmatpush1.bf16.msra.mxu0 0
      %4191 = vmatprep.subr.bf16.mxu0 0
      %4192 = vmatpush1.bf16.msra.mxu0 0
      %4193 = vmatprep.subr.bf16.mxu0 %v4015
      %4194 = vmatpush1.bf16.msra.mxu0 %v4014
      %4195 = vmatprep.subr.bf16.mxu0 %v4011
      %4196 = vmatpush1.bf16.msra.mxu0 %v4010
      %4197 = vmatprep.subr.bf16.mxu0 0
      %4198 = vmatpush2.bf16.msra.mxu0 0
      %4199 = vmatprep.subr.bf16.mxu0 0
      %4200 = vmatpush2.bf16.msra.mxu0 0
      %4201 = vmatprep.subr.bf16.mxu0 0
      %4202 = vmatpush2.bf16.msra.mxu0 0
      %4203 = vmatprep.subr.bf16.mxu0 0
      %4204 = vmatpush2.bf16.msra.mxu0 0
      %4205 = vmatprep.subr.bf16.mxu0 0
      %4206 = vmatpush2.bf16.msra.mxu0 0
      %4207 = vmatprep.subr.bf16.mxu0 0
      %4208 = vmatpush2.bf16.msra.mxu0 0
      %4209 = vmatprep.subr.bf16.mxu0 0
      %4210 = vmatpush2.bf16.msra.mxu0 0
      %4211 = vmatprep.subr.bf16.mxu0 0
      %4212 = vmatpush2.bf16.msra.mxu0 0
      %4213 = vmatprep.mubr.bf16.mxu0 0
      %4214 = vmatmul.mubr.bf16.gmra.mxu0 %v4179
      %v4215 = vpop.f32.mrf.mxu0
      %v4216 = vadd.f32 %v4131, %v4215
      %v4217 = vpop.f32.mrf.mxu0
      %v4218 = vadd.f32 %v4133, %v4217
      %v4219 = vpop.f32.mrf.mxu0
      %v4220 = vpop.f32.mrf.mxu0
      %4221 = vdwg.mxu0
      %4222 = vmatprep.subr.bf16.mxu0 0
      %4223 = vmatpush1.bf16.msra.mxu0 0
      %4224 = vmatprep.subr.bf16.mxu0 0
      %4225 = vmatpush1.bf16.msra.mxu0 0
      %4226 = vmatprep.subr.bf16.mxu0 0
      %4227 = vmatpush1.bf16.msra.mxu0 0
      %4228 = vmatprep.subr.bf16.mxu0 0
      %4229 = vmatpush1.bf16.msra.mxu0 0
      %4230 = vmatprep.subr.bf16.mxu0 0
      %4231 = vmatpush1.bf16.msra.mxu0 0
      %4232 = vmatprep.subr.bf16.mxu0 0
      %4233 = vmatpush1.bf16.msra.mxu0 0
      %4234 = vmatprep.subr.bf16.mxu0 %v4017
      %4235 = vmatpush1.bf16.msra.mxu0 %v4016
      %4236 = vmatprep.subr.bf16.mxu0 %v4013
      %4237 = vmatpush1.bf16.msra.mxu0 %v4012
      %4238 = vmatprep.subr.bf16.mxu0 0
      %4239 = vmatpush2.bf16.msra.mxu0 0
      %4240 = vmatprep.subr.bf16.mxu0 0
      %4241 = vmatpush2.bf16.msra.mxu0 0
      %4242 = vmatprep.subr.bf16.mxu0 0
      %4243 = vmatpush2.bf16.msra.mxu0 0
      %4244 = vmatprep.subr.bf16.mxu0 0
      %4245 = vmatpush2.bf16.msra.mxu0 0
      %4246 = vmatprep.subr.bf16.mxu0 0
      %4247 = vmatpush2.bf16.msra.mxu0 0
      %4248 = vmatprep.subr.bf16.mxu0 0
      %4249 = vmatpush2.bf16.msra.mxu0 0
      %4250 = vmatprep.subr.bf16.mxu0 0
      %4251 = vmatpush2.bf16.msra.mxu0 0
      %4252 = vmatprep.subr.bf16.mxu0 0
      %4253 = vmatpush2.bf16.msra.mxu0 0
      %4254 = vmatprep.mubr.bf16.mxu0 0
      %4255 = vmatmul.mubr.bf16.gmra.mxu0 %v4179
      %v4256 = vpop.f32.mrf.mxu0
      %v4257 = vadd.f32 %v4172, %v4256
      %v4258 = vpop.f32.mrf.mxu0
      %v4259 = vadd.f32 %v4174, %v4258
      %v4260 = vpop.f32.mrf.mxu0
      %v4261 = vpop.f32.mrf.mxu0
      %4262 = vdwg.mxu0
      %s4263 = scalar_lea.vmem %s10, 2
      %v4264 = vld [vmem:[%s4263] sm:$0x1]
      %v4265 = vpack.c.bf16 %v1147, %v1143
      %v4266 = vpack.c.bf16 %v1148, %v1144
      %v4267 = vpack.c.bf16 %v1149, %v1145
      %v4268 = vpack.c.bf16 %v1150, %v1146
      %v4269 = vpack.c.bf16 %v1155, %v1151
      %v4270 = vpack.c.bf16 %v1156, %v1152
      %v4271 = vpack.c.bf16 %v1157, %v1153
      %v4272 = vpack.c.bf16 %v1158, %v1154
      %v4274 = vsel %vm4092, %v4264, 0
      %4276 = vmatprep.subr.bf16.mxu0 0
      %4277 = vmatpush1.bf16.msra.mxu0 0
      %4278 = vmatprep.subr.bf16.mxu0 0
      %4279 = vmatpush1.bf16.msra.mxu0 0
      %4280 = vmatprep.subr.bf16.mxu0 0
      %4281 = vmatpush1.bf16.msra.mxu0 0
      %4282 = vmatprep.subr.bf16.mxu0 0
      %4283 = vmatpush1.bf16.msra.mxu0 0
      %4284 = vmatprep.subr.bf16.mxu0 0
      %4285 = vmatpush1.bf16.msra.mxu0 0
      %4286 = vmatprep.subr.bf16.mxu0 0
      %4287 = vmatpush1.bf16.msra.mxu0 0
      %4288 = vmatprep.subr.bf16.mxu0 %v4270
      %4289 = vmatpush1.bf16.msra.mxu0 %v4269
      %4290 = vmatprep.subr.bf16.mxu0 %v4266
      %4291 = vmatpush1.bf16.msra.mxu0 %v4265
      %4292 = vmatprep.subr.bf16.mxu0 0
      %4293 = vmatpush2.bf16.msra.mxu0 0
      %4294 = vmatprep.subr.bf16.mxu0 0
      %4295 = vmatpush2.bf16.msra.mxu0 0
      %4296 = vmatprep.subr.bf16.mxu0 0
      %4297 = vmatpush2.bf16.msra.mxu0 0
      %4298 = vmatprep.subr.bf16.mxu0 0
      %4299 = vmatpush2.bf16.msra.mxu0 0
      %4300 = vmatprep.subr.bf16.mxu0 0
      %4301 = vmatpush2.bf16.msra.mxu0 0
      %4302 = vmatprep.subr.bf16.mxu0 0
      %4303 = vmatpush2.bf16.msra.mxu0 0
      %4304 = vmatprep.subr.bf16.mxu0 0
      %4305 = vmatpush2.bf16.msra.mxu0 0
      %4306 = vmatprep.subr.bf16.mxu0 0
      %4307 = vmatpush2.bf16.msra.mxu0 0
      %4308 = vmatprep.mubr.bf16.mxu0 0
      %4309 = vmatmul.mubr.bf16.gmra.mxu0 %v4274
      %v4310 = vpop.f32.mrf.mxu0
      %v4311 = vadd.f32 0.0, %v4310
      %v4312 = vpop.f32.mrf.mxu0
      %v4313 = vadd.f32 0.0, %v4312
      %v4314 = vpop.f32.mrf.mxu0
      %v4315 = vpop.f32.mrf.mxu0
      %4316 = vdwg.mxu0
      %4317 = vmatprep.subr.bf16.mxu0 0
      %4318 = vmatpush1.bf16.msra.mxu0 0
      %4319 = vmatprep.subr.bf16.mxu0 0
      %4320 = vmatpush1.bf16.msra.mxu0 0
      %4321 = vmatprep.subr.bf16.mxu0 0
      %4322 = vmatpush1.bf16.msra.mxu0 0
      %4323 = vmatprep.subr.bf16.mxu0 0
      %4324 = vmatpush1.bf16.msra.mxu0 0
      %4325 = vmatprep.subr.bf16.mxu0 0
      %4326 = vmatpush1.bf16.msra.mxu0 0
      %4327 = vmatprep.subr.bf16.mxu0 0
      %4328 = vmatpush1.bf16.msra.mxu0 0
      %4329 = vmatprep.subr.bf16.mxu0 %v4272
      %4330 = vmatpush1.bf16.msra.mxu0 %v4271
      %4331 = vmatprep.subr.bf16.mxu0 %v4268
      %4332 = vmatpush1.bf16.msra.mxu0 %v4267
      %4333 = vmatprep.subr.bf16.mxu0 0
      %4334 = vmatpush2.bf16.msra.mxu0 0
      %4335 = vmatprep.subr.bf16.mxu0 0
      %4336 = vmatpush2.bf16.msra.mxu0 0
      %4337 = vmatprep.subr.bf16.mxu0 0
      %4338 = vmatpush2.bf16.msra.mxu0 0
      %4339 = vmatprep.subr.bf16.mxu0 0
      %4340 = vmatpush2.bf16.msra.mxu0 0
      %4341 = vmatprep.subr.bf16.mxu0 0
      %4342 = vmatpush2.bf16.msra.mxu0 0
      %4343 = vmatprep.subr.bf16.mxu0 0
      %4344 = vmatpush2.bf16.msra.mxu0 0
      %4345 = vmatprep.subr.bf16.mxu0 0
      %4346 = vmatpush2.bf16.msra.mxu0 0
      %4347 = vmatprep.subr.bf16.mxu0 0
      %4348 = vmatpush2.bf16.msra.mxu0 0
      %4349 = vmatprep.mubr.bf16.mxu0 0
      %4350 = vmatmul.mubr.bf16.gmra.mxu0 %v4274
      %v4351 = vpop.f32.mrf.mxu0
      %v4352 = vadd.f32 0.0, %v4351
      %v4353 = vpop.f32.mrf.mxu0
      %v4354 = vadd.f32 0.0, %v4353
      %v4355 = vpop.f32.mrf.mxu0
      %v4356 = vpop.f32.mrf.mxu0
      %4357 = vdwg.mxu0
      %v4358 = vadd.f32 %v4216, %v4311
      %v4359 = vadd.f32 %v4218, %v4313
      %v4360 = vadd.f32 %v4257, %v4352
      %v4361 = vadd.f32 %v4259, %v4354
      %s4362 = scalar_lea.vmem %s10, 3
      %v4363 = vld [vmem:[%s4362] sm:$0x1]
      %4364 = vrot.lane.b32.xlu0 %v1143, 127
      %v4365 = vpop.permute.xlu0 %4364
      %4366 = vrot.lane.b32.xlu0 %v1147, 127
      %v4367 = vpop.permute.xlu0 %4366
      %4368 = vrot.lane.b32.xlu0 %v1151, 127
      %v4369 = vpop.permute.xlu0 %4368
      %4370 = vrot.lane.b32.xlu0 %v1155, 127
      %v4371 = vpop.permute.xlu0 %4370
      %4372 = vrot.lane.b32.xlu0 %v1144, 127
      %v4373 = vpop.permute.xlu0 %4372
      %4374 = vrot.lane.b32.xlu0 %v1148, 127
      %v4375 = vpop.permute.xlu0 %4374
      %4376 = vrot.lane.b32.xlu0 %v1152, 127
      %v4377 = vpop.permute.xlu0 %4376
      %4378 = vrot.lane.b32.xlu0 %v1156, 127
      %v4379 = vpop.permute.xlu0 %4378
      %4380 = vrot.lane.b32.xlu0 %v1145, 127
      %v4381 = vpop.permute.xlu0 %4380
      %4382 = vrot.lane.b32.xlu0 %v1149, 127
      %v4383 = vpop.permute.xlu0 %4382
      %4384 = vrot.lane.b32.xlu0 %v1153, 127
      %v4385 = vpop.permute.xlu0 %4384
      %4386 = vrot.lane.b32.xlu0 %v1157, 127
      %v4387 = vpop.permute.xlu0 %4386
      %4388 = vrot.lane.b32.xlu0 %v1146, 127
      %v4389 = vpop.permute.xlu0 %4388
      %4390 = vrot.lane.b32.xlu0 %v1150, 127
      %v4391 = vpop.permute.xlu0 %4390
      %4392 = vrot.lane.b32.xlu0 %v1154, 127
      %v4393 = vpop.permute.xlu0 %4392
      %4394 = vrot.lane.b32.xlu0 %v1158, 127
      %v4395 = vpop.permute.xlu0 %4394
      %v4396 = vsel %vm872, %v4381, %v4389
      %v4397 = vsel %vm872, %v4383, %v4391
      %v4398 = vsel %vm872, %v4385, %v4393
      %v4399 = vsel %vm872, %v4387, %v4395
      %v4400 = vsel %vm872, %v4373, %v4381
      %v4401 = vsel %vm872, %v4375, %v4383
      %v4402 = vsel %vm872, %v4377, %v4385
      %v4403 = vsel %vm872, %v4379, %v4387
      %v4404 = vsel %vm872, %v4365, %v4373
      %v4405 = vsel %vm872, %v4367, %v4375
      %v4406 = vsel %vm872, %v4369, %v4377
      %v4407 = vsel %vm872, %v4371, %v4379
      %v4408 = vsel %vm872, %v4389, %v4365
      %v4409 = vsel %vm872, %v4391, %v4367
      %v4410 = vsel %vm872, %v4393, %v4369
      %v4411 = vsel %vm872, %v4395, %v4371
      %v4412 = vmul.f32 %v4404, %v539
      %v4413 = vmul.f32 %v4400, %v540
      %v4414 = vmul.f32 %v4396, %v541
      %v4415 = vmul.f32 %v4408, %v542
      %v4416 = vmul.f32 %v4405, %v539
      %v4417 = vmul.f32 %v4401, %v540
      %v4418 = vmul.f32 %v4397, %v541
      %v4419 = vmul.f32 %v4409, %v542
      %v4420 = vmul.f32 %v4406, %v539
      %v4421 = vmul.f32 %v4402, %v540
      %v4422 = vmul.f32 %v4398, %v541
      %v4423 = vmul.f32 %v4410, %v542
      %v4424 = vmul.f32 %v4407, %v539
      %v4425 = vmul.f32 %v4403, %v540
      %v4426 = vmul.f32 %v4399, %v541
      %v4427 = vmul.f32 %v4411, %v542
      %v4428 = vpack.c.bf16 %v4416, %v4412
      %v4429 = vpack.c.bf16 %v4417, %v4413
      %v4430 = vpack.c.bf16 %v4418, %v4414
      %v4431 = vpack.c.bf16 %v4419, %v4415
      %v4432 = vpack.c.bf16 %v4424, %v4420
      %v4433 = vpack.c.bf16 %v4425, %v4421
      %v4434 = vpack.c.bf16 %v4426, %v4422
      %v4435 = vpack.c.bf16 %v4427, %v4423
      %v4437 = vsel %vm4092, %v4363, 0
      %4439 = vmatprep.subr.bf16.mxu0 0
      %4440 = vmatpush1.bf16.msra.mxu0 0
      %4441 = vmatprep.subr.bf16.mxu0 0
      %4442 = vmatpush1.bf16.msra.mxu0 0
      %4443 = vmatprep.subr.bf16.mxu0 0
      %4444 = vmatpush1.bf16.msra.mxu0 0
      %4445 = vmatprep.subr.bf16.mxu0 0
      %4446 = vmatpush1.bf16.msra.mxu0 0
      %4447 = vmatprep.subr.bf16.mxu0 0
      %4448 = vmatpush1.bf16.msra.mxu0 0
      %4449 = vmatprep.subr.bf16.mxu0 0
      %4450 = vmatpush1.bf16.msra.mxu0 0
      %4451 = vmatprep.subr.bf16.mxu0 %v4433
      %4452 = vmatpush1.bf16.msra.mxu0 %v4432
      %4453 = vmatprep.subr.bf16.mxu0 %v4429
      %4454 = vmatpush1.bf16.msra.mxu0 %v4428
      %4455 = vmatprep.subr.bf16.mxu0 0
      %4456 = vmatpush2.bf16.msra.mxu0 0
      %4457 = vmatprep.subr.bf16.mxu0 0
      %4458 = vmatpush2.bf16.msra.mxu0 0
      %4459 = vmatprep.subr.bf16.mxu0 0
      %4460 = vmatpush2.bf16.msra.mxu0 0
      %4461 = vmatprep.subr.bf16.mxu0 0
      %4462 = vmatpush2.bf16.msra.mxu0 0
      %4463 = vmatprep.subr.bf16.mxu0 0
      %4464 = vmatpush2.bf16.msra.mxu0 0
      %4465 = vmatprep.subr.bf16.mxu0 0
      %4466 = vmatpush2.bf16.msra.mxu0 0
      %4467 = vmatprep.subr.bf16.mxu0 0
      %4468 = vmatpush2.bf16.msra.mxu0 0
      %4469 = vmatprep.subr.bf16.mxu0 0
      %4470 = vmatpush2.bf16.msra.mxu0 0
      %4471 = vmatprep.mubr.bf16.mxu0 0
      %4472 = vmatmul.mubr.bf16.gmra.mxu0 %v4437
      %v4473 = vpop.f32.mrf.mxu0
      %v4474 = vadd.f32 0.0, %v4473
      %v4475 = vpop.f32.mrf.mxu0
      %v4476 = vadd.f32 0.0, %v4475
      %v4477 = vpop.f32.mrf.mxu0
      %v4478 = vpop.f32.mrf.mxu0
      %4479 = vdwg.mxu0
      %4480 = vmatprep.subr.bf16.mxu0 0
      %4481 = vmatpush1.bf16.msra.mxu0 0
      %4482 = vmatprep.subr.bf16.mxu0 0
      %4483 = vmatpush1.bf16.msra.mxu0 0
      %4484 = vmatprep.subr.bf16.mxu0 0
      %4485 = vmatpush1.bf16.msra.mxu0 0
      %4486 = vmatprep.subr.bf16.mxu0 0
      %4487 = vmatpush1.bf16.msra.mxu0 0
      %4488 = vmatprep.subr.bf16.mxu0 0
      %4489 = vmatpush1.bf16.msra.mxu0 0
      %4490 = vmatprep.subr.bf16.mxu0 0
      %4491 = vmatpush1.bf16.msra.mxu0 0
      %4492 = vmatprep.subr.bf16.mxu0 %v4435
      %4493 = vmatpush1.bf16.msra.mxu0 %v4434
      %4494 = vmatprep.subr.bf16.mxu0 %v4431
      %4495 = vmatpush1.bf16.msra.mxu0 %v4430
      %4496 = vmatprep.subr.bf16.mxu0 0
      %4497 = vmatpush2.bf16.msra.mxu0 0
      %4498 = vmatprep.subr.bf16.mxu0 0
      %4499 = vmatpush2.bf16.msra.mxu0 0
      %4500 = vmatprep.subr.bf16.mxu0 0
      %4501 = vmatpush2.bf16.msra.mxu0 0
      %4502 = vmatprep.subr.bf16.mxu0 0
      %4503 = vmatpush2.bf16.msra.mxu0 0
      %4504 = vmatprep.subr.bf16.mxu0 0
      %4505 = vmatpush2.bf16.msra.mxu0 0
      %4506 = vmatprep.subr.bf16.mxu0 0
      %4507 = vmatpush2.bf16.msra.mxu0 0
      %4508 = vmatprep.subr.bf16.mxu0 0
      %4509 = vmatpush2.bf16.msra.mxu0 0
      %4510 = vmatprep.subr.bf16.mxu0 0
      %4511 = vmatpush2.bf16.msra.mxu0 0
      %4512 = vmatprep.mubr.bf16.mxu0 0
      %4513 = vmatmul.mubr.bf16.gmra.mxu0 %v4437
      %v4514 = vpop.f32.mrf.mxu0
      %v4515 = vadd.f32 0.0, %v4514
      %v4516 = vpop.f32.mrf.mxu0
      %v4517 = vadd.f32 0.0, %v4516
      %v4518 = vpop.f32.mrf.mxu0
      %v4519 = vpop.f32.mrf.mxu0
      %4520 = vdwg.mxu0
      %v4521 = vadd.f32 %v4358, %v4474
      %v4522 = vadd.f32 %v4359, %v4476
      %v4523 = vadd.f32 %v4360, %v4515
      %v4524 = vadd.f32 %v4361, %v4517
      %s4525 = scalar_lea.vmem %s10, 4
      %v4526 = vld [vmem:[%s4525] sm:$0x1]
      %4527 = vrot.lane.b32.xlu0 %v1143, 126
      %v4528 = vpop.permute.xlu0 %4527
      %4529 = vrot.lane.b32.xlu0 %v1147, 126
      %v4530 = vpop.permute.xlu0 %4529
      %4531 = vrot.lane.b32.xlu0 %v1151, 126
      %v4532 = vpop.permute.xlu0 %4531
      %4533 = vrot.lane.b32.xlu0 %v1155, 126
      %v4534 = vpop.permute.xlu0 %4533
      %4535 = vrot.lane.b32.xlu0 %v1144, 126
      %v4536 = vpop.permute.xlu0 %4535
      %4537 = vrot.lane.b32.xlu0 %v1148, 126
      %v4538 = vpop.permute.xlu0 %4537
      %4539 = vrot.lane.b32.xlu0 %v1152, 126
      %v4540 = vpop.permute.xlu0 %4539
      %4541 = vrot.lane.b32.xlu0 %v1156, 126
      %v4542 = vpop.permute.xlu0 %4541
      %4543 = vrot.lane.b32.xlu0 %v1145, 126
      %v4544 = vpop.permute.xlu0 %4543
      %4545 = vrot.lane.b32.xlu0 %v1149, 126
      %v4546 = vpop.permute.xlu0 %4545
      %4547 = vrot.lane.b32.xlu0 %v1153, 126
      %v4548 = vpop.permute.xlu0 %4547
      %4549 = vrot.lane.b32.xlu0 %v1157, 126
      %v4550 = vpop.permute.xlu0 %4549
      %4551 = vrot.lane.b32.xlu0 %v1146, 126
      %v4552 = vpop.permute.xlu0 %4551
      %4553 = vrot.lane.b32.xlu0 %v1150, 126
      %v4554 = vpop.permute.xlu0 %4553
      %4555 = vrot.lane.b32.xlu0 %v1154, 126
      %v4556 = vpop.permute.xlu0 %4555
      %4557 = vrot.lane.b32.xlu0 %v1158, 126
      %v4558 = vpop.permute.xlu0 %4557
      %v4559 = vsel %vm969, %v4544, %v4552
      %v4560 = vsel %vm969, %v4546, %v4554
      %v4561 = vsel %vm969, %v4548, %v4556
      %v4562 = vsel %vm969, %v4550, %v4558
      %v4563 = vsel %vm969, %v4536, %v4544
      %v4564 = vsel %vm969, %v4538, %v4546
      %v4565 = vsel %vm969, %v4540, %v4548
      %v4566 = vsel %vm969, %v4542, %v4550
      %v4567 = vsel %vm969, %v4528, %v4536
      %v4568 = vsel %vm969, %v4530, %v4538
      %v4569 = vsel %vm969, %v4532, %v4540
      %v4570 = vsel %vm969, %v4534, %v4542
      %v4571 = vsel %vm969, %v4552, %v4528
      %v4572 = vsel %vm969, %v4554, %v4530
      %v4573 = vsel %vm969, %v4556, %v4532
      %v4574 = vsel %vm969, %v4558, %v4534
      %v4575 = vmul.f32 %v4567, %v563
      %v4576 = vmul.f32 %v4563, %v564
      %v4577 = vmul.f32 %v4559, %v565
      %v4578 = vmul.f32 %v4571, %v566
      %v4579 = vmul.f32 %v4568, %v563
      %v4580 = vmul.f32 %v4564, %v564
      %v4581 = vmul.f32 %v4560, %v565
      %v4582 = vmul.f32 %v4572, %v566
      %v4583 = vmul.f32 %v4569, %v563
      %v4584 = vmul.f32 %v4565, %v564
      %v4585 = vmul.f32 %v4561, %v565
      %v4586 = vmul.f32 %v4573, %v566
      %v4587 = vmul.f32 %v4570, %v563
      %v4588 = vmul.f32 %v4566, %v564
      %v4589 = vmul.f32 %v4562, %v565
      %v4590 = vmul.f32 %v4574, %v566
      %v4591 = vpack.c.bf16 %v4579, %v4575
      %v4592 = vpack.c.bf16 %v4580, %v4576
      %v4593 = vpack.c.bf16 %v4581, %v4577
      %v4594 = vpack.c.bf16 %v4582, %v4578
      %v4595 = vpack.c.bf16 %v4587, %v4583
      %v4596 = vpack.c.bf16 %v4588, %v4584
      %v4597 = vpack.c.bf16 %v4589, %v4585
      %v4598 = vpack.c.bf16 %v4590, %v4586
      %v4600 = vsel %vm4092, %v4526, 0
      %4602 = vmatprep.subr.bf16.mxu0 0
      %4603 = vmatpush1.bf16.msra.mxu0 0
      %4604 = vmatprep.subr.bf16.mxu0 0
      %4605 = vmatpush1.bf16.msra.mxu0 0
      %4606 = vmatprep.subr.bf16.mxu0 0
      %4607 = vmatpush1.bf16.msra.mxu0 0
      %4608 = vmatprep.subr.bf16.mxu0 0
      %4609 = vmatpush1.bf16.msra.mxu0 0
      %4610 = vmatprep.subr.bf16.mxu0 0
      %4611 = vmatpush1.bf16.msra.mxu0 0
      %4612 = vmatprep.subr.bf16.mxu0 0
      %4613 = vmatpush1.bf16.msra.mxu0 0
      %4614 = vmatprep.subr.bf16.mxu0 %v4596
      %4615 = vmatpush1.bf16.msra.mxu0 %v4595
      %4616 = vmatprep.subr.bf16.mxu0 %v4592
      %4617 = vmatpush1.bf16.msra.mxu0 %v4591
      %4618 = vmatprep.subr.bf16.mxu0 0
      %4619 = vmatpush2.bf16.msra.mxu0 0
      %4620 = vmatprep.subr.bf16.mxu0 0
      %4621 = vmatpush2.bf16.msra.mxu0 0
      %4622 = vmatprep.subr.bf16.mxu0 0
      %4623 = vmatpush2.bf16.msra.mxu0 0
      %4624 = vmatprep.subr.bf16.mxu0 0
      %4625 = vmatpush2.bf16.msra.mxu0 0
      %4626 = vmatprep.subr.bf16.mxu0 0
      %4627 = vmatpush2.bf16.msra.mxu0 0
      %4628 = vmatprep.subr.bf16.mxu0 0
      %4629 = vmatpush2.bf16.msra.mxu0 0
      %4630 = vmatprep.subr.bf16.mxu0 0
      %4631 = vmatpush2.bf16.msra.mxu0 0
      %4632 = vmatprep.subr.bf16.mxu0 0
      %4633 = vmatpush2.bf16.msra.mxu0 0
      %4634 = vmatprep.mubr.bf16.mxu0 0
      %4635 = vmatmul.mubr.bf16.gmra.mxu0 %v4600
      %v4636 = vpop.f32.mrf.mxu0
      %v4637 = vadd.f32 0.0, %v4636
      %v4638 = vpop.f32.mrf.mxu0
      %v4639 = vadd.f32 0.0, %v4638
      %v4640 = vpop.f32.mrf.mxu0
      %v4641 = vpop.f32.mrf.mxu0
      %4642 = vdwg.mxu0
      %4643 = vmatprep.subr.bf16.mxu0 0
      %4644 = vmatpush1.bf16.msra.mxu0 0
      %4645 = vmatprep.subr.bf16.mxu0 0
      %4646 = vmatpush1.bf16.msra.mxu0 0
      %4647 = vmatprep.subr.bf16.mxu0 0
      %4648 = vmatpush1.bf16.msra.mxu0 0
      %4649 = vmatprep.subr.bf16.mxu0 0
      %4650 = vmatpush1.bf16.msra.mxu0 0
      %4651 = vmatprep.subr.bf16.mxu0 0
      %4652 = vmatpush1.bf16.msra.mxu0 0
      %4653 = vmatprep.subr.bf16.mxu0 0
      %4654 = vmatpush1.bf16.msra.mxu0 0
      %4655 = vmatprep.subr.bf16.mxu0 %v4598
      %4656 = vmatpush1.bf16.msra.mxu0 %v4597
      %4657 = vmatprep.subr.bf16.mxu0 %v4594
      %4658 = vmatpush1.bf16.msra.mxu0 %v4593
      %4659 = vmatprep.subr.bf16.mxu0 0
      %4660 = vmatpush2.bf16.msra.mxu0 0
      %4661 = vmatprep.subr.bf16.mxu0 0
      %4662 = vmatpush2.bf16.msra.mxu0 0
      %4663 = vmatprep.subr.bf16.mxu0 0
      %4664 = vmatpush2.bf16.msra.mxu0 0
      %4665 = vmatprep.subr.bf16.mxu0 0
      %4666 = vmatpush2.bf16.msra.mxu0 0
      %4667 = vmatprep.subr.bf16.mxu0 0
      %4668 = vmatpush2.bf16.msra.mxu0 0
      %4669 = vmatprep.subr.bf16.mxu0 0
      %4670 = vmatpush2.bf16.msra.mxu0 0
      %4671 = vmatprep.subr.bf16.mxu0 0
      %4672 = vmatpush2.bf16.msra.mxu0 0
      %4673 = vmatprep.subr.bf16.mxu0 0
      %4674 = vmatpush2.bf16.msra.mxu0 0
      %4675 = vmatprep.mubr.bf16.mxu0 0
      %4676 = vmatmul.mubr.bf16.gmra.mxu0 %v4600
      %v4677 = vpop.f32.mrf.mxu0
      %v4678 = vadd.f32 0.0, %v4677
      %v4679 = vpop.f32.mrf.mxu0
      %v4680 = vadd.f32 0.0, %v4679
      %v4681 = vpop.f32.mrf.mxu0
      %v4682 = vpop.f32.mrf.mxu0
      %4683 = vdwg.mxu0
      %v4684 = vadd.f32 %v4521, %v4637
      %v4685 = vadd.f32 %v4522, %v4639
      %v4686 = vadd.f32 %v4523, %v4678
      %v4687 = vadd.f32 %v4524, %v4680
      %v4688 = vld [vmem:[#allocation2] sm:$0x1]
      %4690 = vset.pattern.permute.xlu0 0
      %4691 = vperm.xlu0 %4690, %v4688
      %v4692 = vpop.permute.xlu0 %4691
      %v4694 = vlaneseq
      %v4695 = vshrl.u32 %v4694, 7
      %v4696 = vsub.s32 0, %v4695
      %v4697 = vrot.slane %v4692, %v4696
      %v4698 = vadd.f32 %v4684, %v4697
      %v4699 = vadd.f32 %v4685, %v4697
      %v4700 = vadd.f32 %v4686, %v4697
      %v4701 = vadd.f32 %v4687, %v4697
      %v4706 = vcombine.low %v4698, %v4699
      %v4707 = vcombine.low %v4700, %v4701
      %v4709 = vunpack.c.l.s4 1983009808
      %v4710 = vunpack.c.0.s8 %v4709
      %v4711 = vlaneseq
      %v4712 = vshrl.u32 %v4711, 7
      %v4713 = vsub.s32 %v4710, %v4712
      %v4714 = vrot.slane %v4706, %v4713
      %v4716 = vunpack.c.l.s4 1983009808
      %v4717 = vunpack.c.0.s8 %v4716
      %v4718 = vlaneseq
      %v4719 = vshrl.u32 %v4718, 7
      %v4720 = vsub.s32 %v4717, %v4719
      %v4721 = vrot.slane %v4707, %v4720
      %v4722 = vcombine.low %v4714, %v4721
      %v4723 = vrot.slane %v4722, 7
      %v4725 = vsub.f32 %v567, %v4723
      %v4728 = vunpack.c.l.s4 1966171168
      %v4729 = vunpack.c.0.s8 %v4728
      %v4730 = vlaneseq
      %v4731 = vshrl.u32 %v4730, 7
      %v4732 = vsub.s32 %v4729, %v4731
      %v4733 = vrot.slane %v4725, %v4732
      %v4734 = vcombine.high %v4733, %v4733
      %v4736 = vlaneseq
      %vm4737 = vcmp.ge.s32.totalorder %v4736, 0
      %vm4738 = vcmp.lt.s32.totalorder %v4736, 512
      %vm4739 = vmand %vm4737, %vm4738
      %4740 = vst.msk [vmem:[%s415] sm:$0xf] %vm4739, %v4734
      %s4741 = smul.u32 4, %s25
      %p4742 = scmp.lt.s32.totalorder %s4741, 7
      %s4743 = scalar_select %p4742, %s4741, 7
      %s4744 = scalar_lea.vmem %s12, %s4743
      // Predicated region
      $region76: #{generator_forward.1} parent=67 // pred_check
        %p4745 = pneg %p300
      $region77: #{generator_forward.1} parent=67 // pred_check_branch
        %4747 = sbr.rel (%p4745) target = $region79
      $region78: #{generator_forward.1} parent=67 // pred_region
        %s4748 = smul.u32 4, %s25
      $region79: #{generator_forward.1} parent=67 // pred_fallthru
        _
    $region68: #{generator_forward.1} parent=5 // pred_fallthru
      _
    %p4749 = scmp.le.s32.totalorder 2, %s20
    // Predicated region
    $region80: #{generator_forward.1} parent=5 // pred_check
      %p4750 = pneg %p4749
    $region81: #{generator_forward.1} parent=5 // pred_check_branch
      %4752 = sbr.rel (%p4750) target = $region83
    $region82: #{generator_forward.1} parent=5 // pred_region
      %s4753 = ssub.s32 %s20, 2
      // Predicated region
      $region84: #{generator_forward.1} parent=82 // pred_check
        %p4754 = pneg %p306
      $region85: #{generator_forward.1} parent=82 // pred_check_branch
        %4756 = sbr.rel (%p4754) target = $region87
      $region86: #{generator_forward.1} parent=82 // pred_region
        %s4757 = smul.u32 4, %s26
        %p4758 = scmp.lt.s32.totalorder %s4757, 7
        %s4759 = scalar_select %p4758, %s4757, 7
        %s4760 = scalar_lea.vmem %s12, %s4759
      $region87: #{generator_forward.1} parent=82 // pred_fallthru
        _
    $region83: #{generator_forward.1} parent=5 // pred_fallthru
      _
  $region6: #{generator_forward.1} parent=0 // loop_footer
    %s24 = sadd.s32 1, %s20
  $region7: #{generator_forward.1} parent=0 // loop_footer_branch
    %19 = sbr.rel target = $region3
  $region8: #{generator_forward.1} parent=0 // loop_exit
    _

</llo_original>
